<compile_context>
chip_gen: v5e
topology: v5e:2x2
jax: 0.10.0
libtpu: 0.0.40
codegen_flags: <defaults>
</compile_context>

<pallas_src>
import functools

import jax
import jax.numpy as jnp
from jax.experimental import pallas as pl
from jax.experimental.pallas import tpu as pltpu

NEG = -1e9  # stands in for -inf in the additive mask; exp() underflows to an
            # exact 0 attention weight. (Unlike torch, fully-masked rows stay
            # finite instead of NaN -- fine since padded rows are discarded.)


# ----------------------------- in-kernel helpers -----------------------------

def _layernorm(x, w, b, eps):
    # x: (N, D), w/b: (1, D)   (biased variance, like torch.nn.LayerNorm)
    mu = jnp.mean(x, axis=-1, keepdims=True)
    xc = x - mu
    var = jnp.mean(xc * xc, axis=-1, keepdims=True)
    return xc * jax.lax.rsqrt(var + eps) * w + b


# ------------------------------- fused kernel --------------------------------

def _fused_forward_kernel(
        tok_ref, pad_ref, emb_ref,
        wqkv_ref, bqkv_ref, wo_ref, bo_ref, cross_ref,
        n1w_ref, n1b_ref, n2w_ref, n2b_ref,
        w1_ref, b1_ref, w2_ref, b2_ref,
        n3w_ref, n3b_ref,
        nfw_ref, nfb_ref, wout_ref, bout_ref,
        o_ref, x_sc,
        *, batch, seq_len, nhead, num_layers, eps):
    B, S, H = batch, seq_len, nhead
    BS = B * S
    D = emb_ref.shape[1]
    hd = D // H
    scale = 1.0 / float(hd) ** 0.5

    # ---- embedding lookup in-kernel: tokens in SMEM, table in VMEM ----------
    for i in range(BS):                                   # tiny static unroll
        x_sc[pl.ds(i, 1), :] = emb_ref[pl.ds(tok_ref[i], 1), :]
    x = x_sc[...]                                         # (BS, D), batch folded

    # ---- causal + key-padding additive bias built in-kernel (no HBM DMA) ----
    rows = jax.lax.broadcasted_iota(jnp.int32, (S, S), 0)
    cols = jax.lax.broadcasted_iota(jnp.int32, (S, S), 1)
    causal = jnp.where(cols <= rows, 0.0, NEG).astype(jnp.float32)     # (S, S)
    bias_b = causal[None, :, :] + pad_ref[...][:, None, :]             # (B, S, S)
    bias = jnp.concatenate([bias_b] * H, axis=0)                       # (H*B, S, S)

    for l in range(num_layers):        # static unroll (num_layers is tiny)
        # ---- masked multi-head self-attention (fused qkv projection) --------
        qkv = (jnp.dot(x, wqkv_ref[l], preferred_element_type=jnp.float32)
               + bqkv_ref[l])                                          # (BS, 3D)
        q = qkv[:, :D] * scale
        k = qkv[:, D:2 * D]
        v = qkv[:, 2 * D:]

        # restack (head, batch) onto a leading axis once per layer; the
        # (BS, hd) -> (B, S, hd) sublane split is layout-preserving (S == 8).
        def to_heads(t):
            return jnp.concatenate(
                [t[:, h * hd:(h + 1) * hd].reshape(B, S, hd) for h in range(H)],
                axis=0)                                                # (H*B, S, hd)

        qh, kh, vh = to_heads(q), to_heads(k), to_heads(v)

        # one batched QK^T, one batched PV -- no per-head matmul loop.
        s = jnp.einsum('nqd,nkd->nqk', qh, kh,
                       preferred_element_type=jnp.float32) + bias      # (H*B, S, S)
        m = jnp.max(s, axis=-1, keepdims=True)
        e = jnp.exp(s - m)
        p = e / jnp.sum(e, axis=-1, keepdims=True)        # exact softmax (parity)
        ctx = jnp.einsum('nqk,nkd->nqd', p, vh,
                         preferred_element_type=jnp.float32)           # (H*B, S, hd)

        # merge heads back onto lanes, then ONE output-projection matmul.
        ctx3 = ctx.reshape(H, BS, hd)
        ctx2 = jnp.concatenate([ctx3[h] for h in range(H)], axis=1)    # (BS, D)
        attn = (jnp.dot(ctx2, wo_ref[l], preferred_element_type=jnp.float32)
                + bo_ref[l])
        x = _layernorm(x + attn, n1w_ref[l], n1b_ref[l], eps)

        # ---- cross-attention on zero memory, constant-folded to one row -----
        # (softmax over identical keys is uniform; every value row == bv_c,
        #  so the block output is exactly bv_c @ Wo_c + bo_c, precomputed.)
        x = _layernorm(x + cross_ref[l], n2w_ref[l], n2b_ref[l], eps)

        # ---- feed-forward (relu) + residual + LayerNorm3 ---------------------
        h1 = jnp.maximum(
            jnp.dot(x, w1_ref[l], preferred_element_type=jnp.float32)
            + b1_ref[l], 0.0)
        ff = (jnp.dot(h1, w2_ref[l], preferred_element_type=jnp.float32)
              + b2_ref[l])
        x = _layernorm(x + ff, n3w_ref[l], n3b_ref[l], eps)

    # ---- final LayerNorm + lane-dense (vocab padded to 128) projection ------
    x = _layernorm(x, nfw_ref[...], nfb_ref[...], eps)
    o_ref[...] = (jnp.dot(x, wout_ref[...], preferred_element_type=jnp.float32)
                  + bout_ref[...])


# ------------------------------- JAX wrapper ---------------------------------

def music_transformer2_forward(params, tokens, tgt_key_padding_mask, cfg):
    B, S = tokens.shape
    D, V = cfg['d_model'], cfg['vocab_size']
    FF, L, H = cfg['dim_feedforward'], cfg['num_layers'], cfg['nhead']
    BS = B * S
    Vp = params['wout_p'].shape[1]

    tok = tokens.reshape(BS).astype(jnp.int32)                         # SMEM input
    # tiny (B, S) additive key-padding bias (True = padded -> NEG)
    pad_bias = jnp.where(tgt_key_padding_mask, NEG, 0.0).astype(jnp.float32)

    args = (tok, pad_bias, params['emb'],
            params['wqkv'], params['bqkv'], params['wo'], params['bo'],
            params['cross'],
            params['n1w'], params['n1b'], params['n2w'], params['n2b'],
            params['w1'], params['b1'], params['w2'], params['b2'],
            params['n3w'], params['n3b'],
            params['nfw'], params['nfb'], params['wout_p'], params['bout_p'])

    # advisory cost estimate for XLA's scheduler
    flops = (2 * BS * D * Vp
             + L * (2 * BS * D * 3 * D            # qkv projection
                    + 4 * H * B * S * S * (D // H)  # QK^T + PV
                    + 2 * BS * D * D              # Wo
                    + 4 * BS * D * FF))           # FFN
    bytes_accessed = (sum(int(a.size) * a.dtype.itemsize for a in args)
                      + BS * Vp * 4)
    cost = pl.CostEstimate(flops=int(flops),
                           transcendentals=int(L * H * B * S * S),
                           bytes_accessed=int(bytes_accessed))

    # everything-resident VMEM footprint is tiny; give it explicit headroom
    resident = bytes_accessed + BS * D * 4
    vmem_limit = int(max(2 * resident, 4 * 1024 * 1024))

    kernel = functools.partial(_fused_forward_kernel,
                               batch=B, seq_len=S, nhead=H, num_layers=L,
                               eps=cfg['layer_norm_eps'])

    in_specs = ([pl.BlockSpec(memory_space=pltpu.MemorySpace.SMEM)]         # tokens
                + [pl.BlockSpec(memory_space=pltpu.MemorySpace.VMEM)] * (len(args) - 1))

    out = pl.pallas_call(
        kernel,
        out_shape=jax.ShapeDtypeStruct((BS, Vp), jnp.float32),
        in_specs=in_specs,
        out_specs=pl.BlockSpec(memory_space=pltpu.MemorySpace.VMEM),
        scratch_shapes=[pltpu.VMEM((BS, D), jnp.float32)],
        compiler_params=pltpu.CompilerParams(vmem_limit_bytes=vmem_limit),
        cost_estimate=cost,
    )(*args)

    return out[:, :V].reshape(B, S, V)


# ------------------------------ parameter init --------------------------------

def init_params(key, cfg):
    D, FF = cfg['d_model'], cfg['dim_feedforward']
    V, L = cfg['vocab_size'], cfg['num_layers']
    kit = iter(jax.random.split(key, 64))

    def rnd(shape, scale=0.05):
        return jax.random.normal(next(kit), shape, jnp.float32) * scale

    params = {'emb': rnd((V, D), 0.1)}

    layers = []
    for _ in range(L):
        # self-attention (in_proj split into q/k/v, stored (in, out)), packed.
        wq, wk, wv = rnd((D, D)), rnd((D, D)), rnd((D, D))
        bq, bk, bv = rnd((1, D)), rnd((1, D)), rnd((1, D))
        wo_s, bo_s = rnd((D, D)), rnd((1, D))
        # cross-attention raw params; only bv_c / Wo_c / bo_c can reach the
        # output when memory == 0, so fold them into one constant row.
        bv_c = rnd((1, D))
        wo_c, bo_c = rnd((D, D)), rnd((1, D))
        cross = jnp.dot(bv_c, wo_c) + bo_c                   # exact fold, (1, D)
        layers.append(dict(
            wqkv=jnp.concatenate([wq, wk, wv], axis=1),      # (D, 3D)
            bqkv=jnp.concatenate([bq, bk, bv], axis=1),      # (1, 3D)
            wo=wo_s, bo=bo_s, cross=cross,
            n1w=jnp.ones((1, D), jnp.float32), n1b=jnp.zeros((1, D), jnp.float32),
            n2w=jnp.ones((1, D), jnp.float32), n2b=jnp.zeros((1, D), jnp.float32),
            n3w=jnp.ones((1, D), jnp.float32), n3b=jnp.zeros((1, D), jnp.float32),
            w1=rnd((D, FF)), b1=rnd((1, FF)),
            w2=rnd((FF, D)), b2=rnd((1, D)),
        ))
    # stack per-layer params along a leading L axis so the fused kernel takes
    # one ref per parameter kind instead of one per layer.
    for name in layers[0]:
        params[name] = jnp.stack([lp[name] for lp in layers], axis=0)

    params['nfw'] = jnp.ones((1, D), jnp.float32)
    params['nfb'] = jnp.zeros((1, D), jnp.float32)

    # lane-dense head: pad vocab to a multiple of 128 with zero columns.
    Vp = ((V + 127) // 128) * 128
    wout, bout = rnd((D, V)), rnd((1, V))
    params['wout_p'] = jnp.zeros((D, Vp), jnp.float32).at[:, :V].set(wout)
    params['bout_p'] = jnp.zeros((1, Vp), jnp.float32).at[:, :V].set(bout)
    return params


# ----------------------------------- main -------------------------------------

if __name__ == "__main__":
    # config implied by MusicTransformer2.__init__ (small, TPU-friendly sizes)
    cfg = dict(
        vocab_size=48, d_model=32, embeded_dim=32, nhead=4,
        dim_feedforward=64, num_layers=2, seq_len=8,
        dropout=0.0,            # eval / p=0 -> dropout is the identity
        activation="relu", layer_norm_eps=1e-5,
        batch_first=True, norm_first=False,
    )
    B, S = 2, cfg['seq_len']

    key = jax.random.PRNGKey(0)
    kp, kx = jax.random.split(key)
    params = init_params(kp, cfg)

    tokens = jax.random.randint(kx, (B, S), 0, cfg['vocab_size'], dtype=jnp.int32)
    # tgt_key_padding_mask: True = padded position (last two tokens of batch 1)
    tgt_key_padding_mask = jnp.zeros((B, S), dtype=bool).at[1, S - 2:].set(True)

    out = music_transformer2_forward(params, tokens, tgt_key_padding_mask, cfg)
    out = jax.block_until_ready(out)

    assert out.shape == (B, S, cfg['vocab_size']), out.shape
    assert bool(jnp.all(jnp.isfinite(out)))
    print("KERNEL_OK")
</pallas_src>

<mosaic_0001>
module attributes {stable_mosaic.version = 11 : i64} {
  func.func @_fused_forward_kernel(%arg0: memref<16xi32, #tpu.memory_space<smem>>, %arg1: memref<2x8xf32, #tpu.memory_space<vmem>>, %arg2: memref<48x32xf32, #tpu.memory_space<vmem>>, %arg3: memref<2x32x96xf32, #tpu.memory_space<vmem>>, %arg4: memref<2x1x96xf32, #tpu.memory_space<vmem>>, %arg5: memref<2x32x32xf32, #tpu.memory_space<vmem>>, %arg6: memref<2x1x32xf32, #tpu.memory_space<vmem>>, %arg7: memref<2x1x32xf32, #tpu.memory_space<vmem>>, %arg8: memref<2x1x32xf32, #tpu.memory_space<vmem>>, %arg9: memref<2x1x32xf32, #tpu.memory_space<vmem>>, %arg10: memref<2x1x32xf32, #tpu.memory_space<vmem>>, %arg11: memref<2x1x32xf32, #tpu.memory_space<vmem>>, %arg12: memref<2x32x64xf32, #tpu.memory_space<vmem>>, %arg13: memref<2x1x64xf32, #tpu.memory_space<vmem>>, %arg14: memref<2x64x32xf32, #tpu.memory_space<vmem>>, %arg15: memref<2x1x32xf32, #tpu.memory_space<vmem>>, %arg16: memref<2x1x32xf32, #tpu.memory_space<vmem>>, %arg17: memref<2x1x32xf32, #tpu.memory_space<vmem>>, %arg18: memref<1x32xf32, #tpu.memory_space<vmem>>, %arg19: memref<1x32xf32, #tpu.memory_space<vmem>>, %arg20: memref<32x128xf32, #tpu.memory_space<vmem>>, %arg21: memref<1x128xf32, #tpu.memory_space<vmem>>, %arg22: memref<16x128xf32, #tpu.memory_space<vmem>>, %arg23: memref<16x32xf32, #tpu.memory_space<vmem>>) attributes {dimension_semantics = [], scalar_prefetch = 0 : i64, scratch_operands = 1 : i64, tpu.core_type = #tpu.core_type<tc>} {
    %c0 = arith.constant 0 : index
    %0 = memref.load %arg0[%c0] : memref<16xi32, #tpu.memory_space<smem>>
    %1 = arith.index_cast %0 : i32 to index
    %c0_0 = arith.constant 0 : index
    %2 = vector.load %arg2[%1, %c0_0] : memref<48x32xf32, #tpu.memory_space<vmem>>, vector<1x32xf32>
    %c0_1 = arith.constant 0 : index
    %c0_2 = arith.constant 0 : index
    %3 = vector.load %arg23[%c0_1, %c0_2] : memref<16x32xf32, #tpu.memory_space<vmem>>, vector<1x32xf32>
    tpu.vector_store %arg23[%c0_1, %c0_2], %2 {strides = array<i32>} : memref<16x32xf32, #tpu.memory_space<vmem>>, vector<1x32xf32>,
    %c1 = arith.constant 1 : index
    %4 = memref.load %arg0[%c1] : memref<16xi32, #tpu.memory_space<smem>>
    %5 = arith.index_cast %4 : i32 to index
    %c0_3 = arith.constant 0 : index
    %6 = vector.load %arg2[%5, %c0_3] : memref<48x32xf32, #tpu.memory_space<vmem>>, vector<1x32xf32>
    %c1_4 = arith.constant 1 : index
    %c0_5 = arith.constant 0 : index
    %7 = vector.load %arg23[%c1_4, %c0_5] : memref<16x32xf32, #tpu.memory_space<vmem>>, vector<1x32xf32>
    tpu.vector_store %arg23[%c1_4, %c0_5], %6 {strides = array<i32>} : memref<16x32xf32, #tpu.memory_space<vmem>>, vector<1x32xf32>,
    %c2 = arith.constant 2 : index
    %8 = memref.load %arg0[%c2] : memref<16xi32, #tpu.memory_space<smem>>
    %9 = arith.index_cast %8 : i32 to index
    %c0_6 = arith.constant 0 : index
    %10 = vector.load %arg2[%9, %c0_6] : memref<48x32xf32, #tpu.memory_space<vmem>>, vector<1x32xf32>
    %c2_7 = arith.constant 2 : index
    %c0_8 = arith.constant 0 : index
    %11 = vector.load %arg23[%c2_7, %c0_8] : memref<16x32xf32, #tpu.memory_space<vmem>>, vector<1x32xf32>
    tpu.vector_store %arg23[%c2_7, %c0_8], %10 {strides = array<i32>} : memref<16x32xf32, #tpu.memory_space<vmem>>, vector<1x32xf32>,
    %c3 = arith.constant 3 : index
    %12 = memref.load %arg0[%c3] : memref<16xi32, #tpu.memory_space<smem>>
    %13 = arith.index_cast %12 : i32 to index
    %c0_9 = arith.constant 0 : index
    %14 = vector.load %arg2[%13, %c0_9] : memref<48x32xf32, #tpu.memory_space<vmem>>, vector<1x32xf32>
    %c3_10 = arith.constant 3 : index
    %c0_11 = arith.constant 0 : index
    %15 = vector.load %arg23[%c3_10, %c0_11] : memref<16x32xf32, #tpu.memory_space<vmem>>, vector<1x32xf32>
    tpu.vector_store %arg23[%c3_10, %c0_11], %14 {strides = array<i32>} : memref<16x32xf32, #tpu.memory_space<vmem>>, vector<1x32xf32>,
    %c4 = arith.constant 4 : index
    %16 = memref.load %arg0[%c4] : memref<16xi32, #tpu.memory_space<smem>>
    %17 = arith.index_cast %16 : i32 to index
    %c0_12 = arith.constant 0 : index
    %18 = vector.load %arg2[%17, %c0_12] : memref<48x32xf32, #tpu.memory_space<vmem>>, vector<1x32xf32>
    %c4_13 = arith.constant 4 : index
    %c0_14 = arith.constant 0 : index
    %19 = vector.load %arg23[%c4_13, %c0_14] : memref<16x32xf32, #tpu.memory_space<vmem>>, vector<1x32xf32>
    tpu.vector_store %arg23[%c4_13, %c0_14], %18 {strides = array<i32>} : memref<16x32xf32, #tpu.memory_space<vmem>>, vector<1x32xf32>,
    %c5 = arith.constant 5 : index
    %20 = memref.load %arg0[%c5] : memref<16xi32, #tpu.memory_space<smem>>
    %21 = arith.index_cast %20 : i32 to index
    %c0_15 = arith.constant 0 : index
    %22 = vector.load %arg2[%21, %c0_15] : memref<48x32xf32, #tpu.memory_space<vmem>>, vector<1x32xf32>
    %c5_16 = arith.constant 5 : index
    %c0_17 = arith.constant 0 : index
    %23 = vector.load %arg23[%c5_16, %c0_17] : memref<16x32xf32, #tpu.memory_space<vmem>>, vector<1x32xf32>
    tpu.vector_store %arg23[%c5_16, %c0_17], %22 {strides = array<i32>} : memref<16x32xf32, #tpu.memory_space<vmem>>, vector<1x32xf32>,
    %c6 = arith.constant 6 : index
    %24 = memref.load %arg0[%c6] : memref<16xi32, #tpu.memory_space<smem>>
    %25 = arith.index_cast %24 : i32 to index
    %c0_18 = arith.constant 0 : index
    %26 = vector.load %arg2[%25, %c0_18] : memref<48x32xf32, #tpu.memory_space<vmem>>, vector<1x32xf32>
    %c6_19 = arith.constant 6 : index
    %c0_20 = arith.constant 0 : index
    %27 = vector.load %arg23[%c6_19, %c0_20] : memref<16x32xf32, #tpu.memory_space<vmem>>, vector<1x32xf32>
    tpu.vector_store %arg23[%c6_19, %c0_20], %26 {strides = array<i32>} : memref<16x32xf32, #tpu.memory_space<vmem>>, vector<1x32xf32>,
    %c7 = arith.constant 7 : index
    %28 = memref.load %arg0[%c7] : memref<16xi32, #tpu.memory_space<smem>>
    %29 = arith.index_cast %28 : i32 to index
    %c0_21 = arith.constant 0 : index
    %30 = vector.load %arg2[%29, %c0_21] : memref<48x32xf32, #tpu.memory_space<vmem>>, vector<1x32xf32>
    %c7_22 = arith.constant 7 : index
    %c0_23 = arith.constant 0 : index
    %31 = vector.load %arg23[%c7_22, %c0_23] : memref<16x32xf32, #tpu.memory_space<vmem>>, vector<1x32xf32>
    tpu.vector_store %arg23[%c7_22, %c0_23], %30 {strides = array<i32>} : memref<16x32xf32, #tpu.memory_space<vmem>>, vector<1x32xf32>,
    %c8 = arith.constant 8 : index
    %32 = memref.load %arg0[%c8] : memref<16xi32, #tpu.memory_space<smem>>
    %33 = arith.index_cast %32 : i32 to index
    %c0_24 = arith.constant 0 : index
    %34 = vector.load %arg2[%33, %c0_24] : memref<48x32xf32, #tpu.memory_space<vmem>>, vector<1x32xf32>
    %c8_25 = arith.constant 8 : index
    %c0_26 = arith.constant 0 : index
    %35 = vector.load %arg23[%c8_25, %c0_26] : memref<16x32xf32, #tpu.memory_space<vmem>>, vector<1x32xf32>
    tpu.vector_store %arg23[%c8_25, %c0_26], %34 {strides = array<i32>} : memref<16x32xf32, #tpu.memory_space<vmem>>, vector<1x32xf32>,
    %c9 = arith.constant 9 : index
    %36 = memref.load %arg0[%c9] : memref<16xi32, #tpu.memory_space<smem>>
    %37 = arith.index_cast %36 : i32 to index
    %c0_27 = arith.constant 0 : index
    %38 = vector.load %arg2[%37, %c0_27] : memref<48x32xf32, #tpu.memory_space<vmem>>, vector<1x32xf32>
    %c9_28 = arith.constant 9 : index
    %c0_29 = arith.constant 0 : index
    %39 = vector.load %arg23[%c9_28, %c0_29] : memref<16x32xf32, #tpu.memory_space<vmem>>, vector<1x32xf32>
    tpu.vector_store %arg23[%c9_28, %c0_29], %38 {strides = array<i32>} : memref<16x32xf32, #tpu.memory_space<vmem>>, vector<1x32xf32>,
    %c10 = arith.constant 10 : index
    %40 = memref.load %arg0[%c10] : memref<16xi32, #tpu.memory_space<smem>>
    %41 = arith.index_cast %40 : i32 to index
    %c0_30 = arith.constant 0 : index
    %42 = vector.load %arg2[%41, %c0_30] : memref<48x32xf32, #tpu.memory_space<vmem>>, vector<1x32xf32>
    %c10_31 = arith.constant 10 : index
    %c0_32 = arith.constant 0 : index
    %43 = vector.load %arg23[%c10_31, %c0_32] : memref<16x32xf32, #tpu.memory_space<vmem>>, vector<1x32xf32>
    tpu.vector_store %arg23[%c10_31, %c0_32], %42 {strides = array<i32>} : memref<16x32xf32, #tpu.memory_space<vmem>>, vector<1x32xf32>,
    %c11 = arith.constant 11 : index
    %44 = memref.load %arg0[%c11] : memref<16xi32, #tpu.memory_space<smem>>
    %45 = arith.index_cast %44 : i32 to index
    %c0_33 = arith.constant 0 : index
    %46 = vector.load %arg2[%45, %c0_33] : memref<48x32xf32, #tpu.memory_space<vmem>>, vector<1x32xf32>
    %c11_34 = arith.constant 11 : index
    %c0_35 = arith.constant 0 : index
    %47 = vector.load %arg23[%c11_34, %c0_35] : memref<16x32xf32, #tpu.memory_space<vmem>>, vector<1x32xf32>
    tpu.vector_store %arg23[%c11_34, %c0_35], %46 {strides = array<i32>} : memref<16x32xf32, #tpu.memory_space<vmem>>, vector<1x32xf32>,
    %c12 = arith.constant 12 : index
    %48 = memref.load %arg0[%c12] : memref<16xi32, #tpu.memory_space<smem>>
    %49 = arith.index_cast %48 : i32 to index
    %c0_36 = arith.constant 0 : index
    %50 = vector.load %arg2[%49, %c0_36] : memref<48x32xf32, #tpu.memory_space<vmem>>, vector<1x32xf32>
    %c12_37 = arith.constant 12 : index
    %c0_38 = arith.constant 0 : index
    %51 = vector.load %arg23[%c12_37, %c0_38] : memref<16x32xf32, #tpu.memory_space<vmem>>, vector<1x32xf32>
    tpu.vector_store %arg23[%c12_37, %c0_38], %50 {strides = array<i32>} : memref<16x32xf32, #tpu.memory_space<vmem>>, vector<1x32xf32>,
    %c13 = arith.constant 13 : index
    %52 = memref.load %arg0[%c13] : memref<16xi32, #tpu.memory_space<smem>>
    %53 = arith.index_cast %52 : i32 to index
    %c0_39 = arith.constant 0 : index
    %54 = vector.load %arg2[%53, %c0_39] : memref<48x32xf32, #tpu.memory_space<vmem>>, vector<1x32xf32>
    %c13_40 = arith.constant 13 : index
    %c0_41 = arith.constant 0 : index
    %55 = vector.load %arg23[%c13_40, %c0_41] : memref<16x32xf32, #tpu.memory_space<vmem>>, vector<1x32xf32>
    tpu.vector_store %arg23[%c13_40, %c0_41], %54 {strides = array<i32>} : memref<16x32xf32, #tpu.memory_space<vmem>>, vector<1x32xf32>,
    %c14 = arith.constant 14 : index
    %56 = memref.load %arg0[%c14] : memref<16xi32, #tpu.memory_space<smem>>
    %57 = arith.index_cast %56 : i32 to index
    %c0_42 = arith.constant 0 : index
    %58 = vector.load %arg2[%57, %c0_42] : memref<48x32xf32, #tpu.memory_space<vmem>>, vector<1x32xf32>
    %c14_43 = arith.constant 14 : index
    %c0_44 = arith.constant 0 : index
    %59 = vector.load %arg23[%c14_43, %c0_44] : memref<16x32xf32, #tpu.memory_space<vmem>>, vector<1x32xf32>
    tpu.vector_store %arg23[%c14_43, %c0_44], %58 {strides = array<i32>} : memref<16x32xf32, #tpu.memory_space<vmem>>, vector<1x32xf32>,
    %c15 = arith.constant 15 : index
    %60 = memref.load %arg0[%c15] : memref<16xi32, #tpu.memory_space<smem>>
    %61 = arith.index_cast %60 : i32 to index
    %c0_45 = arith.constant 0 : index
    %62 = vector.load %arg2[%61, %c0_45] : memref<48x32xf32, #tpu.memory_space<vmem>>, vector<1x32xf32>
    %c15_46 = arith.constant 15 : index
    %c0_47 = arith.constant 0 : index
    %63 = vector.load %arg23[%c15_46, %c0_47] : memref<16x32xf32, #tpu.memory_space<vmem>>, vector<1x32xf32>
    tpu.vector_store %arg23[%c15_46, %c0_47], %62 {strides = array<i32>} : memref<16x32xf32, #tpu.memory_space<vmem>>, vector<1x32xf32>,
    %c0_48 = arith.constant 0 : index
    %c0_49 = arith.constant 0 : index
    %64 = vector.load %arg23[%c0_48, %c0_49] : memref<16x32xf32, #tpu.memory_space<vmem>>, vector<16x32xf32>
    %65 = tpu.iota {dimensions = array<i32: 0>} : vector<8x8xi32>
    %66 = tpu.iota {dimensions = array<i32: 1>} : vector<8x8xi32>
    %67 = arith.cmpi sle, %66, %65 : vector<8x8xi32>
    %cst = arith.constant 0.000000e+00 : f32
    %cst_50 = arith.constant -1.000000e+09 : f32
    %68 = vector.broadcast %cst : f32 to vector<8x8xf32>
    %69 = vector.broadcast %cst_50 : f32 to vector<8x8xf32>
    %70 = arith.select %67, %68, %69 : vector<8x8xi1>, vector<8x8xf32>
    %71 = vector.shape_cast %70 : vector<8x8xf32> to vector<1x8x8xf32>
    %c0_51 = arith.constant 0 : index
    %c0_52 = arith.constant 0 : index
    %72 = vector.load %arg1[%c0_51, %c0_52] : memref<2x8xf32, #tpu.memory_space<vmem>>, vector<2x8xf32>
    %73 = vector.shape_cast %72 : vector<2x8xf32> to vector<2x1x8xf32>
    %74 = vector.broadcast %71 : vector<1x8x8xf32> to vector<2x8x8xf32>
    %75 = vector.broadcast %73 : vector<2x1x8xf32> to vector<2x8x8xf32>
    %76 = arith.addf %74, %75 : vector<2x8x8xf32>
    %77 = tpu.concatenate %76, %76, %76, %76 in 0 : vector<2x8x8xf32>, vector<2x8x8xf32>, vector<2x8x8xf32>, vector<2x8x8xf32> -> vector<8x8x8xf32>
    %c0_53 = arith.constant 0 : index
    %c0_54 = arith.constant 0 : index
    %c0_55 = arith.constant 0 : index
    %78 = vector.load %arg3[%c0_53, %c0_54, %c0_55] : memref<2x32x96xf32, #tpu.memory_space<vmem>>, vector<1x32x96xf32>
    %79 = vector.shape_cast %78 : vector<1x32x96xf32> to vector<32x96xf32>
    %cst_56 = arith.constant dense<0.000000e+00> : vector<16x96xf32>
    %80 = tpu.matmul %64, %79, %cst_56 {dimension_numbers = #tpu.dot_dimension_numbers<[1], [0], [0], [1], [0, 0, 1, 1], [], []>} : vector<16x32xf32>, vector<32x96xf32>, vector<16x96xf32> -> vector<16x96xf32>
    %c0_57 = arith.constant 0 : index
    %c0_58 = arith.constant 0 : index
    %c0_59 = arith.constant 0 : index
    %81 = vector.load %arg4[%c0_57, %c0_58, %c0_59] : memref<2x1x96xf32, #tpu.memory_space<vmem>>, vector<1x1x96xf32>
    %82 = vector.shape_cast %81 : vector<1x1x96xf32> to vector<1x96xf32>
    %83 = vector.broadcast %82 : vector<1x96xf32> to vector<16x96xf32>
    %84 = arith.addf %80, %83 : vector<16x96xf32>
    %85 = vector.extract_strided_slice %84 {offsets = [0, 0], sizes = [16, 32], strides = [1, 1]} : vector<16x96xf32> to vector<16x32xf32>
    %cst_60 = arith.constant 0.353553385 : f32
    %86 = vector.broadcast %cst_60 : f32 to vector<16x32xf32>
    %87 = arith.mulf %85, %86 : vector<16x32xf32>
    %88 = vector.extract_strided_slice %84 {offsets = [0, 32], sizes = [16, 32], strides = [1, 1]} : vector<16x96xf32> to vector<16x32xf32>
    %89 = vector.extract_strided_slice %84 {offsets = [0, 64], sizes = [16, 32], strides = [1, 1]} : vector<16x96xf32> to vector<16x32xf32>
    %90 = vector.extract_strided_slice %87 {offsets = [0, 0], sizes = [16, 8], strides = [1, 1]} : vector<16x32xf32> to vector<16x8xf32>
    %91 = vector.shape_cast %90 : vector<16x8xf32> to vector<2x8x8xf32>
    %92 = vector.extract_strided_slice %87 {offsets = [0, 8], sizes = [16, 8], strides = [1, 1]} : vector<16x32xf32> to vector<16x8xf32>
    %93 = vector.shape_cast %92 : vector<16x8xf32> to vector<2x8x8xf32>
    %94 = vector.extract_strided_slice %87 {offsets = [0, 16], sizes = [16, 8], strides = [1, 1]} : vector<16x32xf32> to vector<16x8xf32>
    %95 = vector.shape_cast %94 : vector<16x8xf32> to vector<2x8x8xf32>
    %96 = vector.extract_strided_slice %87 {offsets = [0, 24], sizes = [16, 8], strides = [1, 1]} : vector<16x32xf32> to vector<16x8xf32>
    %97 = vector.shape_cast %96 : vector<16x8xf32> to vector<2x8x8xf32>
    %98 = tpu.concatenate %91, %93, %95, %97 in 0 : vector<2x8x8xf32>, vector<2x8x8xf32>, vector<2x8x8xf32>, vector<2x8x8xf32> -> vector<8x8x8xf32>
    %99 = vector.extract_strided_slice %88 {offsets = [0, 0], sizes = [16, 8], strides = [1, 1]} : vector<16x32xf32> to vector<16x8xf32>
    %100 = vector.shape_cast %99 : vector<16x8xf32> to vector<2x8x8xf32>
    %101 = vector.extract_strided_slice %88 {offsets = [0, 8], sizes = [16, 8], strides = [1, 1]} : vector<16x32xf32> to vector<16x8xf32>
    %102 = vector.shape_cast %101 : vector<16x8xf32> to vector<2x8x8xf32>
    %103 = vector.extract_strided_slice %88 {offsets = [0, 16], sizes = [16, 8], strides = [1, 1]} : vector<16x32xf32> to vector<16x8xf32>
    %104 = vector.shape_cast %103 : vector<16x8xf32> to vector<2x8x8xf32>
    %105 = vector.extract_strided_slice %88 {offsets = [0, 24], sizes = [16, 8], strides = [1, 1]} : vector<16x32xf32> to vector<16x8xf32>
    %106 = vector.shape_cast %105 : vector<16x8xf32> to vector<2x8x8xf32>
    %107 = tpu.concatenate %100, %102, %104, %106 in 0 : vector<2x8x8xf32>, vector<2x8x8xf32>, vector<2x8x8xf32>, vector<2x8x8xf32> -> vector<8x8x8xf32>
    %108 = vector.extract_strided_slice %89 {offsets = [0, 0], sizes = [16, 8], strides = [1, 1]} : vector<16x32xf32> to vector<16x8xf32>
    %109 = vector.shape_cast %108 : vector<16x8xf32> to vector<2x8x8xf32>
    %110 = vector.extract_strided_slice %89 {offsets = [0, 8], sizes = [16, 8], strides = [1, 1]} : vector<16x32xf32> to vector<16x8xf32>
    %111 = vector.shape_cast %110 : vector<16x8xf32> to vector<2x8x8xf32>
    %112 = vector.extract_strided_slice %89 {offsets = [0, 16], sizes = [16, 8], strides = [1, 1]} : vector<16x32xf32> to vector<16x8xf32>
    %113 = vector.shape_cast %112 : vector<16x8xf32> to vector<2x8x8xf32>
    %114 = vector.extract_strided_slice %89 {offsets = [0, 24], sizes = [16, 8], strides = [1, 1]} : vector<16x32xf32> to vector<16x8xf32>
    %115 = vector.shape_cast %114 : vector<16x8xf32> to vector<2x8x8xf32>
    %116 = tpu.concatenate %109, %111, %113, %115 in 0 : vector<2x8x8xf32>, vector<2x8x8xf32>, vector<2x8x8xf32>, vector<2x8x8xf32> -> vector<8x8x8xf32>
    "tpu.trace_start"() <{level = 10 : i32, message = "nqd,nkd->nqk"}> : () -> ()
    %cst_61 = arith.constant dense<0.000000e+00> : vector<8x8x8xf32>
    %117 = tpu.matmul %98, %107, %cst_61 {dimension_numbers = #tpu.dot_dimension_numbers<[2], [2], [1], [1], [0, 0, 0, 1, 1, 1], [0], [0]>} : vector<8x8x8xf32>, vector<8x8x8xf32>, vector<8x8x8xf32> -> vector<8x8x8xf32>
    "tpu.trace_stop"() : () -> ()
    %118 = arith.addf %117, %77 : vector<8x8x8xf32>
    %cst_62 = arith.constant dense<0xFF800000> : vector<8x8xf32>
    %119 = vector.multi_reduction <maximumf>, %118, %cst_62 [2] : vector<8x8x8xf32> to vector<8x8xf32>
    %120 = vector.shape_cast %119 : vector<8x8xf32> to vector<8x8x1xf32>
    %121 = vector.broadcast %120 : vector<8x8x1xf32> to vector<8x8x8xf32>
    %122 = arith.subf %118, %121 : vector<8x8x8xf32>
    %123 = math.exp %122 : vector<8x8x8xf32>
    %cst_63 = arith.constant dense<0.000000e+00> : vector<8x8xf32>
    %124 = vector.multi_reduction <add>, %123, %cst_63 [2] : vector<8x8x8xf32> to vector<8x8xf32>
    %125 = vector.shape_cast %124 : vector<8x8xf32> to vector<8x8x1xf32>
    %126 = vector.broadcast %125 : vector<8x8x1xf32> to vector<8x8x8xf32>
    %127 = arith.divf %123, %126 : vector<8x8x8xf32>
    "tpu.trace_start"() <{level = 10 : i32, message = "nqk,nkd->nqd"}> : () -> ()
    %cst_64 = arith.constant dense<0.000000e+00> : vector<8x8x8xf32>
    %128 = tpu.matmul %127, %116, %cst_64 {dimension_numbers = #tpu.dot_dimension_numbers<[2], [1], [1], [2], [0, 0, 0, 1, 1, 2], [0], [0]>} : vector<8x8x8xf32>, vector<8x8x8xf32>, vector<8x8x8xf32> -> vector<8x8x8xf32>
    "tpu.trace_stop"() : () -> ()
    %129 = vector.shape_cast %128 : vector<8x8x8xf32> to vector<4x16x8xf32>
    %130 = vector.extract_strided_slice %129 {offsets = [0, 0, 0], sizes = [1, 16, 8], strides = [1, 1, 1]} : vector<4x16x8xf32> to vector<1x16x8xf32>
    %131 = vector.shape_cast %130 : vector<1x16x8xf32> to vector<16x8xf32>
    %132 = vector.extract_strided_slice %129 {offsets = [1, 0, 0], sizes = [1, 16, 8], strides = [1, 1, 1]} : vector<4x16x8xf32> to vector<1x16x8xf32>
    %133 = vector.shape_cast %132 : vector<1x16x8xf32> to vector<16x8xf32>
    %134 = vector.extract_strided_slice %129 {offsets = [2, 0, 0], sizes = [1, 16, 8], strides = [1, 1, 1]} : vector<4x16x8xf32> to vector<1x16x8xf32>
    %135 = vector.shape_cast %134 : vector<1x16x8xf32> to vector<16x8xf32>
    %136 = vector.extract_strided_slice %129 {offsets = [3, 0, 0], sizes = [1, 16, 8], strides = [1, 1, 1]} : vector<4x16x8xf32> to vector<1x16x8xf32>
    %137 = vector.shape_cast %136 : vector<1x16x8xf32> to vector<16x8xf32>
    %138 = tpu.concatenate %131, %133, %135, %137 in 1 : vector<16x8xf32>, vector<16x8xf32>, vector<16x8xf32>, vector<16x8xf32> -> vector<16x32xf32>
    %c0_65 = arith.constant 0 : index
    %c0_66 = arith.constant 0 : index
    %c0_67 = arith.constant 0 : index
    %139 = vector.load %arg5[%c0_65, %c0_66, %c0_67] : memref<2x32x32xf32, #tpu.memory_space<vmem>>, vector<1x32x32xf32>
    %140 = vector.shape_cast %139 : vector<1x32x32xf32> to vector<32x32xf32>
    %cst_68 = arith.constant dense<0.000000e+00> : vector<16x32xf32>
    %141 = tpu.matmul %138, %140, %cst_68 {dimension_numbers = #tpu.dot_dimension_numbers<[1], [0], [0], [1], [0, 0, 1, 1], [], []>} : vector<16x32xf32>, vector<32x32xf32>, vector<16x32xf32> -> vector<16x32xf32>
    %c0_69 = arith.constant 0 : index
    %c0_70 = arith.constant 0 : index
    %c0_71 = arith.constant 0 : index
    %142 = vector.load %arg6[%c0_69, %c0_70, %c0_71] : memref<2x1x32xf32, #tpu.memory_space<vmem>>, vector<1x1x32xf32>
    %143 = vector.shape_cast %142 : vector<1x1x32xf32> to vector<1x32xf32>
    %144 = vector.broadcast %143 : vector<1x32xf32> to vector<16x32xf32>
    %145 = arith.addf %141, %144 : vector<16x32xf32>
    %146 = arith.addf %64, %145 : vector<16x32xf32>
    %c0_72 = arith.constant 0 : index
    %c0_73 = arith.constant 0 : index
    %c0_74 = arith.constant 0 : index
    %147 = vector.load %arg8[%c0_72, %c0_73, %c0_74] : memref<2x1x32xf32, #tpu.memory_space<vmem>>, vector<1x1x32xf32>
    %148 = vector.shape_cast %147 : vector<1x1x32xf32> to vector<1x32xf32>
    %c0_75 = arith.constant 0 : index
    %c0_76 = arith.constant 0 : index
    %c0_77 = arith.constant 0 : index
    %149 = vector.load %arg9[%c0_75, %c0_76, %c0_77] : memref<2x1x32xf32, #tpu.memory_space<vmem>>, vector<1x1x32xf32>
    %150 = vector.shape_cast %149 : vector<1x1x32xf32> to vector<1x32xf32>
    %cst_78 = arith.constant dense<0.000000e+00> : vector<16xf32>
    %151 = vector.multi_reduction <add>, %146, %cst_78 [1] : vector<16x32xf32> to vector<16xf32>
    %152 = vector.shape_cast %151 : vector<16xf32> to vector<16x1xf32>
    %cst_79 = arith.constant 3.200000e+01 : f32
    %153 = vector.broadcast %cst_79 : f32 to vector<16x1xf32>
    %154 = arith.divf %152, %153 : vector<16x1xf32>
    %155 = vector.broadcast %154 : vector<16x1xf32> to vector<16x32xf32>
    %156 = arith.subf %146, %155 : vector<16x32xf32>
    %157 = arith.mulf %156, %156 : vector<16x32xf32>
    %cst_80 = arith.constant dense<0.000000e+00> : vector<16xf32>
    %158 = vector.multi_reduction <add>, %157, %cst_80 [1] : vector<16x32xf32> to vector<16xf32>
    %159 = vector.shape_cast %158 : vector<16xf32> to vector<16x1xf32>
    %cst_81 = arith.constant 3.200000e+01 : f32
    %160 = vector.broadcast %cst_81 : f32 to vector<16x1xf32>
    %161 = arith.divf %159, %160 : vector<16x1xf32>
    %cst_82 = arith.constant 9.99999974E-6 : f32
    %162 = vector.broadcast %cst_82 : f32 to vector<16x1xf32>
    %163 = arith.addf %161, %162 : vector<16x1xf32>
    %164 = math.rsqrt %163 : vector<16x1xf32>
    %165 = vector.broadcast %164 : vector<16x1xf32> to vector<16x32xf32>
    %166 = arith.mulf %156, %165 : vector<16x32xf32>
    %167 = vector.broadcast %148 : vector<1x32xf32> to vector<16x32xf32>
    %168 = arith.mulf %166, %167 : vector<16x32xf32>
    %169 = vector.broadcast %150 : vector<1x32xf32> to vector<16x32xf32>
    %170 = arith.addf %168, %169 : vector<16x32xf32>
    %c0_83 = arith.constant 0 : index
    %c0_84 = arith.constant 0 : index
    %c0_85 = arith.constant 0 : index
    %171 = vector.load %arg7[%c0_83, %c0_84, %c0_85] : memref<2x1x32xf32, #tpu.memory_space<vmem>>, vector<1x1x32xf32>
    %172 = vector.shape_cast %171 : vector<1x1x32xf32> to vector<1x32xf32>
    %173 = vector.broadcast %172 : vector<1x32xf32> to vector<16x32xf32>
    %174 = arith.addf %170, %173 : vector<16x32xf32>
    %c0_86 = arith.constant 0 : index
    %c0_87 = arith.constant 0 : index
    %c0_88 = arith.constant 0 : index
    %175 = vector.load %arg10[%c0_86, %c0_87, %c0_88] : memref<2x1x32xf32, #tpu.memory_space<vmem>>, vector<1x1x32xf32>
    %176 = vector.shape_cast %175 : vector<1x1x32xf32> to vector<1x32xf32>
    %c0_89 = arith.constant 0 : index
    %c0_90 = arith.constant 0 : index
    %c0_91 = arith.constant 0 : index
    %177 = vector.load %arg11[%c0_89, %c0_90, %c0_91] : memref<2x1x32xf32, #tpu.memory_space<vmem>>, vector<1x1x32xf32>
    %178 = vector.shape_cast %177 : vector<1x1x32xf32> to vector<1x32xf32>
    %cst_92 = arith.constant dense<0.000000e+00> : vector<16xf32>
    %179 = vector.multi_reduction <add>, %174, %cst_92 [1] : vector<16x32xf32> to vector<16xf32>
    %180 = vector.shape_cast %179 : vector<16xf32> to vector<16x1xf32>
    %cst_93 = arith.constant 3.200000e+01 : f32
    %181 = vector.broadcast %cst_93 : f32 to vector<16x1xf32>
    %182 = arith.divf %180, %181 : vector<16x1xf32>
    %183 = vector.broadcast %182 : vector<16x1xf32> to vector<16x32xf32>
    %184 = arith.subf %174, %183 : vector<16x32xf32>
    %185 = arith.mulf %184, %184 : vector<16x32xf32>
    %cst_94 = arith.constant dense<0.000000e+00> : vector<16xf32>
    %186 = vector.multi_reduction <add>, %185, %cst_94 [1] : vector<16x32xf32> to vector<16xf32>
    %187 = vector.shape_cast %186 : vector<16xf32> to vector<16x1xf32>
    %cst_95 = arith.constant 3.200000e+01 : f32
    %188 = vector.broadcast %cst_95 : f32 to vector<16x1xf32>
    %189 = arith.divf %187, %188 : vector<16x1xf32>
    %cst_96 = arith.constant 9.99999974E-6 : f32
    %190 = vector.broadcast %cst_96 : f32 to vector<16x1xf32>
    %191 = arith.addf %189, %190 : vector<16x1xf32>
    %192 = math.rsqrt %191 : vector<16x1xf32>
    %193 = vector.broadcast %192 : vector<16x1xf32> to vector<16x32xf32>
    %194 = arith.mulf %184, %193 : vector<16x32xf32>
    %195 = vector.broadcast %176 : vector<1x32xf32> to vector<16x32xf32>
    %196 = arith.mulf %194, %195 : vector<16x32xf32>
    %197 = vector.broadcast %178 : vector<1x32xf32> to vector<16x32xf32>
    %198 = arith.addf %196, %197 : vector<16x32xf32>
    %c0_97 = arith.constant 0 : index
    %c0_98 = arith.constant 0 : index
    %c0_99 = arith.constant 0 : index
    %199 = vector.load %arg12[%c0_97, %c0_98, %c0_99] : memref<2x32x64xf32, #tpu.memory_space<vmem>>, vector<1x32x64xf32>
    %200 = vector.shape_cast %199 : vector<1x32x64xf32> to vector<32x64xf32>
    %cst_100 = arith.constant dense<0.000000e+00> : vector<16x64xf32>
    %201 = tpu.matmul %198, %200, %cst_100 {dimension_numbers = #tpu.dot_dimension_numbers<[1], [0], [0], [1], [0, 0, 1, 1], [], []>} : vector<16x32xf32>, vector<32x64xf32>, vector<16x64xf32> -> vector<16x64xf32>
    %c0_101 = arith.constant 0 : index
    %c0_102 = arith.constant 0 : index
    %c0_103 = arith.constant 0 : index
    %202 = vector.load %arg13[%c0_101, %c0_102, %c0_103] : memref<2x1x64xf32, #tpu.memory_space<vmem>>, vector<1x1x64xf32>
    %203 = vector.shape_cast %202 : vector<1x1x64xf32> to vector<1x64xf32>
    %204 = vector.broadcast %203 : vector<1x64xf32> to vector<16x64xf32>
    %205 = arith.addf %201, %204 : vector<16x64xf32>
    %cst_104 = arith.constant 0.000000e+00 : f32
    %206 = vector.broadcast %cst_104 : f32 to vector<16x64xf32>
    %207 = arith.maximumf %205, %206 : vector<16x64xf32>
    %c0_105 = arith.constant 0 : index
    %c0_106 = arith.constant 0 : index
    %c0_107 = arith.constant 0 : index
    %208 = vector.load %arg14[%c0_105, %c0_106, %c0_107] : memref<2x64x32xf32, #tpu.memory_space<vmem>>, vector<1x64x32xf32>
    %209 = vector.shape_cast %208 : vector<1x64x32xf32> to vector<64x32xf32>
    %cst_108 = arith.constant dense<0.000000e+00> : vector<16x32xf32>
    %210 = tpu.matmul %207, %209, %cst_108 {dimension_numbers = #tpu.dot_dimension_numbers<[1], [0], [0], [1], [0, 0, 1, 1], [], []>} : vector<16x64xf32>, vector<64x32xf32>, vector<16x32xf32> -> vector<16x32xf32>
    %c0_109 = arith.constant 0 : index
    %c0_110 = arith.constant 0 : index
    %c0_111 = arith.constant 0 : index
    %211 = vector.load %arg15[%c0_109, %c0_110, %c0_111] : memref<2x1x32xf32, #tpu.memory_space<vmem>>, vector<1x1x32xf32>
    %212 = vector.shape_cast %211 : vector<1x1x32xf32> to vector<1x32xf32>
    %213 = vector.broadcast %212 : vector<1x32xf32> to vector<16x32xf32>
    %214 = arith.addf %210, %213 : vector<16x32xf32>
    %215 = arith.addf %198, %214 : vector<16x32xf32>
    %c0_112 = arith.constant 0 : index
    %c0_113 = arith.constant 0 : index
    %c0_114 = arith.constant 0 : index
    %216 = vector.load %arg16[%c0_112, %c0_113, %c0_114] : memref<2x1x32xf32, #tpu.memory_space<vmem>>, vector<1x1x32xf32>
    %217 = vector.shape_cast %216 : vector<1x1x32xf32> to vector<1x32xf32>
    %c0_115 = arith.constant 0 : index
    %c0_116 = arith.constant 0 : index
    %c0_117 = arith.constant 0 : index
    %218 = vector.load %arg17[%c0_115, %c0_116, %c0_117] : memref<2x1x32xf32, #tpu.memory_space<vmem>>, vector<1x1x32xf32>
    %219 = vector.shape_cast %218 : vector<1x1x32xf32> to vector<1x32xf32>
    %cst_118 = arith.constant dense<0.000000e+00> : vector<16xf32>
    %220 = vector.multi_reduction <add>, %215, %cst_118 [1] : vector<16x32xf32> to vector<16xf32>
    %221 = vector.shape_cast %220 : vector<16xf32> to vector<16x1xf32>
    %cst_119 = arith.constant 3.200000e+01 : f32
    %222 = vector.broadcast %cst_119 : f32 to vector<16x1xf32>
    %223 = arith.divf %221, %222 : vector<16x1xf32>
    %224 = vector.broadcast %223 : vector<16x1xf32> to vector<16x32xf32>
    %225 = arith.subf %215, %224 : vector<16x32xf32>
    %226 = arith.mulf %225, %225 : vector<16x32xf32>
    %cst_120 = arith.constant dense<0.000000e+00> : vector<16xf32>
    %227 = vector.multi_reduction <add>, %226, %cst_120 [1] : vector<16x32xf32> to vector<16xf32>
    %228 = vector.shape_cast %227 : vector<16xf32> to vector<16x1xf32>
    %cst_121 = arith.constant 3.200000e+01 : f32
    %229 = vector.broadcast %cst_121 : f32 to vector<16x1xf32>
    %230 = arith.divf %228, %229 : vector<16x1xf32>
    %cst_122 = arith.constant 9.99999974E-6 : f32
    %231 = vector.broadcast %cst_122 : f32 to vector<16x1xf32>
    %232 = arith.addf %230, %231 : vector<16x1xf32>
    %233 = math.rsqrt %232 : vector<16x1xf32>
    %234 = vector.broadcast %233 : vector<16x1xf32> to vector<16x32xf32>
    %235 = arith.mulf %225, %234 : vector<16x32xf32>
    %236 = vector.broadcast %217 : vector<1x32xf32> to vector<16x32xf32>
    %237 = arith.mulf %235, %236 : vector<16x32xf32>
    %238 = vector.broadcast %219 : vector<1x32xf32> to vector<16x32xf32>
    %239 = arith.addf %237, %238 : vector<16x32xf32>
    %c1_123 = arith.constant 1 : index
    %c0_124 = arith.constant 0 : index
    %c0_125 = arith.constant 0 : index
    %240 = vector.load %arg3[%c1_123, %c0_124, %c0_125] : memref<2x32x96xf32, #tpu.memory_space<vmem>>, vector<1x32x96xf32>
    %241 = vector.shape_cast %240 : vector<1x32x96xf32> to vector<32x96xf32>
    %cst_126 = arith.constant dense<0.000000e+00> : vector<16x96xf32>
    %242 = tpu.matmul %239, %241, %cst_126 {dimension_numbers = #tpu.dot_dimension_numbers<[1], [0], [0], [1], [0, 0, 1, 1], [], []>} : vector<16x32xf32>, vector<32x96xf32>, vector<16x96xf32> -> vector<16x96xf32>
    %c1_127 = arith.constant 1 : index
    %c0_128 = arith.constant 0 : index
    %c0_129 = arith.constant 0 : index
    %243 = vector.load %arg4[%c1_127, %c0_128, %c0_129] : memref<2x1x96xf32, #tpu.memory_space<vmem>>, vector<1x1x96xf32>
    %244 = vector.shape_cast %243 : vector<1x1x96xf32> to vector<1x96xf32>
    %245 = vector.broadcast %244 : vector<1x96xf32> to vector<16x96xf32>
    %246 = arith.addf %242, %245 : vector<16x96xf32>
    %247 = vector.extract_strided_slice %246 {offsets = [0, 0], sizes = [16, 32], strides = [1, 1]} : vector<16x96xf32> to vector<16x32xf32>
    %cst_130 = arith.constant 0.353553385 : f32
    %248 = vector.broadcast %cst_130 : f32 to vector<16x32xf32>
    %249 = arith.mulf %247, %248 : vector<16x32xf32>
    %250 = vector.extract_strided_slice %246 {offsets = [0, 32], sizes = [16, 32], strides = [1, 1]} : vector<16x96xf32> to vector<16x32xf32>
    %251 = vector.extract_strided_slice %246 {offsets = [0, 64], sizes = [16, 32], strides = [1, 1]} : vector<16x96xf32> to vector<16x32xf32>
    %252 = vector.extract_strided_slice %249 {offsets = [0, 0], sizes = [16, 8], strides = [1, 1]} : vector<16x32xf32> to vector<16x8xf32>
    %253 = vector.shape_cast %252 : vector<16x8xf32> to vector<2x8x8xf32>
    %254 = vector.extract_strided_slice %249 {offsets = [0, 8], sizes = [16, 8], strides = [1, 1]} : vector<16x32xf32> to vector<16x8xf32>
    %255 = vector.shape_cast %254 : vector<16x8xf32> to vector<2x8x8xf32>
    %256 = vector.extract_strided_slice %249 {offsets = [0, 16], sizes = [16, 8], strides = [1, 1]} : vector<16x32xf32> to vector<16x8xf32>
    %257 = vector.shape_cast %256 : vector<16x8xf32> to vector<2x8x8xf32>
    %258 = vector.extract_strided_slice %249 {offsets = [0, 24], sizes = [16, 8], strides = [1, 1]} : vector<16x32xf32> to vector<16x8xf32>
    %259 = vector.shape_cast %258 : vector<16x8xf32> to vector<2x8x8xf32>
    %260 = tpu.concatenate %253, %255, %257, %259 in 0 : vector<2x8x8xf32>, vector<2x8x8xf32>, vector<2x8x8xf32>, vector<2x8x8xf32> -> vector<8x8x8xf32>
    %261 = vector.extract_strided_slice %250 {offsets = [0, 0], sizes = [16, 8], strides = [1, 1]} : vector<16x32xf32> to vector<16x8xf32>
    %262 = vector.shape_cast %261 : vector<16x8xf32> to vector<2x8x8xf32>
    %263 = vector.extract_strided_slice %250 {offsets = [0, 8], sizes = [16, 8], strides = [1, 1]} : vector<16x32xf32> to vector<16x8xf32>
    %264 = vector.shape_cast %263 : vector<16x8xf32> to vector<2x8x8xf32>
    %265 = vector.extract_strided_slice %250 {offsets = [0, 16], sizes = [16, 8], strides = [1, 1]} : vector<16x32xf32> to vector<16x8xf32>
    %266 = vector.shape_cast %265 : vector<16x8xf32> to vector<2x8x8xf32>
    %267 = vector.extract_strided_slice %250 {offsets = [0, 24], sizes = [16, 8], strides = [1, 1]} : vector<16x32xf32> to vector<16x8xf32>
    %268 = vector.shape_cast %267 : vector<16x8xf32> to vector<2x8x8xf32>
    %269 = tpu.concatenate %262, %264, %266, %268 in 0 : vector<2x8x8xf32>, vector<2x8x8xf32>, vector<2x8x8xf32>, vector<2x8x8xf32> -> vector<8x8x8xf32>
    %270 = vector.extract_strided_slice %251 {offsets = [0, 0], sizes = [16, 8], strides = [1, 1]} : vector<16x32xf32> to vector<16x8xf32>
    %271 = vector.shape_cast %270 : vector<16x8xf32> to vector<2x8x8xf32>
    %272 = vector.extract_strided_slice %251 {offsets = [0, 8], sizes = [16, 8], strides = [1, 1]} : vector<16x32xf32> to vector<16x8xf32>
    %273 = vector.shape_cast %272 : vector<16x8xf32> to vector<2x8x8xf32>
    %274 = vector.extract_strided_slice %251 {offsets = [0, 16], sizes = [16, 8], strides = [1, 1]} : vector<16x32xf32> to vector<16x8xf32>
    %275 = vector.shape_cast %274 : vector<16x8xf32> to vector<2x8x8xf32>
    %276 = vector.extract_strided_slice %251 {offsets = [0, 24], sizes = [16, 8], strides = [1, 1]} : vector<16x32xf32> to vector<16x8xf32>
    %277 = vector.shape_cast %276 : vector<16x8xf32> to vector<2x8x8xf32>
    %278 = tpu.concatenate %271, %273, %275, %277 in 0 : vector<2x8x8xf32>, vector<2x8x8xf32>, vector<2x8x8xf32>, vector<2x8x8xf32> -> vector<8x8x8xf32>
    "tpu.trace_start"() <{level = 10 : i32, message = "nqd,nkd->nqk"}> : () -> ()
    %cst_131 = arith.constant dense<0.000000e+00> : vector<8x8x8xf32>
    %279 = tpu.matmul %260, %269, %cst_131 {dimension_numbers = #tpu.dot_dimension_numbers<[2], [2], [1], [1], [0, 0, 0, 1, 1, 1], [0], [0]>} : vector<8x8x8xf32>, vector<8x8x8xf32>, vector<8x8x8xf32> -> vector<8x8x8xf32>
    "tpu.trace_stop"() : () -> ()
    %280 = arith.addf %279, %77 : vector<8x8x8xf32>
    %cst_132 = arith.constant dense<0xFF800000> : vector<8x8xf32>
    %281 = vector.multi_reduction <maximumf>, %280, %cst_132 [2] : vector<8x8x8xf32> to vector<8x8xf32>
    %282 = vector.shape_cast %281 : vector<8x8xf32> to vector<8x8x1xf32>
    %283 = vector.broadcast %282 : vector<8x8x1xf32> to vector<8x8x8xf32>
    %284 = arith.subf %280, %283 : vector<8x8x8xf32>
    %285 = math.exp %284 : vector<8x8x8xf32>
    %cst_133 = arith.constant dense<0.000000e+00> : vector<8x8xf32>
    %286 = vector.multi_reduction <add>, %285, %cst_133 [2] : vector<8x8x8xf32> to vector<8x8xf32>
    %287 = vector.shape_cast %286 : vector<8x8xf32> to vector<8x8x1xf32>
    %288 = vector.broadcast %287 : vector<8x8x1xf32> to vector<8x8x8xf32>
    %289 = arith.divf %285, %288 : vector<8x8x8xf32>
    "tpu.trace_start"() <{level = 10 : i32, message = "nqk,nkd->nqd"}> : () -> ()
    %cst_134 = arith.constant dense<0.000000e+00> : vector<8x8x8xf32>
    %290 = tpu.matmul %289, %278, %cst_134 {dimension_numbers = #tpu.dot_dimension_numbers<[2], [1], [1], [2], [0, 0, 0, 1, 1, 2], [0], [0]>} : vector<8x8x8xf32>, vector<8x8x8xf32>, vector<8x8x8xf32> -> vector<8x8x8xf32>
    "tpu.trace_stop"() : () -> ()
    %291 = vector.shape_cast %290 : vector<8x8x8xf32> to vector<4x16x8xf32>
    %292 = vector.extract_strided_slice %291 {offsets = [0, 0, 0], sizes = [1, 16, 8], strides = [1, 1, 1]} : vector<4x16x8xf32> to vector<1x16x8xf32>
    %293 = vector.shape_cast %292 : vector<1x16x8xf32> to vector<16x8xf32>
    %294 = vector.extract_strided_slice %291 {offsets = [1, 0, 0], sizes = [1, 16, 8], strides = [1, 1, 1]} : vector<4x16x8xf32> to vector<1x16x8xf32>
    %295 = vector.shape_cast %294 : vector<1x16x8xf32> to vector<16x8xf32>
    %296 = vector.extract_strided_slice %291 {offsets = [2, 0, 0], sizes = [1, 16, 8], strides = [1, 1, 1]} : vector<4x16x8xf32> to vector<1x16x8xf32>
    %297 = vector.shape_cast %296 : vector<1x16x8xf32> to vector<16x8xf32>
    %298 = vector.extract_strided_slice %291 {offsets = [3, 0, 0], sizes = [1, 16, 8], strides = [1, 1, 1]} : vector<4x16x8xf32> to vector<1x16x8xf32>
    %299 = vector.shape_cast %298 : vector<1x16x8xf32> to vector<16x8xf32>
    %300 = tpu.concatenate %293, %295, %297, %299 in 1 : vector<16x8xf32>, vector<16x8xf32>, vector<16x8xf32>, vector<16x8xf32> -> vector<16x32xf32>
    %c1_135 = arith.constant 1 : index
    %c0_136 = arith.constant 0 : index
    %c0_137 = arith.constant 0 : index
    %301 = vector.load %arg5[%c1_135, %c0_136, %c0_137] : memref<2x32x32xf32, #tpu.memory_space<vmem>>, vector<1x32x32xf32>
    %302 = vector.shape_cast %301 : vector<1x32x32xf32> to vector<32x32xf32>
    %cst_138 = arith.constant dense<0.000000e+00> : vector<16x32xf32>
    %303 = tpu.matmul %300, %302, %cst_138 {dimension_numbers = #tpu.dot_dimension_numbers<[1], [0], [0], [1], [0, 0, 1, 1], [], []>} : vector<16x32xf32>, vector<32x32xf32>, vector<16x32xf32> -> vector<16x32xf32>
    %c1_139 = arith.constant 1 : index
    %c0_140 = arith.constant 0 : index
    %c0_141 = arith.constant 0 : index
    %304 = vector.load %arg6[%c1_139, %c0_140, %c0_141] : memref<2x1x32xf32, #tpu.memory_space<vmem>>, vector<1x1x32xf32>
    %305 = vector.shape_cast %304 : vector<1x1x32xf32> to vector<1x32xf32>
    %306 = vector.broadcast %305 : vector<1x32xf32> to vector<16x32xf32>
    %307 = arith.addf %303, %306 : vector<16x32xf32>
    %308 = arith.addf %239, %307 : vector<16x32xf32>
    %c1_142 = arith.constant 1 : index
    %c0_143 = arith.constant 0 : index
    %c0_144 = arith.constant 0 : index
    %309 = vector.load %arg8[%c1_142, %c0_143, %c0_144] : memref<2x1x32xf32, #tpu.memory_space<vmem>>, vector<1x1x32xf32>
    %310 = vector.shape_cast %309 : vector<1x1x32xf32> to vector<1x32xf32>
    %c1_145 = arith.constant 1 : index
    %c0_146 = arith.constant 0 : index
    %c0_147 = arith.constant 0 : index
    %311 = vector.load %arg9[%c1_145, %c0_146, %c0_147] : memref<2x1x32xf32, #tpu.memory_space<vmem>>, vector<1x1x32xf32>
    %312 = vector.shape_cast %311 : vector<1x1x32xf32> to vector<1x32xf32>
    %cst_148 = arith.constant dense<0.000000e+00> : vector<16xf32>
    %313 = vector.multi_reduction <add>, %308, %cst_148 [1] : vector<16x32xf32> to vector<16xf32>
    %314 = vector.shape_cast %313 : vector<16xf32> to vector<16x1xf32>
    %cst_149 = arith.constant 3.200000e+01 : f32
    %315 = vector.broadcast %cst_149 : f32 to vector<16x1xf32>
    %316 = arith.divf %314, %315 : vector<16x1xf32>
    %317 = vector.broadcast %316 : vector<16x1xf32> to vector<16x32xf32>
    %318 = arith.subf %308, %317 : vector<16x32xf32>
    %319 = arith.mulf %318, %318 : vector<16x32xf32>
    %cst_150 = arith.constant dense<0.000000e+00> : vector<16xf32>
    %320 = vector.multi_reduction <add>, %319, %cst_150 [1] : vector<16x32xf32> to vector<16xf32>
    %321 = vector.shape_cast %320 : vector<16xf32> to vector<16x1xf32>
    %cst_151 = arith.constant 3.200000e+01 : f32
    %322 = vector.broadcast %cst_151 : f32 to vector<16x1xf32>
    %323 = arith.divf %321, %322 : vector<16x1xf32>
    %cst_152 = arith.constant 9.99999974E-6 : f32
    %324 = vector.broadcast %cst_152 : f32 to vector<16x1xf32>
    %325 = arith.addf %323, %324 : vector<16x1xf32>
    %326 = math.rsqrt %325 : vector<16x1xf32>
    %327 = vector.broadcast %326 : vector<16x1xf32> to vector<16x32xf32>
    %328 = arith.mulf %318, %327 : vector<16x32xf32>
    %329 = vector.broadcast %310 : vector<1x32xf32> to vector<16x32xf32>
    %330 = arith.mulf %328, %329 : vector<16x32xf32>
    %331 = vector.broadcast %312 : vector<1x32xf32> to vector<16x32xf32>
    %332 = arith.addf %330, %331 : vector<16x32xf32>
    %c1_153 = arith.constant 1 : index
    %c0_154 = arith.constant 0 : index
    %c0_155 = arith.constant 0 : index
    %333 = vector.load %arg7[%c1_153, %c0_154, %c0_155] : memref<2x1x32xf32, #tpu.memory_space<vmem>>, vector<1x1x32xf32>
    %334 = vector.shape_cast %333 : vector<1x1x32xf32> to vector<1x32xf32>
    %335 = vector.broadcast %334 : vector<1x32xf32> to vector<16x32xf32>
    %336 = arith.addf %332, %335 : vector<16x32xf32>
    %c1_156 = arith.constant 1 : index
    %c0_157 = arith.constant 0 : index
    %c0_158 = arith.constant 0 : index
    %337 = vector.load %arg10[%c1_156, %c0_157, %c0_158] : memref<2x1x32xf32, #tpu.memory_space<vmem>>, vector<1x1x32xf32>
    %338 = vector.shape_cast %337 : vector<1x1x32xf32> to vector<1x32xf32>
    %c1_159 = arith.constant 1 : index
    %c0_160 = arith.constant 0 : index
    %c0_161 = arith.constant 0 : index
    %339 = vector.load %arg11[%c1_159, %c0_160, %c0_161] : memref<2x1x32xf32, #tpu.memory_space<vmem>>, vector<1x1x32xf32>
    %340 = vector.shape_cast %339 : vector<1x1x32xf32> to vector<1x32xf32>
    %cst_162 = arith.constant dense<0.000000e+00> : vector<16xf32>
    %341 = vector.multi_reduction <add>, %336, %cst_162 [1] : vector<16x32xf32> to vector<16xf32>
    %342 = vector.shape_cast %341 : vector<16xf32> to vector<16x1xf32>
    %cst_163 = arith.constant 3.200000e+01 : f32
    %343 = vector.broadcast %cst_163 : f32 to vector<16x1xf32>
    %344 = arith.divf %342, %343 : vector<16x1xf32>
    %345 = vector.broadcast %344 : vector<16x1xf32> to vector<16x32xf32>
    %346 = arith.subf %336, %345 : vector<16x32xf32>
    %347 = arith.mulf %346, %346 : vector<16x32xf32>
    %cst_164 = arith.constant dense<0.000000e+00> : vector<16xf32>
    %348 = vector.multi_reduction <add>, %347, %cst_164 [1] : vector<16x32xf32> to vector<16xf32>
    %349 = vector.shape_cast %348 : vector<16xf32> to vector<16x1xf32>
    %cst_165 = arith.constant 3.200000e+01 : f32
    %350 = vector.broadcast %cst_165 : f32 to vector<16x1xf32>
    %351 = arith.divf %349, %350 : vector<16x1xf32>
    %cst_166 = arith.constant 9.99999974E-6 : f32
    %352 = vector.broadcast %cst_166 : f32 to vector<16x1xf32>
    %353 = arith.addf %351, %352 : vector<16x1xf32>
    %354 = math.rsqrt %353 : vector<16x1xf32>
    %355 = vector.broadcast %354 : vector<16x1xf32> to vector<16x32xf32>
    %356 = arith.mulf %346, %355 : vector<16x32xf32>
    %357 = vector.broadcast %338 : vector<1x32xf32> to vector<16x32xf32>
    %358 = arith.mulf %356, %357 : vector<16x32xf32>
    %359 = vector.broadcast %340 : vector<1x32xf32> to vector<16x32xf32>
    %360 = arith.addf %358, %359 : vector<16x32xf32>
    %c1_167 = arith.constant 1 : index
    %c0_168 = arith.constant 0 : index
    %c0_169 = arith.constant 0 : index
    %361 = vector.load %arg12[%c1_167, %c0_168, %c0_169] : memref<2x32x64xf32, #tpu.memory_space<vmem>>, vector<1x32x64xf32>
    %362 = vector.shape_cast %361 : vector<1x32x64xf32> to vector<32x64xf32>
    %cst_170 = arith.constant dense<0.000000e+00> : vector<16x64xf32>
    %363 = tpu.matmul %360, %362, %cst_170 {dimension_numbers = #tpu.dot_dimension_numbers<[1], [0], [0], [1], [0, 0, 1, 1], [], []>} : vector<16x32xf32>, vector<32x64xf32>, vector<16x64xf32> -> vector<16x64xf32>
    %c1_171 = arith.constant 1 : index
    %c0_172 = arith.constant 0 : index
    %c0_173 = arith.constant 0 : index
    %364 = vector.load %arg13[%c1_171, %c0_172, %c0_173] : memref<2x1x64xf32, #tpu.memory_space<vmem>>, vector<1x1x64xf32>
    %365 = vector.shape_cast %364 : vector<1x1x64xf32> to vector<1x64xf32>
    %366 = vector.broadcast %365 : vector<1x64xf32> to vector<16x64xf32>
    %367 = arith.addf %363, %366 : vector<16x64xf32>
    %cst_174 = arith.constant 0.000000e+00 : f32
    %368 = vector.broadcast %cst_174 : f32 to vector<16x64xf32>
    %369 = arith.maximumf %367, %368 : vector<16x64xf32>
    %c1_175 = arith.constant 1 : index
    %c0_176 = arith.constant 0 : index
    %c0_177 = arith.constant 0 : index
    %370 = vector.load %arg14[%c1_175, %c0_176, %c0_177] : memref<2x64x32xf32, #tpu.memory_space<vmem>>, vector<1x64x32xf32>
    %371 = vector.shape_cast %370 : vector<1x64x32xf32> to vector<64x32xf32>
    %cst_178 = arith.constant dense<0.000000e+00> : vector<16x32xf32>
    %372 = tpu.matmul %369, %371, %cst_178 {dimension_numbers = #tpu.dot_dimension_numbers<[1], [0], [0], [1], [0, 0, 1, 1], [], []>} : vector<16x64xf32>, vector<64x32xf32>, vector<16x32xf32> -> vector<16x32xf32>
    %c1_179 = arith.constant 1 : index
    %c0_180 = arith.constant 0 : index
    %c0_181 = arith.constant 0 : index
    %373 = vector.load %arg15[%c1_179, %c0_180, %c0_181] : memref<2x1x32xf32, #tpu.memory_space<vmem>>, vector<1x1x32xf32>
    %374 = vector.shape_cast %373 : vector<1x1x32xf32> to vector<1x32xf32>
    %375 = vector.broadcast %374 : vector<1x32xf32> to vector<16x32xf32>
    %376 = arith.addf %372, %375 : vector<16x32xf32>
    %377 = arith.addf %360, %376 : vector<16x32xf32>
    %c1_182 = arith.constant 1 : index
    %c0_183 = arith.constant 0 : index
    %c0_184 = arith.constant 0 : index
    %378 = vector.load %arg16[%c1_182, %c0_183, %c0_184] : memref<2x1x32xf32, #tpu.memory_space<vmem>>, vector<1x1x32xf32>
    %379 = vector.shape_cast %378 : vector<1x1x32xf32> to vector<1x32xf32>
    %c1_185 = arith.constant 1 : index
    %c0_186 = arith.constant 0 : index
    %c0_187 = arith.constant 0 : index
    %380 = vector.load %arg17[%c1_185, %c0_186, %c0_187] : memref<2x1x32xf32, #tpu.memory_space<vmem>>, vector<1x1x32xf32>
    %381 = vector.shape_cast %380 : vector<1x1x32xf32> to vector<1x32xf32>
    %cst_188 = arith.constant dense<0.000000e+00> : vector<16xf32>
    %382 = vector.multi_reduction <add>, %377, %cst_188 [1] : vector<16x32xf32> to vector<16xf32>
    %383 = vector.shape_cast %382 : vector<16xf32> to vector<16x1xf32>
    %cst_189 = arith.constant 3.200000e+01 : f32
    %384 = vector.broadcast %cst_189 : f32 to vector<16x1xf32>
    %385 = arith.divf %383, %384 : vector<16x1xf32>
    %386 = vector.broadcast %385 : vector<16x1xf32> to vector<16x32xf32>
    %387 = arith.subf %377, %386 : vector<16x32xf32>
    %388 = arith.mulf %387, %387 : vector<16x32xf32>
    %cst_190 = arith.constant dense<0.000000e+00> : vector<16xf32>
    %389 = vector.multi_reduction <add>, %388, %cst_190 [1] : vector<16x32xf32> to vector<16xf32>
    %390 = vector.shape_cast %389 : vector<16xf32> to vector<16x1xf32>
    %cst_191 = arith.constant 3.200000e+01 : f32
    %391 = vector.broadcast %cst_191 : f32 to vector<16x1xf32>
    %392 = arith.divf %390, %391 : vector<16x1xf32>
    %cst_192 = arith.constant 9.99999974E-6 : f32
    %393 = vector.broadcast %cst_192 : f32 to vector<16x1xf32>
    %394 = arith.addf %392, %393 : vector<16x1xf32>
    %395 = math.rsqrt %394 : vector<16x1xf32>
    %396 = vector.broadcast %395 : vector<16x1xf32> to vector<16x32xf32>
    %397 = arith.mulf %387, %396 : vector<16x32xf32>
    %398 = vector.broadcast %379 : vector<1x32xf32> to vector<16x32xf32>
    %399 = arith.mulf %397, %398 : vector<16x32xf32>
    %400 = vector.broadcast %381 : vector<1x32xf32> to vector<16x32xf32>
    %401 = arith.addf %399, %400 : vector<16x32xf32>
    %c0_193 = arith.constant 0 : index
    %c0_194 = arith.constant 0 : index
    %402 = vector.load %arg18[%c0_193, %c0_194] : memref<1x32xf32, #tpu.memory_space<vmem>>, vector<1x32xf32>
    %c0_195 = arith.constant 0 : index
    %c0_196 = arith.constant 0 : index
    %403 = vector.load %arg19[%c0_195, %c0_196] : memref<1x32xf32, #tpu.memory_space<vmem>>, vector<1x32xf32>
    %cst_197 = arith.constant dense<0.000000e+00> : vector<16xf32>
    %404 = vector.multi_reduction <add>, %401, %cst_197 [1] : vector<16x32xf32> to vector<16xf32>
    %405 = vector.shape_cast %404 : vector<16xf32> to vector<16x1xf32>
    %cst_198 = arith.constant 3.200000e+01 : f32
    %406 = vector.broadcast %cst_198 : f32 to vector<16x1xf32>
    %407 = arith.divf %405, %406 : vector<16x1xf32>
    %408 = vector.broadcast %407 : vector<16x1xf32> to vector<16x32xf32>
    %409 = arith.subf %401, %408 : vector<16x32xf32>
    %410 = arith.mulf %409, %409 : vector<16x32xf32>
    %cst_199 = arith.constant dense<0.000000e+00> : vector<16xf32>
    %411 = vector.multi_reduction <add>, %410, %cst_199 [1] : vector<16x32xf32> to vector<16xf32>
    %412 = vector.shape_cast %411 : vector<16xf32> to vector<16x1xf32>
    %cst_200 = arith.constant 3.200000e+01 : f32
    %413 = vector.broadcast %cst_200 : f32 to vector<16x1xf32>
    %414 = arith.divf %412, %413 : vector<16x1xf32>
    %cst_201 = arith.constant 9.99999974E-6 : f32
    %415 = vector.broadcast %cst_201 : f32 to vector<16x1xf32>
    %416 = arith.addf %414, %415 : vector<16x1xf32>
    %417 = math.rsqrt %416 : vector<16x1xf32>
    %418 = vector.broadcast %417 : vector<16x1xf32> to vector<16x32xf32>
    %419 = arith.mulf %409, %418 : vector<16x32xf32>
    %420 = vector.broadcast %402 : vector<1x32xf32> to vector<16x32xf32>
    %421 = arith.mulf %419, %420 : vector<16x32xf32>
    %422 = vector.broadcast %403 : vector<1x32xf32> to vector<16x32xf32>
    %423 = arith.addf %421, %422 : vector<16x32xf32>
    %c0_202 = arith.constant 0 : index
    %c0_203 = arith.constant 0 : index
    %424 = vector.load %arg20[%c0_202, %c0_203] : memref<32x128xf32, #tpu.memory_space<vmem>>, vector<32x128xf32>
    %cst_204 = arith.constant dense<0.000000e+00> : vector<16x128xf32>
    %425 = tpu.matmul %423, %424, %cst_204 {dimension_numbers = #tpu.dot_dimension_numbers<[1], [0], [0], [1], [0, 0, 1, 1], [], []>} : vector<16x32xf32>, vector<32x128xf32>, vector<16x128xf32> -> vector<16x128xf32>
    %c0_205 = arith.constant 0 : index
    %c0_206 = arith.constant 0 : index
    %426 = vector.load %arg21[%c0_205, %c0_206] : memref<1x128xf32, #tpu.memory_space<vmem>>, vector<1x128xf32>
    %427 = vector.broadcast %426 : vector<1x128xf32> to vector<16x128xf32>
    %428 = arith.addf %425, %427 : vector<16x128xf32>
    %c0_207 = arith.constant 0 : index
    %c0_208 = arith.constant 0 : index
    %429 = vector.load %arg22[%c0_207, %c0_208] : memref<16x128xf32, #tpu.memory_space<vmem>>, vector<16x128xf32>
    tpu.vector_store %arg22[%c0_207, %c0_208], %428 {strides = array<i32>} : memref<16x128xf32, #tpu.memory_space<vmem>>, vector<16x128xf32>,
    return
  }
}

</mosaic_0001>

<llo_original>
// kernel: tpu_custom_call.1
$region0: #{tpu_custom_call.1}
  #allocation0 [shape = 'u32[]', space=smem, size = 0x4, offset = 0x4, fixed_abs, tag = 'smem constant byte address 0x4 - core index']
  #allocation1 [shape = 'u32[72,128]{1,0:T(1,128)}', space=vmem, size = 0x9000, scoped, tag = 'internal scratch']
  #allocation2 [shape = 'f32[16,32]{1,0:T(8,128)}', space=vmem, size = 0x2000, scoped, tag = 'scratch operand']
  %s0 = inlined_call_operand.vmem [shape: s32[16], index: 0, kind: input, shape index: {}]
  %s1 = inlined_call_operand.vmem [shape: f32[2,8], index: 1, kind: input, shape index: {}]
  %s2 = inlined_call_operand.vmem [shape: f32[48,32], index: 2, kind: input, shape index: {}]
  %s3 = inlined_call_operand.vmem [shape: f32[2,32,96], index: 3, kind: input, shape index: {}]
  %s4 = inlined_call_operand.hbm [shape: f32[2,1,96], index: 4, kind: input, shape index: {}]
  %s5 = inlined_call_operand.vmem [shape: f32[2,32,32], index: 5, kind: input, shape index: {}]
  %s6 = inlined_call_operand.hbm [shape: f32[2,1,32], index: 6, kind: input, shape index: {}]
  %s7 = inlined_call_operand.hbm [shape: f32[2,1,32], index: 7, kind: input, shape index: {}]
  %s8 = inlined_call_operand.hbm [shape: f32[2,1,32], index: 8, kind: input, shape index: {}]
  %s9 = inlined_call_operand.hbm [shape: f32[2,1,32], index: 9, kind: input, shape index: {}]
  %s10 = inlined_call_operand.hbm [shape: f32[2,1,32], index: 10, kind: input, shape index: {}]
  %s11 = inlined_call_operand.hbm [shape: f32[2,1,32], index: 11, kind: input, shape index: {}]
  %s12 = inlined_call_operand.vmem [shape: f32[2,32,64], index: 12, kind: input, shape index: {}]
  %s13 = inlined_call_operand.hbm [shape: f32[2,1,64], index: 13, kind: input, shape index: {}]
  %s14 = inlined_call_operand.vmem [shape: f32[2,64,32], index: 14, kind: input, shape index: {}]
  %s15 = inlined_call_operand.hbm [shape: f32[2,1,32], index: 15, kind: input, shape index: {}]
  %s16 = inlined_call_operand.hbm [shape: f32[2,1,32], index: 16, kind: input, shape index: {}]
  %s17 = inlined_call_operand.hbm [shape: f32[2,1,32], index: 17, kind: input, shape index: {}]
  %s18 = inlined_call_operand.hbm [shape: f32[1,32], index: 18, kind: input, shape index: {}]
  %s19 = inlined_call_operand.hbm [shape: f32[1,32], index: 19, kind: input, shape index: {}]
  %s20 = inlined_call_operand.vmem [shape: f32[32,128], index: 20, kind: input, shape index: {}]
  %s21 = inlined_call_operand.hbm [shape: f32[1,128], index: 21, kind: input, shape index: {}]
  %s22 = inlined_call_operand.hbm [shape: f32[16,128], index: 22, kind: output, shape index: {}]
  %s23 = sld [smem:[#allocation0]]
  $region158: #{tpu_custom_call.1} parent=0
    _
  %s25 = ssub.s32 1, %s23
  %s26 = scalar_select 0, %s25, %s23
  $region1: #{tpu_custom_call.1} parent=0
    #allocation3 [shape = 'u8[512]{0}', space=smem, size = 0x200, scoped, tag = 'input window, operand 0, single buffered']
    #allocation4 [shape = 's32[1]{0}', space=sflag, size = 0x4, scoped, tag = 'scoped memory for tpu_custom_call.1']
    #allocation5 [shape = 's32[1]{0}', space=sflag, size = 0x4, scoped, tag = 'scoped memory for tpu_custom_call.1']
    #allocation6 [shape = 's32[1]{0}', space=sflag, size = 0x4, scoped, tag = 'scoped memory for tpu_custom_call.1']
    #allocation7 [shape = 'u8[1024]{0}', space=vmem, size = 0x400, scoped, tag = 'input window, operand 4, single buffered']
    #allocation8 [shape = 'u8[1024]{0}', space=vmem, size = 0x400, scoped, tag = 'input window, operand 6, single buffered']
    #allocation9 [shape = 's32[1]{0}', space=sflag, size = 0x4, scoped, tag = 'scoped memory for tpu_custom_call.1']
    #allocation10 [shape = 'u8[1024]{0}', space=vmem, size = 0x400, scoped, tag = 'input window, operand 7, single buffered']
    #allocation11 [shape = 'u8[1024]{0}', space=vmem, size = 0x400, scoped, tag = 'input window, operand 8, single buffered']
    #allocation12 [shape = 's32[1]{0}', space=sflag, size = 0x4, scoped, tag = 'scoped memory for tpu_custom_call.1']
    #allocation13 [shape = 'u8[1024]{0}', space=vmem, size = 0x400, scoped, tag = 'input window, operand 9, single buffered']
    #allocation14 [shape = 'u8[1024]{0}', space=vmem, size = 0x400, scoped, tag = 'input window, operand 10, single buffered']
    #allocation15 [shape = 's32[1]{0}', space=sflag, size = 0x4, scoped, tag = 'scoped memory for tpu_custom_call.1']
    #allocation16 [shape = 'u8[1024]{0}', space=vmem, size = 0x400, scoped, tag = 'input window, operand 11, single buffered']
    #allocation17 [shape = 'u8[1024]{0}', space=vmem, size = 0x400, scoped, tag = 'input window, operand 13, single buffered']
    #allocation18 [shape = 's32[1]{0}', space=sflag, size = 0x4, scoped, tag = 'scoped memory for tpu_custom_call.1']
    #allocation19 [shape = 'u8[1024]{0}', space=vmem, size = 0x400, scoped, tag = 'input window, operand 15, single buffered']
    #allocation20 [shape = 'u8[1024]{0}', space=vmem, size = 0x400, scoped, tag = 'input window, operand 16, single buffered']
    #allocation21 [shape = 's32[1]{0}', space=sflag, size = 0x4, scoped, tag = 'scoped memory for tpu_custom_call.1']
    #allocation22 [shape = 'u8[1024]{0}', space=vmem, size = 0x400, scoped, tag = 'input window, operand 17, single buffered']
    #allocation23 [shape = 'u8[512]{0}', space=vmem, size = 0x400, scoped, tag = 'input window, operand 18, single buffered']
    #allocation24 [shape = 's32[1]{0}', space=sflag, size = 0x4, scoped, tag = 'scoped memory for tpu_custom_call.1']
    #allocation25 [shape = 'u8[512]{0}', space=vmem, size = 0x400, scoped, tag = 'input window, operand 19, single buffered']
    #allocation26 [shape = 'u8[512]{0}', space=vmem, size = 0x400, scoped, tag = 'input window, operand 21, single buffered']
    #allocation27 [shape = 's32[1]{0}', space=sflag, size = 0x4, scoped, tag = 'scoped memory for tpu_custom_call.1']
    #allocation28 [shape = 'u8[8192]{0}', space=vmem, size = 0x2000, scoped, tag = 'output window, operand 0, single buffered']
    %27 = vsyncpa [#allocation6], 0
    %28 = vsyncpa [#allocation4], 0
    %29 = vsyncpa [#allocation9], 0
    %30 = vsyncpa [#allocation12], 0
    %31 = vsyncpa [#allocation15], 0
    %32 = vsyncpa [#allocation18], 0
    %33 = vsyncpa [#allocation21], 0
    %34 = vsyncpa [#allocation24], 0
    %35 = vsyncpa [#allocation27], 0
    %36 = vsyncpa [#allocation5], 0
    // Predicated region
    $region2: #{tpu_custom_call.1} parent=1 // pred_check
      _
    $region3: #{tpu_custom_call.1} parent=1 // pred_check_branch
      %38 = sbr.rel (0) target = $region5
    $region4: #{tpu_custom_call.1} parent=1 // pred_region
      %40 = vsyncadd [#allocation6], 0
      %s42 = sshll.u32 %s0, 4
      %s43 = int_to_ptr.vmem [resolvable:$true] %s42
      %45 = dma.vmem_to_smem %s43, 16, [#allocation3], [#allocation6]
    $region5: #{tpu_custom_call.1} parent=1 // pred_fallthru
      _
    // Predicated region
    $region6: #{tpu_custom_call.1} parent=1 // pred_check
      _
    $region7: #{tpu_custom_call.1} parent=1 // pred_check_branch
      %47 = sbr.rel (0) target = $region9
    $region8: #{tpu_custom_call.1} parent=1 // pred_region
      _
    $region9: #{tpu_custom_call.1} parent=1 // pred_fallthru
      _
    // Predicated region
    $region10: #{tpu_custom_call.1} parent=1 // pred_check
      _
    $region11: #{tpu_custom_call.1} parent=1 // pred_check_branch
      %49 = sbr.rel (0) target = $region13
    $region12: #{tpu_custom_call.1} parent=1 // pred_region
      _
    $region13: #{tpu_custom_call.1} parent=1 // pred_fallthru
      _
    // Predicated region
    $region14: #{tpu_custom_call.1} parent=1 // pred_check
      _
    $region15: #{tpu_custom_call.1} parent=1 // pred_check_branch
      %51 = sbr.rel (0) target = $region17
    $region16: #{tpu_custom_call.1} parent=1 // pred_region
      _
    $region17: #{tpu_custom_call.1} parent=1 // pred_fallthru
      _
    // Predicated region
    $region18: #{tpu_custom_call.1} parent=1 // pred_check
      _
    $region19: #{tpu_custom_call.1} parent=1 // pred_check_branch
      %53 = sbr.rel (0) target = $region21
    $region20: #{tpu_custom_call.1} parent=1 // pred_region
      %55 = vsyncadd [#allocation4], 0
      %s56 = sshll.u32 %s4, 4
      %s57 = int_to_ptr.hbm [resolvable:$true] %s56
      %s58 = sshll.u32 [#allocation7], 4
      %s59 = int_to_ptr.vmem [resolvable:$true] %s58
      %64 = dma.hbm_to_vmem [thread:$0]  %s57, 32, %s59, [#allocation4], 16, 16, 1
    $region21: #{tpu_custom_call.1} parent=1 // pred_fallthru
      _
    // Predicated region
    $region22: #{tpu_custom_call.1} parent=1 // pred_check
      _
    $region23: #{tpu_custom_call.1} parent=1 // pred_check_branch
      %66 = sbr.rel (0) target = $region25
    $region24: #{tpu_custom_call.1} parent=1 // pred_region
      _
    $region25: #{tpu_custom_call.1} parent=1 // pred_fallthru
      _
    // Predicated region
    $region26: #{tpu_custom_call.1} parent=1 // pred_check
      _
    $region27: #{tpu_custom_call.1} parent=1 // pred_check_branch
      %68 = sbr.rel (0) target = $region29
    $region28: #{tpu_custom_call.1} parent=1 // pred_region
      %70 = vsyncadd [#allocation9], 0
      %s71 = sshll.u32 %s6, 4
      %s72 = int_to_ptr.hbm [resolvable:$true] %s71
      %s73 = sshll.u32 [#allocation8], 4
      %s74 = int_to_ptr.vmem [resolvable:$true] %s73
      %79 = dma.hbm_to_vmem [thread:$0]  %s72, 32, %s74, [#allocation9], 16, 16, 1
    $region29: #{tpu_custom_call.1} parent=1 // pred_fallthru
      _
    // Predicated region
    $region30: #{tpu_custom_call.1} parent=1 // pred_check
      _
    $region31: #{tpu_custom_call.1} parent=1 // pred_check_branch
      %81 = sbr.rel (0) target = $region33
    $region32: #{tpu_custom_call.1} parent=1 // pred_region
      %83 = vsyncadd [#allocation9], 0
      %s84 = sshll.u32 %s7, 4
      %s85 = int_to_ptr.hbm [resolvable:$true] %s84
      %s86 = sshll.u32 [#allocation10], 4
      %s87 = int_to_ptr.vmem [resolvable:$true] %s86
      %92 = dma.hbm_to_vmem [thread:$0]  %s85, 32, %s87, [#allocation9], 16, 16, 1
    $region33: #{tpu_custom_call.1} parent=1 // pred_fallthru
      _
    // Predicated region
    $region34: #{tpu_custom_call.1} parent=1 // pred_check
      _
    $region35: #{tpu_custom_call.1} parent=1 // pred_check_branch
      %94 = sbr.rel (0) target = $region37
    $region36: #{tpu_custom_call.1} parent=1 // pred_region
      %96 = vsyncadd [#allocation12], 0
      %s97 = sshll.u32 %s8, 4
      %s98 = int_to_ptr.hbm [resolvable:$true] %s97
      %s99 = sshll.u32 [#allocation11], 4
      %s100 = int_to_ptr.vmem [resolvable:$true] %s99
      %105 = dma.hbm_to_vmem [thread:$0]  %s98, 32, %s100, [#allocation12], 16, 16, 1
    $region37: #{tpu_custom_call.1} parent=1 // pred_fallthru
      _
    // Predicated region
    $region38: #{tpu_custom_call.1} parent=1 // pred_check
      _
    $region39: #{tpu_custom_call.1} parent=1 // pred_check_branch
      %107 = sbr.rel (0) target = $region41
    $region40: #{tpu_custom_call.1} parent=1 // pred_region
      %109 = vsyncadd [#allocation12], 0
      %s110 = sshll.u32 %s9, 4
      %s111 = int_to_ptr.hbm [resolvable:$true] %s110
      %s112 = sshll.u32 [#allocation13], 4
      %s113 = int_to_ptr.vmem [resolvable:$true] %s112
      %118 = dma.hbm_to_vmem [thread:$0]  %s111, 32, %s113, [#allocation12], 16, 16, 1
    $region41: #{tpu_custom_call.1} parent=1 // pred_fallthru
      _
    // Predicated region
    $region42: #{tpu_custom_call.1} parent=1 // pred_check
      _
    $region43: #{tpu_custom_call.1} parent=1 // pred_check_branch
      %120 = sbr.rel (0) target = $region45
    $region44: #{tpu_custom_call.1} parent=1 // pred_region
      %122 = vsyncadd [#allocation15], 0
      %s123 = sshll.u32 %s10, 4
      %s124 = int_to_ptr.hbm [resolvable:$true] %s123
      %s125 = sshll.u32 [#allocation14], 4
      %s126 = int_to_ptr.vmem [resolvable:$true] %s125
      %131 = dma.hbm_to_vmem [thread:$0]  %s124, 32, %s126, [#allocation15], 16, 16, 1
    $region45: #{tpu_custom_call.1} parent=1 // pred_fallthru
      _
    // Predicated region
    $region46: #{tpu_custom_call.1} parent=1 // pred_check
      _
    $region47: #{tpu_custom_call.1} parent=1 // pred_check_branch
      %133 = sbr.rel (0) target = $region49
    $region48: #{tpu_custom_call.1} parent=1 // pred_region
      %135 = vsyncadd [#allocation15], 0
      %s136 = sshll.u32 %s11, 4
      %s137 = int_to_ptr.hbm [resolvable:$true] %s136
      %s138 = sshll.u32 [#allocation16], 4
      %s139 = int_to_ptr.vmem [resolvable:$true] %s138
      %144 = dma.hbm_to_vmem [thread:$0]  %s137, 32, %s139, [#allocation15], 16, 16, 1
    $region49: #{tpu_custom_call.1} parent=1 // pred_fallthru
      _
    // Predicated region
    $region50: #{tpu_custom_call.1} parent=1 // pred_check
      _
    $region51: #{tpu_custom_call.1} parent=1 // pred_check_branch
      %146 = sbr.rel (0) target = $region53
    $region52: #{tpu_custom_call.1} parent=1 // pred_region
      _
    $region53: #{tpu_custom_call.1} parent=1 // pred_fallthru
      _
    // Predicated region
    $region54: #{tpu_custom_call.1} parent=1 // pred_check
      _
    $region55: #{tpu_custom_call.1} parent=1 // pred_check_branch
      %148 = sbr.rel (0) target = $region57
    $region56: #{tpu_custom_call.1} parent=1 // pred_region
      %150 = vsyncadd [#allocation18], 0
      %s151 = sshll.u32 %s13, 4
      %s152 = int_to_ptr.hbm [resolvable:$true] %s151
      %s153 = sshll.u32 [#allocation17], 4
      %s154 = int_to_ptr.vmem [resolvable:$true] %s153
      %159 = dma.hbm_to_vmem [thread:$0]  %s152, 32, %s154, [#allocation18], 16, 16, 1
    $region57: #{tpu_custom_call.1} parent=1 // pred_fallthru
      _
    // Predicated region
    $region58: #{tpu_custom_call.1} parent=1 // pred_check
      _
    $region59: #{tpu_custom_call.1} parent=1 // pred_check_branch
      %161 = sbr.rel (0) target = $region61
    $region60: #{tpu_custom_call.1} parent=1 // pred_region
      _
    $region61: #{tpu_custom_call.1} parent=1 // pred_fallthru
      _
    // Predicated region
    $region62: #{tpu_custom_call.1} parent=1 // pred_check
      _
    $region63: #{tpu_custom_call.1} parent=1 // pred_check_branch
      %163 = sbr.rel (0) target = $region65
    $region64: #{tpu_custom_call.1} parent=1 // pred_region
      %165 = vsyncadd [#allocation18], 0
      %s166 = sshll.u32 %s15, 4
      %s167 = int_to_ptr.hbm [resolvable:$true] %s166
      %s168 = sshll.u32 [#allocation19], 4
      %s169 = int_to_ptr.vmem [resolvable:$true] %s168
      %174 = dma.hbm_to_vmem [thread:$0]  %s167, 32, %s169, [#allocation18], 16, 16, 1
    $region65: #{tpu_custom_call.1} parent=1 // pred_fallthru
      _
    // Predicated region
    $region66: #{tpu_custom_call.1} parent=1 // pred_check
      _
    $region67: #{tpu_custom_call.1} parent=1 // pred_check_branch
      %176 = sbr.rel (0) target = $region69
    $region68: #{tpu_custom_call.1} parent=1 // pred_region
      %178 = vsyncadd [#allocation21], 0
      %s179 = sshll.u32 %s16, 4
      %s180 = int_to_ptr.hbm [resolvable:$true] %s179
      %s181 = sshll.u32 [#allocation20], 4
      %s182 = int_to_ptr.vmem [resolvable:$true] %s181
      %187 = dma.hbm_to_vmem [thread:$0]  %s180, 32, %s182, [#allocation21], 16, 16, 1
    $region69: #{tpu_custom_call.1} parent=1 // pred_fallthru
      _
    // Predicated region
    $region70: #{tpu_custom_call.1} parent=1 // pred_check
      _
    $region71: #{tpu_custom_call.1} parent=1 // pred_check_branch
      %189 = sbr.rel (0) target = $region73
    $region72: #{tpu_custom_call.1} parent=1 // pred_region
      %191 = vsyncadd [#allocation21], 0
      %s192 = sshll.u32 %s17, 4
      %s193 = int_to_ptr.hbm [resolvable:$true] %s192
      %s194 = sshll.u32 [#allocation22], 4
      %s195 = int_to_ptr.vmem [resolvable:$true] %s194
      %200 = dma.hbm_to_vmem [thread:$0]  %s193, 32, %s195, [#allocation21], 16, 16, 1
    $region73: #{tpu_custom_call.1} parent=1 // pred_fallthru
      _
    // Predicated region
    $region74: #{tpu_custom_call.1} parent=1 // pred_check
      _
    $region75: #{tpu_custom_call.1} parent=1 // pred_check_branch
      %202 = sbr.rel (0) target = $region77
    $region76: #{tpu_custom_call.1} parent=1 // pred_region
      %204 = vsyncadd [#allocation24], 0
      %s206 = sshll.u32 %s18, 4
      %s207 = int_to_ptr.hbm [resolvable:$true] %s206
      %s208 = sshll.u32 [#allocation23], 4
      %s209 = int_to_ptr.vmem [resolvable:$true] %s208
      %211 = dma.hbm_to_vmem [thread:$0]  %s207, 16, %s209, [#allocation24]
    $region77: #{tpu_custom_call.1} parent=1 // pred_fallthru
      _
    // Predicated region
    $region78: #{tpu_custom_call.1} parent=1 // pred_check
      _
    $region79: #{tpu_custom_call.1} parent=1 // pred_check_branch
      %213 = sbr.rel (0) target = $region81
    $region80: #{tpu_custom_call.1} parent=1 // pred_region
      %215 = vsyncadd [#allocation24], 0
      %s217 = sshll.u32 %s19, 4
      %s218 = int_to_ptr.hbm [resolvable:$true] %s217
      %s219 = sshll.u32 [#allocation25], 4
      %s220 = int_to_ptr.vmem [resolvable:$true] %s219
      %222 = dma.hbm_to_vmem [thread:$0]  %s218, 16, %s220, [#allocation24]
    $region81: #{tpu_custom_call.1} parent=1 // pred_fallthru
      _
    // Predicated region
    $region82: #{tpu_custom_call.1} parent=1 // pred_check
      _
    $region83: #{tpu_custom_call.1} parent=1 // pred_check_branch
      %224 = sbr.rel (0) target = $region85
    $region84: #{tpu_custom_call.1} parent=1 // pred_region
      _
    $region85: #{tpu_custom_call.1} parent=1 // pred_fallthru
      _
    // Predicated region
    $region86: #{tpu_custom_call.1} parent=1 // pred_check
      _
    $region87: #{tpu_custom_call.1} parent=1 // pred_check_branch
      %226 = sbr.rel (0) target = $region89
    $region88: #{tpu_custom_call.1} parent=1 // pred_region
      %228 = vsyncadd [#allocation27], 0
      %s230 = sshll.u32 %s21, 4
      %s231 = int_to_ptr.hbm [resolvable:$true] %s230
      %s232 = sshll.u32 [#allocation26], 4
      %s233 = int_to_ptr.vmem [resolvable:$true] %s232
      %235 = dma.hbm_to_vmem [thread:$0]  %s231, 16, %s233, [#allocation27]
    $region89: #{tpu_custom_call.1} parent=1 // pred_fallthru
      _
    // Predicated region
    $region90: #{tpu_custom_call.1} parent=1 // pred_check
      _
    $region91: #{tpu_custom_call.1} parent=1 // pred_check_branch
      %237 = sbr.rel (0) target = $region93
    $region92: #{tpu_custom_call.1} parent=1 // pred_region
      %239 = dma.done [#allocation6], 16
    $region93: #{tpu_custom_call.1} parent=1 // pred_fallthru
      _
    // Predicated region
    $region94: #{tpu_custom_call.1} parent=1 // pred_check
      _
    $region95: #{tpu_custom_call.1} parent=1 // pred_check_branch
      %241 = sbr.rel (0) target = $region97
    $region96: #{tpu_custom_call.1} parent=1 // pred_region
      %243 = dma.done [#allocation4], 32
    $region97: #{tpu_custom_call.1} parent=1 // pred_fallthru
      _
    // Predicated region
    $region98: #{tpu_custom_call.1} parent=1 // pred_check
      _
    $region99: #{tpu_custom_call.1} parent=1 // pred_check_branch
      %245 = sbr.rel (0) target = $region101
    $region100: #{tpu_custom_call.1} parent=1 // pred_region
      %247 = dma.done [#allocation9], 32
    $region101: #{tpu_custom_call.1} parent=1 // pred_fallthru
      _
    // Predicated region
    $region102: #{tpu_custom_call.1} parent=1 // pred_check
      _
    $region103: #{tpu_custom_call.1} parent=1 // pred_check_branch
      %249 = sbr.rel (0) target = $region105
    $region104: #{tpu_custom_call.1} parent=1 // pred_region
      %251 = dma.done [#allocation9], 32
    $region105: #{tpu_custom_call.1} parent=1 // pred_fallthru
      _
    // Predicated region
    $region106: #{tpu_custom_call.1} parent=1 // pred_check
      _
    $region107: #{tpu_custom_call.1} parent=1 // pred_check_branch
      %253 = sbr.rel (0) target = $region109
    $region108: #{tpu_custom_call.1} parent=1 // pred_region
      %255 = dma.done [#allocation12], 32
    $region109: #{tpu_custom_call.1} parent=1 // pred_fallthru
      _
    // Predicated region
    $region110: #{tpu_custom_call.1} parent=1 // pred_check
      _
    $region111: #{tpu_custom_call.1} parent=1 // pred_check_branch
      %257 = sbr.rel (0) target = $region113
    $region112: #{tpu_custom_call.1} parent=1 // pred_region
      %259 = dma.done [#allocation12], 32
    $region113: #{tpu_custom_call.1} parent=1 // pred_fallthru
      _
    // Predicated region
    $region114: #{tpu_custom_call.1} parent=1 // pred_check
      _
    $region115: #{tpu_custom_call.1} parent=1 // pred_check_branch
      %261 = sbr.rel (0) target = $region117
    $region116: #{tpu_custom_call.1} parent=1 // pred_region
      %263 = dma.done [#allocation15], 32
    $region117: #{tpu_custom_call.1} parent=1 // pred_fallthru
      _
    // Predicated region
    $region118: #{tpu_custom_call.1} parent=1 // pred_check
      _
    $region119: #{tpu_custom_call.1} parent=1 // pred_check_branch
      %265 = sbr.rel (0) target = $region121
    $region120: #{tpu_custom_call.1} parent=1 // pred_region
      %267 = dma.done [#allocation15], 32
    $region121: #{tpu_custom_call.1} parent=1 // pred_fallthru
      _
    // Predicated region
    $region122: #{tpu_custom_call.1} parent=1 // pred_check
      _
    $region123: #{tpu_custom_call.1} parent=1 // pred_check_branch
      %269 = sbr.rel (0) target = $region125
    $region124: #{tpu_custom_call.1} parent=1 // pred_region
      %271 = dma.done [#allocation18], 32
    $region125: #{tpu_custom_call.1} parent=1 // pred_fallthru
      _
    // Predicated region
    $region126: #{tpu_custom_call.1} parent=1 // pred_check
      _
    $region127: #{tpu_custom_call.1} parent=1 // pred_check_branch
      %273 = sbr.rel (0) target = $region129
    $region128: #{tpu_custom_call.1} parent=1 // pred_region
      %275 = dma.done [#allocation18], 32
    $region129: #{tpu_custom_call.1} parent=1 // pred_fallthru
      _
    // Predicated region
    $region130: #{tpu_custom_call.1} parent=1 // pred_check
      _
    $region131: #{tpu_custom_call.1} parent=1 // pred_check_branch
      %277 = sbr.rel (0) target = $region133
    $region132: #{tpu_custom_call.1} parent=1 // pred_region
      %279 = dma.done [#allocation21], 32
    $region133: #{tpu_custom_call.1} parent=1 // pred_fallthru
      _
    // Predicated region
    $region134: #{tpu_custom_call.1} parent=1 // pred_check
      _
    $region135: #{tpu_custom_call.1} parent=1 // pred_check_branch
      %281 = sbr.rel (0) target = $region137
    $region136: #{tpu_custom_call.1} parent=1 // pred_region
      %283 = dma.done [#allocation21], 32
    $region137: #{tpu_custom_call.1} parent=1 // pred_fallthru
      _
    // Predicated region
    $region138: #{tpu_custom_call.1} parent=1 // pred_check
      _
    $region139: #{tpu_custom_call.1} parent=1 // pred_check_branch
      %285 = sbr.rel (0) target = $region141
    $region140: #{tpu_custom_call.1} parent=1 // pred_region
      %287 = dma.done [#allocation24], 16
    $region141: #{tpu_custom_call.1} parent=1 // pred_fallthru
      _
    // Predicated region
    $region142: #{tpu_custom_call.1} parent=1 // pred_check
      _
    $region143: #{tpu_custom_call.1} parent=1 // pred_check_branch
      %289 = sbr.rel (0) target = $region145
    $region144: #{tpu_custom_call.1} parent=1 // pred_region
      %291 = dma.done [#allocation24], 16
    $region145: #{tpu_custom_call.1} parent=1 // pred_fallthru
      _
    // Predicated region
    $region146: #{tpu_custom_call.1} parent=1 // pred_check
      _
    $region147: #{tpu_custom_call.1} parent=1 // pred_check_branch
      %293 = sbr.rel (0) target = $region149
    $region148: #{tpu_custom_call.1} parent=1 // pred_region
      %295 = dma.done [#allocation27], 16
    $region149: #{tpu_custom_call.1} parent=1 // pred_fallthru
      _
    %296 = sfence
    %s297 = sld [smem:[#allocation3]]
    %s298 = scalar_lea.vmem %s2, %s297
    %v299 = vld [vmem:[%s298] sm:$0x1]
    %vm300 = vcmask 253952
    %301 = vst.msk [vmem:[#allocation2] sm:$0x1] %vm300, %v299
    %s302 = sld [smem:[#allocation3 + $0x1]]
    %s303 = scalar_lea.vmem %s2, %s302
    %v304 = vld [vmem:[%s303] sm:$0x1]
    %305 = vst.msk [vmem:[#allocation2 + $0x1] sm:$0x1] %vm300, %v304
    %s306 = sld [smem:[#allocation3 + $0x2]]
    %s307 = scalar_lea.vmem %s2, %s306
    %v308 = vld [vmem:[%s307] sm:$0x1]
    %309 = vst.msk [vmem:[#allocation2 + $0x2] sm:$0x1] %vm300, %v308
    %s310 = sld [smem:[#allocation3 + $0x3]]
    %s311 = scalar_lea.vmem %s2, %s310
    %v312 = vld [vmem:[%s311] sm:$0x1]
    %313 = vst.msk [vmem:[#allocation2 + $0x3] sm:$0x1] %vm300, %v312
    %s314 = sld [smem:[#allocation3 + $0x4]]
    %s315 = scalar_lea.vmem %s2, %s314
    %v316 = vld [vmem:[%s315] sm:$0x1]
    %317 = vst.msk [vmem:[#allocation2 + $0x4] sm:$0x1] %vm300, %v316
    %s318 = sld [smem:[#allocation3 + $0x5]]
    %s319 = scalar_lea.vmem %s2, %s318
    %v320 = vld [vmem:[%s319] sm:$0x1]
    %321 = vst.msk [vmem:[#allocation2 + $0x5] sm:$0x1] %vm300, %v320
    %s322 = sld [smem:[#allocation3 + $0x6]]
    %s323 = scalar_lea.vmem %s2, %s322
    %v324 = vld [vmem:[%s323] sm:$0x1]
    %325 = vst.msk [vmem:[#allocation2 + $0x6] sm:$0x1] %vm300, %v324
    %s326 = sld [smem:[#allocation3 + $0x7]]
    %s327 = scalar_lea.vmem %s2, %s326
    %v328 = vld [vmem:[%s327] sm:$0x1]
    %329 = vst.msk [vmem:[#allocation2 + $0x7] sm:$0x1] %vm300, %v328
    %s330 = sld [smem:[#allocation3 + $0x8]]
    %s331 = scalar_lea.vmem %s2, %s330
    %v332 = vld [vmem:[%s331] sm:$0x1]
    %333 = vst.msk [vmem:[#allocation2 + $0x8] sm:$0x1] %vm300, %v332
    %s334 = sld [smem:[#allocation3 + $0x9]]
    %s335 = scalar_lea.vmem %s2, %s334
    %v336 = vld [vmem:[%s335] sm:$0x1]
    %337 = vst.msk [vmem:[#allocation2 + $0x9] sm:$0x1] %vm300, %v336
    %s338 = sld [smem:[#allocation3 + $0xa]]
    %s339 = scalar_lea.vmem %s2, %s338
    %v340 = vld [vmem:[%s339] sm:$0x1]
    %341 = vst.msk [vmem:[#allocation2 + $0xa] sm:$0x1] %vm300, %v340
    %s342 = sld [smem:[#allocation3 + $0xb]]
    %s343 = scalar_lea.vmem %s2, %s342
    %v344 = vld [vmem:[%s343] sm:$0x1]
    %345 = vst.msk [vmem:[#allocation2 + $0xb] sm:$0x1] %vm300, %v344
    %s346 = sld [smem:[#allocation3 + $0xc]]
    %s347 = scalar_lea.vmem %s2, %s346
    %v348 = vld [vmem:[%s347] sm:$0x1]
    %349 = vst.msk [vmem:[#allocation2 + $0xc] sm:$0x1] %vm300, %v348
    %s350 = sld [smem:[#allocation3 + $0xd]]
    %s351 = scalar_lea.vmem %s2, %s350
    %v352 = vld [vmem:[%s351] sm:$0x1]
    %353 = vst.msk [vmem:[#allocation2 + $0xd] sm:$0x1] %vm300, %v352
    %s354 = sld [smem:[#allocation3 + $0xe]]
    %s355 = scalar_lea.vmem %s2, %s354
    %v356 = vld [vmem:[%s355] sm:$0x1]
    %357 = vst.msk [vmem:[#allocation2 + $0xe] sm:$0x1] %vm300, %v356
    %s358 = sld [smem:[#allocation3 + $0xf]]
    %s359 = scalar_lea.vmem %s2, %s358
    %v360 = vld [vmem:[%s359] sm:$0x1]
    %361 = vst.msk [vmem:[#allocation2 + $0xf] sm:$0x1] %vm300, %v360
    %v362 = vld [vmem:[#allocation2] sm:$0xff]
    %v363 = vld [vmem:[#allocation2 + $0x8] sm:$0xff]
    %v364 = vlaneseq
    %v365 = vshrl.u32 %v364, 7
    %v366 = vlaneseq
    %v367 = vand.u32 %v366, 127
    %vm368 = vcmp.le.s32.totalorder %v367, %v365
    %v369 = vsel %vm368, 0.0, -1e+09
    %v370 = vld [vmem:[%s1] sm:$0x3]
    %v372 = vrot.slane %v370, 1
    %v373 = vperm.slane %v370, 0
    %v374 = vperm.slane %v372, 0
    %v377 = vadd.f32 %v369, %v373
    %v378 = vadd.f32 %v369, %v374
    %v379 = vld [vmem:[%s3] sm:$0xff]
    %v380 = vld [vmem:[%s3 + $0x8] sm:$0xff]
    %v381 = vld [vmem:[%s3 + $0x10] sm:$0xff]
    %v382 = vld [vmem:[%s3 + $0x18] sm:$0xff]
    %v383 = vld [vmem:[#allocation7] sm:$0x1]
    %v385 = vperm.slane %v383, 0
    %vm387 = vcmask 261120
    %v389 = vsel %vm387, %v362, 0
    %v392 = vsel %vm387, %v363, 0
    %394 = vmatpush.msra.mxu0 0.0
    %395 = vmatpush.msra.mxu0 0.0
    %396 = vmatpush.msra.mxu0 0.0
    %397 = vmatpush.msra.mxu0 0.0
    %398 = vmatpush.msra.mxu0 0.0
    %399 = vmatpush.msra.mxu0 0.0
    %400 = vmatpush.msra.mxu0 0.0
    %401 = vmatpush.msra.mxu0 0.0
    %402 = vmatpush.msra.mxu0 0.0
    %403 = vmatpush.msra.mxu0 0.0
    %404 = vmatpush.msra.mxu0 0.0
    %405 = vmatpush.msra.mxu0 0.0
    %406 = vmatpush.msra.mxu0 %v382
    %407 = vmatpush.msra.mxu0 %v381
    %408 = vmatpush.msra.mxu0 %v380
    %409 = vmatpush.msra.mxu0 %v379
    %410 = vmatmul.f32.gmra.mxu0 %v389
    %v411 = vpop.f32.mrf.mxu0
    %v412 = vadd.f32 %v385, %v411
    %413 = vmatmul.f32.gmra.mxu0 %v392
    %v414 = vpop.f32.mrf.mxu0
    %v415 = vadd.f32 %v385, %v414
    %416 = vdwg.mxu0
    %v417 = vmul.f32 %v412, 0.35355338
    %v418 = vmul.f32 %v415, 0.35355338
    %421 = vrot.lane.b32.xlu0 %v417, 120
    %v422 = vpop.permute.xlu0 %421
    %423 = vrot.lane.b32.xlu0 %v418, 120
    %v424 = vpop.permute.xlu0 %423
    %425 = vrot.lane.b32.xlu0 %v417, 112
    %v426 = vpop.permute.xlu0 %425
    %427 = vrot.lane.b32.xlu0 %v418, 112
    %v428 = vpop.permute.xlu0 %427
    %429 = vrot.lane.b32.xlu0 %v417, 104
    %v430 = vpop.permute.xlu0 %429
    %431 = vrot.lane.b32.xlu0 %v418, 104
    %v432 = vpop.permute.xlu0 %431
    %435 = vrot.lane.b32.xlu0 %v412, 120
    %v436 = vpop.permute.xlu0 %435
    %437 = vrot.lane.b32.xlu0 %v415, 120
    %v438 = vpop.permute.xlu0 %437
    %439 = vrot.lane.b32.xlu0 %v412, 112
    %v440 = vpop.permute.xlu0 %439
    %441 = vrot.lane.b32.xlu0 %v415, 112
    %v442 = vpop.permute.xlu0 %441
    %443 = vrot.lane.b32.xlu0 %v412, 104
    %v444 = vpop.permute.xlu0 %443
    %445 = vrot.lane.b32.xlu0 %v415, 104
    %v446 = vpop.permute.xlu0 %445
    %447 = vrot.lane.b32.xlu0 %v412, 96
    %v448 = vpop.permute.xlu0 %447
    %vm449 = vcmask 64512
    %v450 = vsel %vm449, %v417, 0
    %v452 = vsel %vm449, %v448, 0
    %454 = vmatpush.xpose.msra.mxu0 0.0
    %455 = vmatpush.xpose.msra.mxu0 0.0
    %456 = vmatpush.xpose.msra.mxu0 0.0
    %457 = vmatpush.xpose.msra.mxu0 0.0
    %458 = vmatpush.xpose.msra.mxu0 0.0
    %459 = vmatpush.xpose.msra.mxu0 0.0
    %460 = vmatpush.xpose.msra.mxu0 0.0
    %461 = vmatpush.xpose.msra.mxu0 0.0
    %462 = vmatpush.xpose.msra.mxu0 0.0
    %463 = vmatpush.xpose.msra.mxu0 0.0
    %464 = vmatpush.xpose.msra.mxu0 0.0
    %465 = vmatpush.xpose.msra.mxu0 0.0
    %466 = vmatpush.xpose.msra.mxu0 0.0
    %467 = vmatpush.xpose.msra.mxu0 0.0
    %468 = vmatpush.xpose.msra.mxu0 0.0
    %469 = vmatpush.xpose.msra.mxu0 %v452
    %470 = vmatmul.f32.gmra.mxu0 %v450
    %v471 = vpop.f32.mrf.mxu0
    %v472 = vadd.f32 %v377, %v471
    %473 = vdwg.mxu0
    %474 = vrot.lane.b32.xlu0 %v415, 96
    %v475 = vpop.permute.xlu0 %474
    %v476 = vsel %vm449, %v418, 0
    %v478 = vsel %vm449, %v475, 0
    %480 = vmatpush.xpose.msra.mxu0 0.0
    %481 = vmatpush.xpose.msra.mxu0 0.0
    %482 = vmatpush.xpose.msra.mxu0 0.0
    %483 = vmatpush.xpose.msra.mxu0 0.0
    %484 = vmatpush.xpose.msra.mxu0 0.0
    %485 = vmatpush.xpose.msra.mxu0 0.0
    %486 = vmatpush.xpose.msra.mxu0 0.0
    %487 = vmatpush.xpose.msra.mxu0 0.0
    %488 = vmatpush.xpose.msra.mxu0 0.0
    %489 = vmatpush.xpose.msra.mxu0 0.0
    %490 = vmatpush.xpose.msra.mxu0 0.0
    %491 = vmatpush.xpose.msra.mxu0 0.0
    %492 = vmatpush.xpose.msra.mxu0 0.0
    %493 = vmatpush.xpose.msra.mxu0 0.0
    %494 = vmatpush.xpose.msra.mxu0 0.0
    %495 = vmatpush.xpose.msra.mxu0 %v478
    %496 = vmatmul.f32.gmra.mxu0 %v476
    %v497 = vpop.f32.mrf.mxu0
    %v498 = vadd.f32 %v378, %v497
    %499 = vdwg.mxu0
    %500 = vrot.lane.b32.xlu0 %v436, 96
    %v501 = vpop.permute.xlu0 %500
    %v502 = vsel %vm449, %v422, 0
    %v504 = vsel %vm449, %v501, 0
    %506 = vmatpush.xpose.msra.mxu0 0.0
    %507 = vmatpush.xpose.msra.mxu0 0.0
    %508 = vmatpush.xpose.msra.mxu0 0.0
    %509 = vmatpush.xpose.msra.mxu0 0.0
    %510 = vmatpush.xpose.msra.mxu0 0.0
    %511 = vmatpush.xpose.msra.mxu0 0.0
    %512 = vmatpush.xpose.msra.mxu0 0.0
    %513 = vmatpush.xpose.msra.mxu0 0.0
    %514 = vmatpush.xpose.msra.mxu0 0.0
    %515 = vmatpush.xpose.msra.mxu0 0.0
    %516 = vmatpush.xpose.msra.mxu0 0.0
    %517 = vmatpush.xpose.msra.mxu0 0.0
    %518 = vmatpush.xpose.msra.mxu0 0.0
    %519 = vmatpush.xpose.msra.mxu0 0.0
    %520 = vmatpush.xpose.msra.mxu0 0.0
    %521 = vmatpush.xpose.msra.mxu0 %v504
    %522 = vmatmul.f32.gmra.mxu0 %v502
    %v523 = vpop.f32.mrf.mxu0
    %v524 = vadd.f32 %v377, %v523
    %525 = vdwg.mxu0
    %526 = vrot.lane.b32.xlu0 %v438, 96
    %v527 = vpop.permute.xlu0 %526
    %v528 = vsel %vm449, %v424, 0
    %v530 = vsel %vm449, %v527, 0
    %532 = vmatpush.xpose.msra.mxu0 0.0
    %533 = vmatpush.xpose.msra.mxu0 0.0
    %534 = vmatpush.xpose.msra.mxu0 0.0
    %535 = vmatpush.xpose.msra.mxu0 0.0
    %536 = vmatpush.xpose.msra.mxu0 0.0
    %537 = vmatpush.xpose.msra.mxu0 0.0
    %538 = vmatpush.xpose.msra.mxu0 0.0
    %539 = vmatpush.xpose.msra.mxu0 0.0
    %540 = vmatpush.xpose.msra.mxu0 0.0
    %541 = vmatpush.xpose.msra.mxu0 0.0
    %542 = vmatpush.xpose.msra.mxu0 0.0
    %543 = vmatpush.xpose.msra.mxu0 0.0
    %544 = vmatpush.xpose.msra.mxu0 0.0
    %545 = vmatpush.xpose.msra.mxu0 0.0
    %546 = vmatpush.xpose.msra.mxu0 0.0
    %547 = vmatpush.xpose.msra.mxu0 %v530
    %548 = vmatmul.f32.gmra.mxu0 %v528
    %v549 = vpop.f32.mrf.mxu0
    %v550 = vadd.f32 %v378, %v549
    %551 = vdwg.mxu0
    %552 = vrot.lane.b32.xlu0 %v440, 96
    %v553 = vpop.permute.xlu0 %552
    %v554 = vsel %vm449, %v426, 0
    %v556 = vsel %vm449, %v553, 0
    %558 = vmatpush.xpose.msra.mxu0 0.0
    %559 = vmatpush.xpose.msra.mxu0 0.0
    %560 = vmatpush.xpose.msra.mxu0 0.0
    %561 = vmatpush.xpose.msra.mxu0 0.0
    %562 = vmatpush.xpose.msra.mxu0 0.0
    %563 = vmatpush.xpose.msra.mxu0 0.0
    %564 = vmatpush.xpose.msra.mxu0 0.0
    %565 = vmatpush.xpose.msra.mxu0 0.0
    %566 = vmatpush.xpose.msra.mxu0 0.0
    %567 = vmatpush.xpose.msra.mxu0 0.0
    %568 = vmatpush.xpose.msra.mxu0 0.0
    %569 = vmatpush.xpose.msra.mxu0 0.0
    %570 = vmatpush.xpose.msra.mxu0 0.0
    %571 = vmatpush.xpose.msra.mxu0 0.0
    %572 = vmatpush.xpose.msra.mxu0 0.0
    %573 = vmatpush.xpose.msra.mxu0 %v556
    %574 = vmatmul.f32.gmra.mxu0 %v554
    %v575 = vpop.f32.mrf.mxu0
    %v576 = vadd.f32 %v377, %v575
    %577 = vdwg.mxu0
    %578 = vrot.lane.b32.xlu0 %v442, 96
    %v579 = vpop.permute.xlu0 %578
    %v580 = vsel %vm449, %v428, 0
    %v582 = vsel %vm449, %v579, 0
    %584 = vmatpush.xpose.msra.mxu0 0.0
    %585 = vmatpush.xpose.msra.mxu0 0.0
    %586 = vmatpush.xpose.msra.mxu0 0.0
    %587 = vmatpush.xpose.msra.mxu0 0.0
    %588 = vmatpush.xpose.msra.mxu0 0.0
    %589 = vmatpush.xpose.msra.mxu0 0.0
    %590 = vmatpush.xpose.msra.mxu0 0.0
    %591 = vmatpush.xpose.msra.mxu0 0.0
    %592 = vmatpush.xpose.msra.mxu0 0.0
    %593 = vmatpush.xpose.msra.mxu0 0.0
    %594 = vmatpush.xpose.msra.mxu0 0.0
    %595 = vmatpush.xpose.msra.mxu0 0.0
    %596 = vmatpush.xpose.msra.mxu0 0.0
    %597 = vmatpush.xpose.msra.mxu0 0.0
    %598 = vmatpush.xpose.msra.mxu0 0.0
    %599 = vmatpush.xpose.msra.mxu0 %v582
    %600 = vmatmul.f32.gmra.mxu0 %v580
    %v601 = vpop.f32.mrf.mxu0
    %v602 = vadd.f32 %v378, %v601
    %603 = vdwg.mxu0
    %604 = vrot.lane.b32.xlu0 %v444, 96
    %v605 = vpop.permute.xlu0 %604
    %v606 = vsel %vm449, %v430, 0
    %v608 = vsel %vm449, %v605, 0
    %610 = vmatpush.xpose.msra.mxu0 0.0
    %611 = vmatpush.xpose.msra.mxu0 0.0
    %612 = vmatpush.xpose.msra.mxu0 0.0
    %613 = vmatpush.xpose.msra.mxu0 0.0
    %614 = vmatpush.xpose.msra.mxu0 0.0
    %615 = vmatpush.xpose.msra.mxu0 0.0
    %616 = vmatpush.xpose.msra.mxu0 0.0
    %617 = vmatpush.xpose.msra.mxu0 0.0
    %618 = vmatpush.xpose.msra.mxu0 0.0
    %619 = vmatpush.xpose.msra.mxu0 0.0
    %620 = vmatpush.xpose.msra.mxu0 0.0
    %621 = vmatpush.xpose.msra.mxu0 0.0
    %622 = vmatpush.xpose.msra.mxu0 0.0
    %623 = vmatpush.xpose.msra.mxu0 0.0
    %624 = vmatpush.xpose.msra.mxu0 0.0
    %625 = vmatpush.xpose.msra.mxu0 %v608
    %626 = vmatmul.f32.gmra.mxu0 %v606
    %v627 = vpop.f32.mrf.mxu0
    %v628 = vadd.f32 %v377, %v627
    %629 = vdwg.mxu0
    %630 = vrot.lane.b32.xlu0 %v446, 96
    %v631 = vpop.permute.xlu0 %630
    %v632 = vsel %vm449, %v432, 0
    %v634 = vsel %vm449, %v631, 0
    %636 = vmatpush.xpose.msra.mxu0 0.0
    %637 = vmatpush.xpose.msra.mxu0 0.0
    %638 = vmatpush.xpose.msra.mxu0 0.0
    %639 = vmatpush.xpose.msra.mxu0 0.0
    %640 = vmatpush.xpose.msra.mxu0 0.0
    %641 = vmatpush.xpose.msra.mxu0 0.0
    %642 = vmatpush.xpose.msra.mxu0 0.0
    %643 = vmatpush.xpose.msra.mxu0 0.0
    %644 = vmatpush.xpose.msra.mxu0 0.0
    %645 = vmatpush.xpose.msra.mxu0 0.0
    %646 = vmatpush.xpose.msra.mxu0 0.0
    %647 = vmatpush.xpose.msra.mxu0 0.0
    %648 = vmatpush.xpose.msra.mxu0 0.0
    %649 = vmatpush.xpose.msra.mxu0 0.0
    %650 = vmatpush.xpose.msra.mxu0 0.0
    %651 = vmatpush.xpose.msra.mxu0 %v634
    %652 = vmatmul.f32.gmra.mxu0 %v632
    %v653 = vpop.f32.mrf.mxu0
    %v654 = vadd.f32 %v378, %v653
    %655 = vdwg.mxu0
    %v656 = vsel %vm449, %v472, -inf
    %657 = vmax.xlane.f32.xlu0 %v656
    %v658 = vpop.xlane.xlu0 %657
    %v659 = vsel %vm449, %v498, -inf
    %660 = vmax.xlane.f32.xlu0 %v659
    %v661 = vpop.xlane.xlu0 %660
    %v662 = vsel %vm449, %v524, -inf
    %663 = vmax.xlane.f32.xlu0 %v662
    %v664 = vpop.xlane.xlu0 %663
    %v665 = vsel %vm449, %v550, -inf
    %666 = vmax.xlane.f32.xlu0 %v665
    %v667 = vpop.xlane.xlu0 %666
    %v668 = vsel %vm449, %v576, -inf
    %669 = vmax.xlane.f32.xlu0 %v668
    %v670 = vpop.xlane.xlu0 %669
    %v671 = vsel %vm449, %v602, -inf
    %672 = vmax.xlane.f32.xlu0 %v671
    %v673 = vpop.xlane.xlu0 %672
    %v674 = vsel %vm449, %v628, -inf
    %675 = vmax.xlane.f32.xlu0 %v674
    %v676 = vpop.xlane.xlu0 %675
    %v677 = vsel %vm449, %v654, -inf
    %678 = vmax.xlane.f32.xlu0 %v677
    %v679 = vpop.xlane.xlu0 %678
    %v680 = vsub.f32 %v472, %v658
    %v681 = vsub.f32 %v498, %v661
    %v682 = vsub.f32 %v524, %v664
    %v683 = vsub.f32 %v550, %v667
    %v684 = vsub.f32 %v576, %v670
    %v685 = vsub.f32 %v602, %v673
    %v686 = vsub.f32 %v628, %v676
    %v687 = vsub.f32 %v654, %v679
    %v688 = vmul.f32 %v680, 1.442695
    %v689 = vpow.pop %v688
    %v690 = vmul.f32 %v681, 1.442695
    %v691 = vpow.pop %v690
    %v692 = vmul.f32 %v682, 1.442695
    %v693 = vpow.pop %v692
    %v694 = vmul.f32 %v683, 1.442695
    %v695 = vpow.pop %v694
    %v696 = vmul.f32 %v684, 1.442695
    %v697 = vpow.pop %v696
    %v698 = vmul.f32 %v685, 1.442695
    %v699 = vpow.pop %v698
    %v700 = vmul.f32 %v686, 1.442695
    %v701 = vpow.pop %v700
    %v702 = vmul.f32 %v687, 1.442695
    %v703 = vpow.pop %v702
    %v704 = vsel %vm449, %v689, 0.0
    %705 = vadd.xlane.f32.xlu0 %v704
    %v706 = vpop.xlane.xlu0 %705
    %v707 = vsel %vm449, %v691, 0.0
    %708 = vadd.xlane.f32.xlu0 %v707
    %v709 = vpop.xlane.xlu0 %708
    %v710 = vsel %vm449, %v693, 0.0
    %711 = vadd.xlane.f32.xlu0 %v710
    %v712 = vpop.xlane.xlu0 %711
    %v713 = vsel %vm449, %v695, 0.0
    %714 = vadd.xlane.f32.xlu0 %v713
    %v715 = vpop.xlane.xlu0 %714
    %v716 = vsel %vm449, %v697, 0.0
    %717 = vadd.xlane.f32.xlu0 %v716
    %v718 = vpop.xlane.xlu0 %717
    %v719 = vsel %vm449, %v699, 0.0
    %720 = vadd.xlane.f32.xlu0 %v719
    %v721 = vpop.xlane.xlu0 %720
    %v722 = vsel %vm449, %v701, 0.0
    %723 = vadd.xlane.f32.xlu0 %v722
    %v724 = vpop.xlane.xlu0 %723
    %v725 = vsel %vm449, %v703, 0.0
    %726 = vadd.xlane.f32.xlu0 %v725
    %v727 = vpop.xlane.xlu0 %726
    %v728 = vrcp.pop %v706
    %v729 = vmul.f32 %v706, %v728
    %v730 = vsub.f32 1.0, %v729
    %v731 = vmul.f32 %v728, %v730
    %v732 = vadd.f32 %v728, %v731
    %vm733 = vweird.f32 %v706
    %vm734 = vweird.f32 %v728
    %vm735 = vmor %vm733, %vm734
    %v736 = vsel %vm735, %v728, %v732
    %v737 = vand.u32 2147483647, %v706
    %vm738 = vcmp.eq.f32.partialorder %v737, 8.507059e+37
    %v739 = vand.u32 %v706, 2147483648
    %v740 = vor.u32 1.1754944e-38, %v739
    %v741 = vsel %vm738, %v740, %v736
    %v742 = vmul.f32 %v689, %v741
    %v743 = vrcp.pop %v709
    %v744 = vmul.f32 %v709, %v743
    %v745 = vsub.f32 1.0, %v744
    %v746 = vmul.f32 %v743, %v745
    %v747 = vadd.f32 %v743, %v746
    %vm748 = vweird.f32 %v709
    %vm749 = vweird.f32 %v743
    %vm750 = vmor %vm748, %vm749
    %v751 = vsel %vm750, %v743, %v747
    %v752 = vand.u32 2147483647, %v709
    %vm753 = vcmp.eq.f32.partialorder %v752, 8.507059e+37
    %v754 = vand.u32 %v709, 2147483648
    %v755 = vor.u32 1.1754944e-38, %v754
    %v756 = vsel %vm753, %v755, %v751
    %v757 = vmul.f32 %v691, %v756
    %v758 = vrcp.pop %v712
    %v759 = vmul.f32 %v712, %v758
    %v760 = vsub.f32 1.0, %v759
    %v761 = vmul.f32 %v758, %v760
    %v762 = vadd.f32 %v758, %v761
    %vm763 = vweird.f32 %v712
    %vm764 = vweird.f32 %v758
    %vm765 = vmor %vm763, %vm764
    %v766 = vsel %vm765, %v758, %v762
    %v767 = vand.u32 2147483647, %v712
    %vm768 = vcmp.eq.f32.partialorder %v767, 8.507059e+37
    %v769 = vand.u32 %v712, 2147483648
    %v770 = vor.u32 1.1754944e-38, %v769
    %v771 = vsel %vm768, %v770, %v766
    %v772 = vmul.f32 %v693, %v771
    %v773 = vrcp.pop %v715
    %v774 = vmul.f32 %v715, %v773
    %v775 = vsub.f32 1.0, %v774
    %v776 = vmul.f32 %v773, %v775
    %v777 = vadd.f32 %v773, %v776
    %vm778 = vweird.f32 %v715
    %vm779 = vweird.f32 %v773
    %vm780 = vmor %vm778, %vm779
    %v781 = vsel %vm780, %v773, %v777
    %v782 = vand.u32 2147483647, %v715
    %vm783 = vcmp.eq.f32.partialorder %v782, 8.507059e+37
    %v784 = vand.u32 %v715, 2147483648
    %v785 = vor.u32 1.1754944e-38, %v784
    %v786 = vsel %vm783, %v785, %v781
    %v787 = vmul.f32 %v695, %v786
    %v788 = vrcp.pop %v718
    %v789 = vmul.f32 %v718, %v788
    %v790 = vsub.f32 1.0, %v789
    %v791 = vmul.f32 %v788, %v790
    %v792 = vadd.f32 %v788, %v791
    %vm793 = vweird.f32 %v718
    %vm794 = vweird.f32 %v788
    %vm795 = vmor %vm793, %vm794
    %v796 = vsel %vm795, %v788, %v792
    %v797 = vand.u32 2147483647, %v718
    %vm798 = vcmp.eq.f32.partialorder %v797, 8.507059e+37
    %v799 = vand.u32 %v718, 2147483648
    %v800 = vor.u32 1.1754944e-38, %v799
    %v801 = vsel %vm798, %v800, %v796
    %v802 = vmul.f32 %v697, %v801
    %v803 = vrcp.pop %v721
    %v804 = vmul.f32 %v721, %v803
    %v805 = vsub.f32 1.0, %v804
    %v806 = vmul.f32 %v803, %v805
    %v807 = vadd.f32 %v803, %v806
    %vm808 = vweird.f32 %v721
    %vm809 = vweird.f32 %v803
    %vm810 = vmor %vm808, %vm809
    %v811 = vsel %vm810, %v803, %v807
    %v812 = vand.u32 2147483647, %v721
    %vm813 = vcmp.eq.f32.partialorder %v812, 8.507059e+37
    %v814 = vand.u32 %v721, 2147483648
    %v815 = vor.u32 1.1754944e-38, %v814
    %v816 = vsel %vm813, %v815, %v811
    %v817 = vmul.f32 %v699, %v816
    %v818 = vrcp.pop %v724
    %v819 = vmul.f32 %v724, %v818
    %v820 = vsub.f32 1.0, %v819
    %v821 = vmul.f32 %v818, %v820
    %v822 = vadd.f32 %v818, %v821
    %vm823 = vweird.f32 %v724
    %vm824 = vweird.f32 %v818
    %vm825 = vmor %vm823, %vm824
    %v826 = vsel %vm825, %v818, %v822
    %v827 = vand.u32 2147483647, %v724
    %vm828 = vcmp.eq.f32.partialorder %v827, 8.507059e+37
    %v829 = vand.u32 %v724, 2147483648
    %v830 = vor.u32 1.1754944e-38, %v829
    %v831 = vsel %vm828, %v830, %v826
    %v832 = vmul.f32 %v701, %v831
    %v833 = vrcp.pop %v727
    %v834 = vmul.f32 %v727, %v833
    %v835 = vsub.f32 1.0, %v834
    %v836 = vmul.f32 %v833, %v835
    %v837 = vadd.f32 %v833, %v836
    %vm838 = vweird.f32 %v727
    %vm839 = vweird.f32 %v833
    %vm840 = vmor %vm838, %vm839
    %v841 = vsel %vm840, %v833, %v837
    %v842 = vand.u32 2147483647, %v727
    %vm843 = vcmp.eq.f32.partialorder %v842, 8.507059e+37
    %v844 = vand.u32 %v727, 2147483648
    %v845 = vor.u32 1.1754944e-38, %v844
    %v846 = vsel %vm843, %v845, %v841
    %v847 = vmul.f32 %v703, %v846
    %848 = vrot.lane.b32.xlu0 %v412, 64
    %v849 = vpop.permute.xlu0 %848
    %v852 = vsel %vm449, %v742, 0
    %854 = vmatpush.msra.mxu0 0.0
    %855 = vmatpush.msra.mxu0 0.0
    %856 = vmatpush.msra.mxu0 0.0
    %857 = vmatpush.msra.mxu0 0.0
    %858 = vmatpush.msra.mxu0 0.0
    %859 = vmatpush.msra.mxu0 0.0
    %860 = vmatpush.msra.mxu0 0.0
    %861 = vmatpush.msra.mxu0 0.0
    %862 = vmatpush.msra.mxu0 0.0
    %863 = vmatpush.msra.mxu0 0.0
    %864 = vmatpush.msra.mxu0 0.0
    %865 = vmatpush.msra.mxu0 0.0
    %866 = vmatpush.msra.mxu0 0.0
    %867 = vmatpush.msra.mxu0 0.0
    %868 = vmatpush.msra.mxu0 0.0
    %869 = vmatpush.msra.mxu0 %v849
    %870 = vmatmul.f32.gmra.mxu0 %v852
    %v871 = vpop.f32.mrf.mxu0
    %v872 = vadd.f32 0.0, %v871
    %873 = vdwg.mxu0
    %874 = vrot.lane.b32.xlu0 %v415, 64
    %v875 = vpop.permute.xlu0 %874
    %v878 = vsel %vm449, %v757, 0
    %880 = vmatpush.msra.mxu0 0.0
    %881 = vmatpush.msra.mxu0 0.0
    %882 = vmatpush.msra.mxu0 0.0
    %883 = vmatpush.msra.mxu0 0.0
    %884 = vmatpush.msra.mxu0 0.0
    %885 = vmatpush.msra.mxu0 0.0
    %886 = vmatpush.msra.mxu0 0.0
    %887 = vmatpush.msra.mxu0 0.0
    %888 = vmatpush.msra.mxu0 0.0
    %889 = vmatpush.msra.mxu0 0.0
    %890 = vmatpush.msra.mxu0 0.0
    %891 = vmatpush.msra.mxu0 0.0
    %892 = vmatpush.msra.mxu0 0.0
    %893 = vmatpush.msra.mxu0 0.0
    %894 = vmatpush.msra.mxu0 0.0
    %895 = vmatpush.msra.mxu0 %v875
    %896 = vmatmul.f32.gmra.mxu0 %v878
    %v897 = vpop.f32.mrf.mxu0
    %v898 = vadd.f32 0.0, %v897
    %899 = vdwg.mxu0
    %900 = vrot.lane.b32.xlu0 %v436, 64
    %v901 = vpop.permute.xlu0 %900
    %v904 = vsel %vm449, %v772, 0
    %906 = vmatpush.msra.mxu0 0.0
    %907 = vmatpush.msra.mxu0 0.0
    %908 = vmatpush.msra.mxu0 0.0
    %909 = vmatpush.msra.mxu0 0.0
    %910 = vmatpush.msra.mxu0 0.0
    %911 = vmatpush.msra.mxu0 0.0
    %912 = vmatpush.msra.mxu0 0.0
    %913 = vmatpush.msra.mxu0 0.0
    %914 = vmatpush.msra.mxu0 0.0
    %915 = vmatpush.msra.mxu0 0.0
    %916 = vmatpush.msra.mxu0 0.0
    %917 = vmatpush.msra.mxu0 0.0
    %918 = vmatpush.msra.mxu0 0.0
    %919 = vmatpush.msra.mxu0 0.0
    %920 = vmatpush.msra.mxu0 0.0
    %921 = vmatpush.msra.mxu0 %v901
    %922 = vmatmul.f32.gmra.mxu0 %v904
    %v923 = vpop.f32.mrf.mxu0
    %v924 = vadd.f32 0.0, %v923
    %925 = vdwg.mxu0
    %926 = vrot.lane.b32.xlu0 %v438, 64
    %v927 = vpop.permute.xlu0 %926
    %v930 = vsel %vm449, %v787, 0
    %932 = vmatpush.msra.mxu0 0.0
    %933 = vmatpush.msra.mxu0 0.0
    %934 = vmatpush.msra.mxu0 0.0
    %935 = vmatpush.msra.mxu0 0.0
    %936 = vmatpush.msra.mxu0 0.0
    %937 = vmatpush.msra.mxu0 0.0
    %938 = vmatpush.msra.mxu0 0.0
    %939 = vmatpush.msra.mxu0 0.0
    %940 = vmatpush.msra.mxu0 0.0
    %941 = vmatpush.msra.mxu0 0.0
    %942 = vmatpush.msra.mxu0 0.0
    %943 = vmatpush.msra.mxu0 0.0
    %944 = vmatpush.msra.mxu0 0.0
    %945 = vmatpush.msra.mxu0 0.0
    %946 = vmatpush.msra.mxu0 0.0
    %947 = vmatpush.msra.mxu0 %v927
    %948 = vmatmul.f32.gmra.mxu0 %v930
    %v949 = vpop.f32.mrf.mxu0
    %v950 = vadd.f32 0.0, %v949
    %951 = vdwg.mxu0
    %952 = vrot.lane.b32.xlu0 %v440, 64
    %v953 = vpop.permute.xlu0 %952
    %v956 = vsel %vm449, %v802, 0
    %958 = vmatpush.msra.mxu0 0.0
    %959 = vmatpush.msra.mxu0 0.0
    %960 = vmatpush.msra.mxu0 0.0
    %961 = vmatpush.msra.mxu0 0.0
    %962 = vmatpush.msra.mxu0 0.0
    %963 = vmatpush.msra.mxu0 0.0
    %964 = vmatpush.msra.mxu0 0.0
    %965 = vmatpush.msra.mxu0 0.0
    %966 = vmatpush.msra.mxu0 0.0
    %967 = vmatpush.msra.mxu0 0.0
    %968 = vmatpush.msra.mxu0 0.0
    %969 = vmatpush.msra.mxu0 0.0
    %970 = vmatpush.msra.mxu0 0.0
    %971 = vmatpush.msra.mxu0 0.0
    %972 = vmatpush.msra.mxu0 0.0
    %973 = vmatpush.msra.mxu0 %v953
    %974 = vmatmul.f32.gmra.mxu0 %v956
    %v975 = vpop.f32.mrf.mxu0
    %v976 = vadd.f32 0.0, %v975
    %977 = vdwg.mxu0
    %978 = vrot.lane.b32.xlu0 %v442, 64
    %v979 = vpop.permute.xlu0 %978
    %v982 = vsel %vm449, %v817, 0
    %984 = vmatpush.msra.mxu0 0.0
    %985 = vmatpush.msra.mxu0 0.0
    %986 = vmatpush.msra.mxu0 0.0
    %987 = vmatpush.msra.mxu0 0.0
    %988 = vmatpush.msra.mxu0 0.0
    %989 = vmatpush.msra.mxu0 0.0
    %990 = vmatpush.msra.mxu0 0.0
    %991 = vmatpush.msra.mxu0 0.0
    %992 = vmatpush.msra.mxu0 0.0
    %993 = vmatpush.msra.mxu0 0.0
    %994 = vmatpush.msra.mxu0 0.0
    %995 = vmatpush.msra.mxu0 0.0
    %996 = vmatpush.msra.mxu0 0.0
    %997 = vmatpush.msra.mxu0 0.0
    %998 = vmatpush.msra.mxu0 0.0
    %999 = vmatpush.msra.mxu0 %v979
    %1000 = vmatmul.f32.gmra.mxu0 %v982
    %v1001 = vpop.f32.mrf.mxu0
    %v1002 = vadd.f32 0.0, %v1001
    %1003 = vdwg.mxu0
    %1004 = vrot.lane.b32.xlu0 %v444, 64
    %v1005 = vpop.permute.xlu0 %1004
    %v1008 = vsel %vm449, %v832, 0
    %1010 = vmatpush.msra.mxu0 0.0
    %1011 = vmatpush.msra.mxu0 0.0
    %1012 = vmatpush.msra.mxu0 0.0
    %1013 = vmatpush.msra.mxu0 0.0
    %1014 = vmatpush.msra.mxu0 0.0
    %1015 = vmatpush.msra.mxu0 0.0
    %1016 = vmatpush.msra.mxu0 0.0
    %1017 = vmatpush.msra.mxu0 0.0
    %1018 = vmatpush.msra.mxu0 0.0
    %1019 = vmatpush.msra.mxu0 0.0
    %1020 = vmatpush.msra.mxu0 0.0
    %1021 = vmatpush.msra.mxu0 0.0
    %1022 = vmatpush.msra.mxu0 0.0
    %1023 = vmatpush.msra.mxu0 0.0
    %1024 = vmatpush.msra.mxu0 0.0
    %1025 = vmatpush.msra.mxu0 %v1005
    %1026 = vmatmul.f32.gmra.mxu0 %v1008
    %v1027 = vpop.f32.mrf.mxu0
    %v1028 = vadd.f32 0.0, %v1027
    %1029 = vdwg.mxu0
    %1030 = vrot.lane.b32.xlu0 %v446, 64
    %v1031 = vpop.permute.xlu0 %1030
    %v1034 = vsel %vm449, %v847, 0
    %1036 = vmatpush.msra.mxu0 0.0
    %1037 = vmatpush.msra.mxu0 0.0
    %1038 = vmatpush.msra.mxu0 0.0
    %1039 = vmatpush.msra.mxu0 0.0
    %1040 = vmatpush.msra.mxu0 0.0
    %1041 = vmatpush.msra.mxu0 0.0
    %1042 = vmatpush.msra.mxu0 0.0
    %1043 = vmatpush.msra.mxu0 0.0
    %1044 = vmatpush.msra.mxu0 0.0
    %1045 = vmatpush.msra.mxu0 0.0
    %1046 = vmatpush.msra.mxu0 0.0
    %1047 = vmatpush.msra.mxu0 0.0
    %1048 = vmatpush.msra.mxu0 0.0
    %1049 = vmatpush.msra.mxu0 0.0
    %1050 = vmatpush.msra.mxu0 0.0
    %1051 = vmatpush.msra.mxu0 %v1031
    %1052 = vmatmul.f32.gmra.mxu0 %v1034
    %v1053 = vpop.f32.mrf.mxu0
    %v1054 = vadd.f32 0.0, %v1053
    %1055 = vdwg.mxu0
    %1058 = vrot.lane.b32.xlu0 %v924, 8
    %v1059 = vpop.permute.xlu0 %1058
    %1060 = vrot.lane.b32.xlu0 %v950, 8
    %v1061 = vpop.permute.xlu0 %1060
    %1066 = vrot.lane.b32.xlu0 %v976, 16
    %v1067 = vpop.permute.xlu0 %1066
    %1068 = vrot.lane.b32.xlu0 %v1002, 16
    %v1069 = vpop.permute.xlu0 %1068
    %1074 = vrot.lane.b32.xlu0 %v1028, 24
    %v1075 = vpop.permute.xlu0 %1074
    %1076 = vrot.lane.b32.xlu0 %v1054, 24
    %v1077 = vpop.permute.xlu0 %1076
    %v1080 = vsel %vm449, %v872, %v1059
    %v1081 = vsel %vm449, %v898, %v1061
    %vm1082 = vcmask 130048
    %v1083 = vsel %vm1082, %v1080, %v1067
    %v1084 = vsel %vm1082, %v1081, %v1069
    %vm1085 = vcmask 195584
    %v1086 = vsel %vm1085, %v1083, %v1075
    %v1087 = vsel %vm1085, %v1084, %v1077
    %v1088 = vld [vmem:[%s5] sm:$0xff]
    %v1089 = vld [vmem:[%s5 + $0x8] sm:$0xff]
    %v1090 = vld [vmem:[%s5 + $0x10] sm:$0xff]
    %v1091 = vld [vmem:[%s5 + $0x18] sm:$0xff]
    %v1092 = vld [vmem:[#allocation8] sm:$0x1]
    %v1094 = vperm.slane %v1092, 0
    %v1097 = vsel %vm387, %v1086, 0
    %v1100 = vsel %vm387, %v1087, 0
    %1102 = vmatpush.msra.mxu0 0.0
    %1103 = vmatpush.msra.mxu0 0.0
    %1104 = vmatpush.msra.mxu0 0.0
    %1105 = vmatpush.msra.mxu0 0.0
    %1106 = vmatpush.msra.mxu0 0.0
    %1107 = vmatpush.msra.mxu0 0.0
    %1108 = vmatpush.msra.mxu0 0.0
    %1109 = vmatpush.msra.mxu0 0.0
    %1110 = vmatpush.msra.mxu0 0.0
    %1111 = vmatpush.msra.mxu0 0.0
    %1112 = vmatpush.msra.mxu0 0.0
    %1113 = vmatpush.msra.mxu0 0.0
    %1114 = vmatpush.msra.mxu0 %v1091
    %1115 = vmatpush.msra.mxu0 %v1090
    %1116 = vmatpush.msra.mxu0 %v1089
    %1117 = vmatpush.msra.mxu0 %v1088
    %1118 = vmatmul.f32.gmra.mxu0 %v1097
    %v1119 = vpop.f32.mrf.mxu0
    %v1120 = vadd.f32 %v1094, %v1119
    %1121 = vmatmul.f32.gmra.mxu0 %v1100
    %v1122 = vpop.f32.mrf.mxu0
    %v1123 = vadd.f32 %v1094, %v1122
    %1124 = vdwg.mxu0
    %v1125 = vadd.f32 %v362, %v1120
    %v1126 = vadd.f32 %v363, %v1123
    %v1127 = vld [vmem:[#allocation11] sm:$0x1]
    %v1128 = vld [vmem:[#allocation13] sm:$0x1]
    %v1129 = vsel %vm387, %v1125, 0.0
    %1130 = vadd.xlane.f32.xlu0 %v1129
    %v1131 = vpop.xlane.xlu0 %1130
    %v1132 = vsel %vm387, %v1126, 0.0
    %1133 = vadd.xlane.f32.xlu0 %v1132
    %v1134 = vpop.xlane.xlu0 %1133
    %v1135 = vrcp.pop 32.0
    %v1136 = vmul.f32 32.0, %v1135
    %v1137 = vsub.f32 1.0, %v1136
    %v1138 = vmul.f32 %v1135, %v1137
    %v1139 = vadd.f32 %v1135, %v1138
    %vm1140 = vweird.f32 %v1135
    %v1141 = vsel %vm1140, %v1135, %v1139
    %v1142 = vmul.f32 %v1131, %v1141
    %v1143 = vmul.f32 %v1134, %v1141
    %v1144 = vsub.f32 %v1125, %v1142
    %v1145 = vsub.f32 %v1126, %v1143
    %v1146 = vmul.f32 %v1144, %v1144
    %v1147 = vmul.f32 %v1145, %v1145
    %v1148 = vsel %vm387, %v1146, 0.0
    %1149 = vadd.xlane.f32.xlu0 %v1148
    %v1150 = vpop.xlane.xlu0 %1149
    %v1151 = vsel %vm387, %v1147, 0.0
    %1152 = vadd.xlane.f32.xlu0 %v1151
    %v1153 = vpop.xlane.xlu0 %1152
    %v1154 = vmul.f32 %v1150, %v1141
    %v1155 = vmul.f32 %v1153, %v1141
    %v1156 = vadd.f32 %v1154, 1e-05
    %v1157 = vadd.f32 %v1155, 1e-05
    %v1158 = vrsqrt.pop %v1156
    %v1159 = vmul.f32 %v1158, %v1156
    %v1160 = vmul.f32 %v1159, %v1158
    %v1161 = vmul.f32 0.5, %v1160
    %v1162 = vsub.f32 1.5, %v1161
    %v1163 = vmul.f32 %v1158, %v1162
    %vm1164 = vweird.f32 %v1156
    %vm1165 = vweird.f32 %v1158
    %vm1166 = vmor %vm1164, %vm1165
    %v1167 = vsel %vm1166, %v1158, %v1163
    %v1168 = vrsqrt.pop %v1157
    %v1169 = vmul.f32 %v1168, %v1157
    %v1170 = vmul.f32 %v1169, %v1168
    %v1171 = vmul.f32 0.5, %v1170
    %v1172 = vsub.f32 1.5, %v1171
    %v1173 = vmul.f32 %v1168, %v1172
    %vm1174 = vweird.f32 %v1157
    %vm1175 = vweird.f32 %v1168
    %vm1176 = vmor %vm1174, %vm1175
    %v1177 = vsel %vm1176, %v1168, %v1173
    %v1178 = vmul.f32 %v1144, %v1167
    %v1179 = vmul.f32 %v1145, %v1177
    %v1181 = vperm.slane %v1127, 0
    %v1183 = vmul.f32 %v1178, %v1181
    %v1184 = vmul.f32 %v1179, %v1181
    %v1186 = vperm.slane %v1128, 0
    %v1188 = vadd.f32 %v1183, %v1186
    %v1189 = vadd.f32 %v1184, %v1186
    %v1190 = vld [vmem:[#allocation10] sm:$0x1]
    %v1192 = vperm.slane %v1190, 0
    %v1194 = vadd.f32 %v1188, %v1192
    %v1195 = vadd.f32 %v1189, %v1192
    %v1196 = vld [vmem:[#allocation14] sm:$0x1]
    %v1197 = vld [vmem:[#allocation16] sm:$0x1]
    %v1198 = vsel %vm387, %v1194, 0.0
    %1199 = vadd.xlane.f32.xlu0 %v1198
    %v1200 = vpop.xlane.xlu0 %1199
    %v1201 = vsel %vm387, %v1195, 0.0
    %1202 = vadd.xlane.f32.xlu0 %v1201
    %v1203 = vpop.xlane.xlu0 %1202
    %v1204 = vmul.f32 %v1200, %v1141
    %v1205 = vmul.f32 %v1203, %v1141
    %v1206 = vsub.f32 %v1194, %v1204
    %v1207 = vsub.f32 %v1195, %v1205
    %v1208 = vmul.f32 %v1206, %v1206
    %v1209 = vmul.f32 %v1207, %v1207
    %v1210 = vsel %vm387, %v1208, 0.0
    %1211 = vadd.xlane.f32.xlu0 %v1210
    %v1212 = vpop.xlane.xlu0 %1211
    %v1213 = vsel %vm387, %v1209, 0.0
    %1214 = vadd.xlane.f32.xlu0 %v1213
    %v1215 = vpop.xlane.xlu0 %1214
    %v1216 = vmul.f32 %v1212, %v1141
    %v1217 = vmul.f32 %v1215, %v1141
    %v1218 = vadd.f32 %v1216, 1e-05
    %v1219 = vadd.f32 %v1217, 1e-05
    %v1220 = vrsqrt.pop %v1218
    %v1221 = vmul.f32 %v1220, %v1218
    %v1222 = vmul.f32 %v1221, %v1220
    %v1223 = vmul.f32 0.5, %v1222
    %v1224 = vsub.f32 1.5, %v1223
    %v1225 = vmul.f32 %v1220, %v1224
    %vm1226 = vweird.f32 %v1218
    %vm1227 = vweird.f32 %v1220
    %vm1228 = vmor %vm1226, %vm1227
    %v1229 = vsel %vm1228, %v1220, %v1225
    %v1230 = vrsqrt.pop %v1219
    %v1231 = vmul.f32 %v1230, %v1219
    %v1232 = vmul.f32 %v1231, %v1230
    %v1233 = vmul.f32 0.5, %v1232
    %v1234 = vsub.f32 1.5, %v1233
    %v1235 = vmul.f32 %v1230, %v1234
    %vm1236 = vweird.f32 %v1219
    %vm1237 = vweird.f32 %v1230
    %vm1238 = vmor %vm1236, %vm1237
    %v1239 = vsel %vm1238, %v1230, %v1235
    %v1240 = vmul.f32 %v1206, %v1229
    %v1241 = vmul.f32 %v1207, %v1239
    %v1243 = vperm.slane %v1196, 0
    %v1245 = vmul.f32 %v1240, %v1243
    %v1246 = vmul.f32 %v1241, %v1243
    %v1248 = vperm.slane %v1197, 0
    %v1250 = vadd.f32 %v1245, %v1248
    %v1251 = vadd.f32 %v1246, %v1248
    %v1252 = vld [vmem:[%s12] sm:$0xff]
    %v1253 = vld [vmem:[%s12 + $0x8] sm:$0xff]
    %v1254 = vld [vmem:[%s12 + $0x10] sm:$0xff]
    %v1255 = vld [vmem:[%s12 + $0x18] sm:$0xff]
    %v1256 = vld [vmem:[#allocation17] sm:$0x1]
    %v1258 = vperm.slane %v1256, 0
    %v1261 = vsel %vm387, %v1250, 0
    %v1264 = vsel %vm387, %v1251, 0
    %1266 = vmatpush.msra.mxu0 0.0
    %1267 = vmatpush.msra.mxu0 0.0
    %1268 = vmatpush.msra.mxu0 0.0
    %1269 = vmatpush.msra.mxu0 0.0
    %1270 = vmatpush.msra.mxu0 0.0
    %1271 = vmatpush.msra.mxu0 0.0
    %1272 = vmatpush.msra.mxu0 0.0
    %1273 = vmatpush.msra.mxu0 0.0
    %1274 = vmatpush.msra.mxu0 0.0
    %1275 = vmatpush.msra.mxu0 0.0
    %1276 = vmatpush.msra.mxu0 0.0
    %1277 = vmatpush.msra.mxu0 0.0
    %1278 = vmatpush.msra.mxu0 %v1255
    %1279 = vmatpush.msra.mxu0 %v1254
    %1280 = vmatpush.msra.mxu0 %v1253
    %1281 = vmatpush.msra.mxu0 %v1252
    %1282 = vmatmul.f32.gmra.mxu0 %v1261
    %v1283 = vpop.f32.mrf.mxu0
    %v1284 = vadd.f32 %v1258, %v1283
    %1285 = vmatmul.f32.gmra.mxu0 %v1264
    %v1286 = vpop.f32.mrf.mxu0
    %v1287 = vadd.f32 %v1258, %v1286
    %1288 = vdwg.mxu0
    %v1289 = vmax.f32 %v1284, 0.0
    %v1290 = vmax.f32 %v1287, 0.0
    %v1291 = vld [vmem:[%s14] sm:$0xff]
    %v1292 = vld [vmem:[%s14 + $0x8] sm:$0xff]
    %v1293 = vld [vmem:[%s14 + $0x10] sm:$0xff]
    %v1294 = vld [vmem:[%s14 + $0x18] sm:$0xff]
    %v1295 = vld [vmem:[%s14 + $0x20] sm:$0xff]
    %v1296 = vld [vmem:[%s14 + $0x28] sm:$0xff]
    %v1297 = vld [vmem:[%s14 + $0x30] sm:$0xff]
    %v1298 = vld [vmem:[%s14 + $0x38] sm:$0xff]
    %v1299 = vld [vmem:[#allocation19] sm:$0x1]
    %v1301 = vperm.slane %v1299, 0
    %vm1303 = vcmask 523264
    %v1305 = vsel %vm1303, %v1289, 0
    %v1308 = vsel %vm1303, %v1290, 0
    %1310 = vmatpush.msra.mxu0 0.0
    %1311 = vmatpush.msra.mxu0 0.0
    %1312 = vmatpush.msra.mxu0 0.0
    %1313 = vmatpush.msra.mxu0 0.0
    %1314 = vmatpush.msra.mxu0 0.0
    %1315 = vmatpush.msra.mxu0 0.0
    %1316 = vmatpush.msra.mxu0 0.0
    %1317 = vmatpush.msra.mxu0 0.0
    %1318 = vmatpush.msra.mxu0 %v1298
    %1319 = vmatpush.msra.mxu0 %v1297
    %1320 = vmatpush.msra.mxu0 %v1296
    %1321 = vmatpush.msra.mxu0 %v1295
    %1322 = vmatpush.msra.mxu0 %v1294
    %1323 = vmatpush.msra.mxu0 %v1293
    %1324 = vmatpush.msra.mxu0 %v1292
    %1325 = vmatpush.msra.mxu0 %v1291
    %1326 = vmatmul.f32.gmra.mxu0 %v1305
    %v1327 = vpop.f32.mrf.mxu0
    %v1328 = vadd.f32 %v1301, %v1327
    %1329 = vmatmul.f32.gmra.mxu0 %v1308
    %v1330 = vpop.f32.mrf.mxu0
    %v1331 = vadd.f32 %v1301, %v1330
    %1332 = vdwg.mxu0
    %v1333 = vadd.f32 %v1250, %v1328
    %v1334 = vadd.f32 %v1251, %v1331
    %v1335 = vld [vmem:[#allocation20] sm:$0x1]
    %v1336 = vld [vmem:[#allocation22] sm:$0x1]
    %v1337 = vsel %vm387, %v1333, 0.0
    %1338 = vadd.xlane.f32.xlu0 %v1337
    %v1339 = vpop.xlane.xlu0 %1338
    %v1340 = vsel %vm387, %v1334, 0.0
    %1341 = vadd.xlane.f32.xlu0 %v1340
    %v1342 = vpop.xlane.xlu0 %1341
    %v1343 = vmul.f32 %v1339, %v1141
    %v1344 = vmul.f32 %v1342, %v1141
    %v1345 = vsub.f32 %v1333, %v1343
    %v1346 = vsub.f32 %v1334, %v1344
    %v1347 = vmul.f32 %v1345, %v1345
    %v1348 = vmul.f32 %v1346, %v1346
    %v1349 = vsel %vm387, %v1347, 0.0
    %1350 = vadd.xlane.f32.xlu0 %v1349
    %v1351 = vpop.xlane.xlu0 %1350
    %v1352 = vsel %vm387, %v1348, 0.0
    %1353 = vadd.xlane.f32.xlu0 %v1352
    %v1354 = vpop.xlane.xlu0 %1353
    %v1355 = vmul.f32 %v1351, %v1141
    %v1356 = vmul.f32 %v1354, %v1141
    %v1357 = vadd.f32 %v1355, 1e-05
    %v1358 = vadd.f32 %v1356, 1e-05
    %v1359 = vrsqrt.pop %v1357
    %v1360 = vmul.f32 %v1359, %v1357
    %v1361 = vmul.f32 %v1360, %v1359
    %v1362 = vmul.f32 0.5, %v1361
    %v1363 = vsub.f32 1.5, %v1362
    %v1364 = vmul.f32 %v1359, %v1363
    %vm1365 = vweird.f32 %v1357
    %vm1366 = vweird.f32 %v1359
    %vm1367 = vmor %vm1365, %vm1366
    %v1368 = vsel %vm1367, %v1359, %v1364
    %v1369 = vrsqrt.pop %v1358
    %v1370 = vmul.f32 %v1369, %v1358
    %v1371 = vmul.f32 %v1370, %v1369
    %v1372 = vmul.f32 0.5, %v1371
    %v1373 = vsub.f32 1.5, %v1372
    %v1374 = vmul.f32 %v1369, %v1373
    %vm1375 = vweird.f32 %v1358
    %vm1376 = vweird.f32 %v1369
    %vm1377 = vmor %vm1375, %vm1376
    %v1378 = vsel %vm1377, %v1369, %v1374
    %v1379 = vmul.f32 %v1345, %v1368
    %v1380 = vmul.f32 %v1346, %v1378
    %v1382 = vperm.slane %v1335, 0
    %v1384 = vmul.f32 %v1379, %v1382
    %v1385 = vmul.f32 %v1380, %v1382
    %v1387 = vperm.slane %v1336, 0
    %v1389 = vadd.f32 %v1384, %v1387
    %v1390 = vadd.f32 %v1385, %v1387
    %s1391 = scalar_lea.vmem %s3, 32
    %v1392 = vld [vmem:[%s1391] sm:$0xff]
    %v1393 = vld [vmem:[%s1391 + $0x8] sm:$0xff]
    %v1394 = vld [vmem:[%s1391 + $0x10] sm:$0xff]
    %v1395 = vld [vmem:[%s1391 + $0x18] sm:$0xff]
    %s1396 = scalar_lea.vmem [#allocation7], 1
    %v1397 = vld [vmem:[%s1396] sm:$0x1]
    %v1399 = vperm.slane %v1397, 0
    %v1402 = vsel %vm387, %v1389, 0
    %v1405 = vsel %vm387, %v1390, 0
    %1407 = vmatpush.msra.mxu0 0.0
    %1408 = vmatpush.msra.mxu0 0.0
    %1409 = vmatpush.msra.mxu0 0.0
    %1410 = vmatpush.msra.mxu0 0.0
    %1411 = vmatpush.msra.mxu0 0.0
    %1412 = vmatpush.msra.mxu0 0.0
    %1413 = vmatpush.msra.mxu0 0.0
    %1414 = vmatpush.msra.mxu0 0.0
    %1415 = vmatpush.msra.mxu0 0.0
    %1416 = vmatpush.msra.mxu0 0.0
    %1417 = vmatpush.msra.mxu0 0.0
    %1418 = vmatpush.msra.mxu0 0.0
    %1419 = vmatpush.msra.mxu0 %v1395
    %1420 = vmatpush.msra.mxu0 %v1394
    %1421 = vmatpush.msra.mxu0 %v1393
    %1422 = vmatpush.msra.mxu0 %v1392
    %1423 = vmatmul.f32.gmra.mxu0 %v1402
    %v1424 = vpop.f32.mrf.mxu0
    %v1425 = vadd.f32 %v1399, %v1424
    %1426 = vmatmul.f32.gmra.mxu0 %v1405
    %v1427 = vpop.f32.mrf.mxu0
    %v1428 = vadd.f32 %v1399, %v1427
    %1429 = vdwg.mxu0
    %v1430 = vmul.f32 %v1425, 0.35355338
    %v1431 = vmul.f32 %v1428, 0.35355338
    %1434 = vrot.lane.b32.xlu0 %v1430, 120
    %v1435 = vpop.permute.xlu0 %1434
    %1436 = vrot.lane.b32.xlu0 %v1431, 120
    %v1437 = vpop.permute.xlu0 %1436
    %1438 = vrot.lane.b32.xlu0 %v1430, 112
    %v1439 = vpop.permute.xlu0 %1438
    %1440 = vrot.lane.b32.xlu0 %v1431, 112
    %v1441 = vpop.permute.xlu0 %1440
    %1442 = vrot.lane.b32.xlu0 %v1430, 104
    %v1443 = vpop.permute.xlu0 %1442
    %1444 = vrot.lane.b32.xlu0 %v1431, 104
    %v1445 = vpop.permute.xlu0 %1444
    %1448 = vrot.lane.b32.xlu0 %v1425, 120
    %v1449 = vpop.permute.xlu0 %1448
    %1450 = vrot.lane.b32.xlu0 %v1428, 120
    %v1451 = vpop.permute.xlu0 %1450
    %1452 = vrot.lane.b32.xlu0 %v1425, 112
    %v1453 = vpop.permute.xlu0 %1452
    %1454 = vrot.lane.b32.xlu0 %v1428, 112
    %v1455 = vpop.permute.xlu0 %1454
    %1456 = vrot.lane.b32.xlu0 %v1425, 104
    %v1457 = vpop.permute.xlu0 %1456
    %1458 = vrot.lane.b32.xlu0 %v1428, 104
    %v1459 = vpop.permute.xlu0 %1458
    %1460 = vrot.lane.b32.xlu0 %v1425, 96
    %v1461 = vpop.permute.xlu0 %1460
    %v1462 = vsel %vm449, %v1430, 0
    %v1464 = vsel %vm449, %v1461, 0
    %1466 = vmatpush.xpose.msra.mxu0 0.0
    %1467 = vmatpush.xpose.msra.mxu0 0.0
    %1468 = vmatpush.xpose.msra.mxu0 0.0
    %1469 = vmatpush.xpose.msra.mxu0 0.0
    %1470 = vmatpush.xpose.msra.mxu0 0.0
    %1471 = vmatpush.xpose.msra.mxu0 0.0
    %1472 = vmatpush.xpose.msra.mxu0 0.0
    %1473 = vmatpush.xpose.msra.mxu0 0.0
    %1474 = vmatpush.xpose.msra.mxu0 0.0
    %1475 = vmatpush.xpose.msra.mxu0 0.0
    %1476 = vmatpush.xpose.msra.mxu0 0.0
    %1477 = vmatpush.xpose.msra.mxu0 0.0
    %1478 = vmatpush.xpose.msra.mxu0 0.0
    %1479 = vmatpush.xpose.msra.mxu0 0.0
    %1480 = vmatpush.xpose.msra.mxu0 0.0
    %1481 = vmatpush.xpose.msra.mxu0 %v1464
    %1482 = vmatmul.f32.gmra.mxu0 %v1462
    %v1483 = vpop.f32.mrf.mxu0
    %v1484 = vadd.f32 %v377, %v1483
    %1485 = vdwg.mxu0
    %1486 = vrot.lane.b32.xlu0 %v1428, 96
    %v1487 = vpop.permute.xlu0 %1486
    %v1488 = vsel %vm449, %v1431, 0
    %v1490 = vsel %vm449, %v1487, 0
    %1492 = vmatpush.xpose.msra.mxu0 0.0
    %1493 = vmatpush.xpose.msra.mxu0 0.0
    %1494 = vmatpush.xpose.msra.mxu0 0.0
    %1495 = vmatpush.xpose.msra.mxu0 0.0
    %1496 = vmatpush.xpose.msra.mxu0 0.0
    %1497 = vmatpush.xpose.msra.mxu0 0.0
    %1498 = vmatpush.xpose.msra.mxu0 0.0
    %1499 = vmatpush.xpose.msra.mxu0 0.0
    %1500 = vmatpush.xpose.msra.mxu0 0.0
    %1501 = vmatpush.xpose.msra.mxu0 0.0
    %1502 = vmatpush.xpose.msra.mxu0 0.0
    %1503 = vmatpush.xpose.msra.mxu0 0.0
    %1504 = vmatpush.xpose.msra.mxu0 0.0
    %1505 = vmatpush.xpose.msra.mxu0 0.0
    %1506 = vmatpush.xpose.msra.mxu0 0.0
    %1507 = vmatpush.xpose.msra.mxu0 %v1490
    %1508 = vmatmul.f32.gmra.mxu0 %v1488
    %v1509 = vpop.f32.mrf.mxu0
    %v1510 = vadd.f32 %v378, %v1509
    %1511 = vdwg.mxu0
    %1512 = vrot.lane.b32.xlu0 %v1449, 96
    %v1513 = vpop.permute.xlu0 %1512
    %v1514 = vsel %vm449, %v1435, 0
    %v1516 = vsel %vm449, %v1513, 0
    %1518 = vmatpush.xpose.msra.mxu0 0.0
    %1519 = vmatpush.xpose.msra.mxu0 0.0
    %1520 = vmatpush.xpose.msra.mxu0 0.0
    %1521 = vmatpush.xpose.msra.mxu0 0.0
    %1522 = vmatpush.xpose.msra.mxu0 0.0
    %1523 = vmatpush.xpose.msra.mxu0 0.0
    %1524 = vmatpush.xpose.msra.mxu0 0.0
    %1525 = vmatpush.xpose.msra.mxu0 0.0
    %1526 = vmatpush.xpose.msra.mxu0 0.0
    %1527 = vmatpush.xpose.msra.mxu0 0.0
    %1528 = vmatpush.xpose.msra.mxu0 0.0
    %1529 = vmatpush.xpose.msra.mxu0 0.0
    %1530 = vmatpush.xpose.msra.mxu0 0.0
    %1531 = vmatpush.xpose.msra.mxu0 0.0
    %1532 = vmatpush.xpose.msra.mxu0 0.0
    %1533 = vmatpush.xpose.msra.mxu0 %v1516
    %1534 = vmatmul.f32.gmra.mxu0 %v1514
    %v1535 = vpop.f32.mrf.mxu0
    %v1536 = vadd.f32 %v377, %v1535
    %1537 = vdwg.mxu0
    %1538 = vrot.lane.b32.xlu0 %v1451, 96
    %v1539 = vpop.permute.xlu0 %1538
    %v1540 = vsel %vm449, %v1437, 0
    %v1542 = vsel %vm449, %v1539, 0
    %1544 = vmatpush.xpose.msra.mxu0 0.0
    %1545 = vmatpush.xpose.msra.mxu0 0.0
    %1546 = vmatpush.xpose.msra.mxu0 0.0
    %1547 = vmatpush.xpose.msra.mxu0 0.0
    %1548 = vmatpush.xpose.msra.mxu0 0.0
    %1549 = vmatpush.xpose.msra.mxu0 0.0
    %1550 = vmatpush.xpose.msra.mxu0 0.0
    %1551 = vmatpush.xpose.msra.mxu0 0.0
    %1552 = vmatpush.xpose.msra.mxu0 0.0
    %1553 = vmatpush.xpose.msra.mxu0 0.0
    %1554 = vmatpush.xpose.msra.mxu0 0.0
    %1555 = vmatpush.xpose.msra.mxu0 0.0
    %1556 = vmatpush.xpose.msra.mxu0 0.0
    %1557 = vmatpush.xpose.msra.mxu0 0.0
    %1558 = vmatpush.xpose.msra.mxu0 0.0
    %1559 = vmatpush.xpose.msra.mxu0 %v1542
    %1560 = vmatmul.f32.gmra.mxu0 %v1540
    %v1561 = vpop.f32.mrf.mxu0
    %v1562 = vadd.f32 %v378, %v1561
    %1563 = vdwg.mxu0
    %1564 = vrot.lane.b32.xlu0 %v1453, 96
    %v1565 = vpop.permute.xlu0 %1564
    %v1566 = vsel %vm449, %v1439, 0
    %v1568 = vsel %vm449, %v1565, 0
    %1570 = vmatpush.xpose.msra.mxu0 0.0
    %1571 = vmatpush.xpose.msra.mxu0 0.0
    %1572 = vmatpush.xpose.msra.mxu0 0.0
    %1573 = vmatpush.xpose.msra.mxu0 0.0
    %1574 = vmatpush.xpose.msra.mxu0 0.0
    %1575 = vmatpush.xpose.msra.mxu0 0.0
    %1576 = vmatpush.xpose.msra.mxu0 0.0
    %1577 = vmatpush.xpose.msra.mxu0 0.0
    %1578 = vmatpush.xpose.msra.mxu0 0.0
    %1579 = vmatpush.xpose.msra.mxu0 0.0
    %1580 = vmatpush.xpose.msra.mxu0 0.0
    %1581 = vmatpush.xpose.msra.mxu0 0.0
    %1582 = vmatpush.xpose.msra.mxu0 0.0
    %1583 = vmatpush.xpose.msra.mxu0 0.0
    %1584 = vmatpush.xpose.msra.mxu0 0.0
    %1585 = vmatpush.xpose.msra.mxu0 %v1568
    %1586 = vmatmul.f32.gmra.mxu0 %v1566
    %v1587 = vpop.f32.mrf.mxu0
    %v1588 = vadd.f32 %v377, %v1587
    %1589 = vdwg.mxu0
    %1590 = vrot.lane.b32.xlu0 %v1455, 96
    %v1591 = vpop.permute.xlu0 %1590
    %v1592 = vsel %vm449, %v1441, 0
    %v1594 = vsel %vm449, %v1591, 0
    %1596 = vmatpush.xpose.msra.mxu0 0.0
    %1597 = vmatpush.xpose.msra.mxu0 0.0
    %1598 = vmatpush.xpose.msra.mxu0 0.0
    %1599 = vmatpush.xpose.msra.mxu0 0.0
    %1600 = vmatpush.xpose.msra.mxu0 0.0
    %1601 = vmatpush.xpose.msra.mxu0 0.0
    %1602 = vmatpush.xpose.msra.mxu0 0.0
    %1603 = vmatpush.xpose.msra.mxu0 0.0
    %1604 = vmatpush.xpose.msra.mxu0 0.0
    %1605 = vmatpush.xpose.msra.mxu0 0.0
    %1606 = vmatpush.xpose.msra.mxu0 0.0
    %1607 = vmatpush.xpose.msra.mxu0 0.0
    %1608 = vmatpush.xpose.msra.mxu0 0.0
    %1609 = vmatpush.xpose.msra.mxu0 0.0
    %1610 = vmatpush.xpose.msra.mxu0 0.0
    %1611 = vmatpush.xpose.msra.mxu0 %v1594
    %1612 = vmatmul.f32.gmra.mxu0 %v1592
    %v1613 = vpop.f32.mrf.mxu0
    %v1614 = vadd.f32 %v378, %v1613
    %1615 = vdwg.mxu0
    %1616 = vrot.lane.b32.xlu0 %v1457, 96
    %v1617 = vpop.permute.xlu0 %1616
    %v1618 = vsel %vm449, %v1443, 0
    %v1620 = vsel %vm449, %v1617, 0
    %1622 = vmatpush.xpose.msra.mxu0 0.0
    %1623 = vmatpush.xpose.msra.mxu0 0.0
    %1624 = vmatpush.xpose.msra.mxu0 0.0
    %1625 = vmatpush.xpose.msra.mxu0 0.0
    %1626 = vmatpush.xpose.msra.mxu0 0.0
    %1627 = vmatpush.xpose.msra.mxu0 0.0
    %1628 = vmatpush.xpose.msra.mxu0 0.0
    %1629 = vmatpush.xpose.msra.mxu0 0.0
    %1630 = vmatpush.xpose.msra.mxu0 0.0
    %1631 = vmatpush.xpose.msra.mxu0 0.0
    %1632 = vmatpush.xpose.msra.mxu0 0.0
    %1633 = vmatpush.xpose.msra.mxu0 0.0
    %1634 = vmatpush.xpose.msra.mxu0 0.0
    %1635 = vmatpush.xpose.msra.mxu0 0.0
    %1636 = vmatpush.xpose.msra.mxu0 0.0
    %1637 = vmatpush.xpose.msra.mxu0 %v1620
    %1638 = vmatmul.f32.gmra.mxu0 %v1618
    %v1639 = vpop.f32.mrf.mxu0
    %v1640 = vadd.f32 %v377, %v1639
    %1641 = vdwg.mxu0
    %1642 = vrot.lane.b32.xlu0 %v1459, 96
    %v1643 = vpop.permute.xlu0 %1642
    %v1644 = vsel %vm449, %v1445, 0
    %v1646 = vsel %vm449, %v1643, 0
    %1648 = vmatpush.xpose.msra.mxu0 0.0
    %1649 = vmatpush.xpose.msra.mxu0 0.0
    %1650 = vmatpush.xpose.msra.mxu0 0.0
    %1651 = vmatpush.xpose.msra.mxu0 0.0
    %1652 = vmatpush.xpose.msra.mxu0 0.0
    %1653 = vmatpush.xpose.msra.mxu0 0.0
    %1654 = vmatpush.xpose.msra.mxu0 0.0
    %1655 = vmatpush.xpose.msra.mxu0 0.0
    %1656 = vmatpush.xpose.msra.mxu0 0.0
    %1657 = vmatpush.xpose.msra.mxu0 0.0
    %1658 = vmatpush.xpose.msra.mxu0 0.0
    %1659 = vmatpush.xpose.msra.mxu0 0.0
    %1660 = vmatpush.xpose.msra.mxu0 0.0
    %1661 = vmatpush.xpose.msra.mxu0 0.0
    %1662 = vmatpush.xpose.msra.mxu0 0.0
    %1663 = vmatpush.xpose.msra.mxu0 %v1646
    %1664 = vmatmul.f32.gmra.mxu0 %v1644
    %v1665 = vpop.f32.mrf.mxu0
    %v1666 = vadd.f32 %v378, %v1665
    %1667 = vdwg.mxu0
    %v1668 = vsel %vm449, %v1484, -inf
    %1669 = vmax.xlane.f32.xlu0 %v1668
    %v1670 = vpop.xlane.xlu0 %1669
    %v1671 = vsel %vm449, %v1510, -inf
    %1672 = vmax.xlane.f32.xlu0 %v1671
    %v1673 = vpop.xlane.xlu0 %1672
    %v1674 = vsel %vm449, %v1536, -inf
    %1675 = vmax.xlane.f32.xlu0 %v1674
    %v1676 = vpop.xlane.xlu0 %1675
    %v1677 = vsel %vm449, %v1562, -inf
    %1678 = vmax.xlane.f32.xlu0 %v1677
    %v1679 = vpop.xlane.xlu0 %1678
    %v1680 = vsel %vm449, %v1588, -inf
    %1681 = vmax.xlane.f32.xlu0 %v1680
    %v1682 = vpop.xlane.xlu0 %1681
    %v1683 = vsel %vm449, %v1614, -inf
    %1684 = vmax.xlane.f32.xlu0 %v1683
    %v1685 = vpop.xlane.xlu0 %1684
    %v1686 = vsel %vm449, %v1640, -inf
    %1687 = vmax.xlane.f32.xlu0 %v1686
    %v1688 = vpop.xlane.xlu0 %1687
    %v1689 = vsel %vm449, %v1666, -inf
    %1690 = vmax.xlane.f32.xlu0 %v1689
    %v1691 = vpop.xlane.xlu0 %1690
    %v1692 = vsub.f32 %v1484, %v1670
    %v1693 = vsub.f32 %v1510, %v1673
    %v1694 = vsub.f32 %v1536, %v1676
    %v1695 = vsub.f32 %v1562, %v1679
    %v1696 = vsub.f32 %v1588, %v1682
    %v1697 = vsub.f32 %v1614, %v1685
    %v1698 = vsub.f32 %v1640, %v1688
    %v1699 = vsub.f32 %v1666, %v1691
    %v1700 = vmul.f32 %v1692, 1.442695
    %v1701 = vpow.pop %v1700
    %v1702 = vmul.f32 %v1693, 1.442695
    %v1703 = vpow.pop %v1702
    %v1704 = vmul.f32 %v1694, 1.442695
    %v1705 = vpow.pop %v1704
    %v1706 = vmul.f32 %v1695, 1.442695
    %v1707 = vpow.pop %v1706
    %v1708 = vmul.f32 %v1696, 1.442695
    %v1709 = vpow.pop %v1708
    %v1710 = vmul.f32 %v1697, 1.442695
    %v1711 = vpow.pop %v1710
    %v1712 = vmul.f32 %v1698, 1.442695
    %v1713 = vpow.pop %v1712
    %v1714 = vmul.f32 %v1699, 1.442695
    %v1715 = vpow.pop %v1714
    %v1716 = vsel %vm449, %v1701, 0.0
    %1717 = vadd.xlane.f32.xlu0 %v1716
    %v1718 = vpop.xlane.xlu0 %1717
    %v1719 = vsel %vm449, %v1703, 0.0
    %1720 = vadd.xlane.f32.xlu0 %v1719
    %v1721 = vpop.xlane.xlu0 %1720
    %v1722 = vsel %vm449, %v1705, 0.0
    %1723 = vadd.xlane.f32.xlu0 %v1722
    %v1724 = vpop.xlane.xlu0 %1723
    %v1725 = vsel %vm449, %v1707, 0.0
    %1726 = vadd.xlane.f32.xlu0 %v1725
    %v1727 = vpop.xlane.xlu0 %1726
    %v1728 = vsel %vm449, %v1709, 0.0
    %1729 = vadd.xlane.f32.xlu0 %v1728
    %v1730 = vpop.xlane.xlu0 %1729
    %v1731 = vsel %vm449, %v1711, 0.0
    %1732 = vadd.xlane.f32.xlu0 %v1731
    %v1733 = vpop.xlane.xlu0 %1732
    %v1734 = vsel %vm449, %v1713, 0.0
    %1735 = vadd.xlane.f32.xlu0 %v1734
    %v1736 = vpop.xlane.xlu0 %1735
    %v1737 = vsel %vm449, %v1715, 0.0
    %1738 = vadd.xlane.f32.xlu0 %v1737
    %v1739 = vpop.xlane.xlu0 %1738
    %v1740 = vrcp.pop %v1718
    %v1741 = vmul.f32 %v1718, %v1740
    %v1742 = vsub.f32 1.0, %v1741
    %v1743 = vmul.f32 %v1740, %v1742
    %v1744 = vadd.f32 %v1740, %v1743
    %vm1745 = vweird.f32 %v1718
    %vm1746 = vweird.f32 %v1740
    %vm1747 = vmor %vm1745, %vm1746
    %v1748 = vsel %vm1747, %v1740, %v1744
    %v1749 = vand.u32 2147483647, %v1718
    %vm1750 = vcmp.eq.f32.partialorder %v1749, 8.507059e+37
    %v1751 = vand.u32 %v1718, 2147483648
    %v1752 = vor.u32 1.1754944e-38, %v1751
    %v1753 = vsel %vm1750, %v1752, %v1748
    %v1754 = vmul.f32 %v1701, %v1753
    %v1755 = vrcp.pop %v1721
    %v1756 = vmul.f32 %v1721, %v1755
    %v1757 = vsub.f32 1.0, %v1756
    %v1758 = vmul.f32 %v1755, %v1757
    %v1759 = vadd.f32 %v1755, %v1758
    %vm1760 = vweird.f32 %v1721
    %vm1761 = vweird.f32 %v1755
    %vm1762 = vmor %vm1760, %vm1761
    %v1763 = vsel %vm1762, %v1755, %v1759
    %v1764 = vand.u32 2147483647, %v1721
    %vm1765 = vcmp.eq.f32.partialorder %v1764, 8.507059e+37
    %v1766 = vand.u32 %v1721, 2147483648
    %v1767 = vor.u32 1.1754944e-38, %v1766
    %v1768 = vsel %vm1765, %v1767, %v1763
    %v1769 = vmul.f32 %v1703, %v1768
    %v1770 = vrcp.pop %v1724
    %v1771 = vmul.f32 %v1724, %v1770
    %v1772 = vsub.f32 1.0, %v1771
    %v1773 = vmul.f32 %v1770, %v1772
    %v1774 = vadd.f32 %v1770, %v1773
    %vm1775 = vweird.f32 %v1724
    %vm1776 = vweird.f32 %v1770
    %vm1777 = vmor %vm1775, %vm1776
    %v1778 = vsel %vm1777, %v1770, %v1774
    %v1779 = vand.u32 2147483647, %v1724
    %vm1780 = vcmp.eq.f32.partialorder %v1779, 8.507059e+37
    %v1781 = vand.u32 %v1724, 2147483648
    %v1782 = vor.u32 1.1754944e-38, %v1781
    %v1783 = vsel %vm1780, %v1782, %v1778
    %v1784 = vmul.f32 %v1705, %v1783
    %v1785 = vrcp.pop %v1727
    %v1786 = vmul.f32 %v1727, %v1785
    %v1787 = vsub.f32 1.0, %v1786
    %v1788 = vmul.f32 %v1785, %v1787
    %v1789 = vadd.f32 %v1785, %v1788
    %vm1790 = vweird.f32 %v1727
    %vm1791 = vweird.f32 %v1785
    %vm1792 = vmor %vm1790, %vm1791
    %v1793 = vsel %vm1792, %v1785, %v1789
    %v1794 = vand.u32 2147483647, %v1727
    %vm1795 = vcmp.eq.f32.partialorder %v1794, 8.507059e+37
    %v1796 = vand.u32 %v1727, 2147483648
    %v1797 = vor.u32 1.1754944e-38, %v1796
    %v1798 = vsel %vm1795, %v1797, %v1793
    %v1799 = vmul.f32 %v1707, %v1798
    %v1800 = vrcp.pop %v1730
    %v1801 = vmul.f32 %v1730, %v1800
    %v1802 = vsub.f32 1.0, %v1801
    %v1803 = vmul.f32 %v1800, %v1802
    %v1804 = vadd.f32 %v1800, %v1803
    %vm1805 = vweird.f32 %v1730
    %vm1806 = vweird.f32 %v1800
    %vm1807 = vmor %vm1805, %vm1806
    %v1808 = vsel %vm1807, %v1800, %v1804
    %v1809 = vand.u32 2147483647, %v1730
    %vm1810 = vcmp.eq.f32.partialorder %v1809, 8.507059e+37
    %v1811 = vand.u32 %v1730, 2147483648
    %v1812 = vor.u32 1.1754944e-38, %v1811
    %v1813 = vsel %vm1810, %v1812, %v1808
    %v1814 = vmul.f32 %v1709, %v1813
    %v1815 = vrcp.pop %v1733
    %v1816 = vmul.f32 %v1733, %v1815
    %v1817 = vsub.f32 1.0, %v1816
    %v1818 = vmul.f32 %v1815, %v1817
    %v1819 = vadd.f32 %v1815, %v1818
    %vm1820 = vweird.f32 %v1733
    %vm1821 = vweird.f32 %v1815
    %vm1822 = vmor %vm1820, %vm1821
    %v1823 = vsel %vm1822, %v1815, %v1819
    %v1824 = vand.u32 2147483647, %v1733
    %vm1825 = vcmp.eq.f32.partialorder %v1824, 8.507059e+37
    %v1826 = vand.u32 %v1733, 2147483648
    %v1827 = vor.u32 1.1754944e-38, %v1826
    %v1828 = vsel %vm1825, %v1827, %v1823
    %v1829 = vmul.f32 %v1711, %v1828
    %v1830 = vrcp.pop %v1736
    %v1831 = vmul.f32 %v1736, %v1830
    %v1832 = vsub.f32 1.0, %v1831
    %v1833 = vmul.f32 %v1830, %v1832
    %v1834 = vadd.f32 %v1830, %v1833
    %vm1835 = vweird.f32 %v1736
    %vm1836 = vweird.f32 %v1830
    %vm1837 = vmor %vm1835, %vm1836
    %v1838 = vsel %vm1837, %v1830, %v1834
    %v1839 = vand.u32 2147483647, %v1736
    %vm1840 = vcmp.eq.f32.partialorder %v1839, 8.507059e+37
    %v1841 = vand.u32 %v1736, 2147483648
    %v1842 = vor.u32 1.1754944e-38, %v1841
    %v1843 = vsel %vm1840, %v1842, %v1838
    %v1844 = vmul.f32 %v1713, %v1843
    %v1845 = vrcp.pop %v1739
    %v1846 = vmul.f32 %v1739, %v1845
    %v1847 = vsub.f32 1.0, %v1846
    %v1848 = vmul.f32 %v1845, %v1847
    %v1849 = vadd.f32 %v1845, %v1848
    %vm1850 = vweird.f32 %v1739
    %vm1851 = vweird.f32 %v1845
    %vm1852 = vmor %vm1850, %vm1851
    %v1853 = vsel %vm1852, %v1845, %v1849
    %v1854 = vand.u32 2147483647, %v1739
    %vm1855 = vcmp.eq.f32.partialorder %v1854, 8.507059e+37
    %v1856 = vand.u32 %v1739, 2147483648
    %v1857 = vor.u32 1.1754944e-38, %v1856
    %v1858 = vsel %vm1855, %v1857, %v1853
    %v1859 = vmul.f32 %v1715, %v1858
    %1860 = vrot.lane.b32.xlu0 %v1425, 64
    %v1861 = vpop.permute.xlu0 %1860
    %v1864 = vsel %vm449, %v1754, 0
    %1866 = vmatpush.msra.mxu0 0.0
    %1867 = vmatpush.msra.mxu0 0.0
    %1868 = vmatpush.msra.mxu0 0.0
    %1869 = vmatpush.msra.mxu0 0.0
    %1870 = vmatpush.msra.mxu0 0.0
    %1871 = vmatpush.msra.mxu0 0.0
    %1872 = vmatpush.msra.mxu0 0.0
    %1873 = vmatpush.msra.mxu0 0.0
    %1874 = vmatpush.msra.mxu0 0.0
    %1875 = vmatpush.msra.mxu0 0.0
    %1876 = vmatpush.msra.mxu0 0.0
    %1877 = vmatpush.msra.mxu0 0.0
    %1878 = vmatpush.msra.mxu0 0.0
    %1879 = vmatpush.msra.mxu0 0.0
    %1880 = vmatpush.msra.mxu0 0.0
    %1881 = vmatpush.msra.mxu0 %v1861
    %1882 = vmatmul.f32.gmra.mxu0 %v1864
    %v1883 = vpop.f32.mrf.mxu0
    %v1884 = vadd.f32 0.0, %v1883
    %1885 = vdwg.mxu0
    %1886 = vrot.lane.b32.xlu0 %v1428, 64
    %v1887 = vpop.permute.xlu0 %1886
    %v1890 = vsel %vm449, %v1769, 0
    %1892 = vmatpush.msra.mxu0 0.0
    %1893 = vmatpush.msra.mxu0 0.0
    %1894 = vmatpush.msra.mxu0 0.0
    %1895 = vmatpush.msra.mxu0 0.0
    %1896 = vmatpush.msra.mxu0 0.0
    %1897 = vmatpush.msra.mxu0 0.0
    %1898 = vmatpush.msra.mxu0 0.0
    %1899 = vmatpush.msra.mxu0 0.0
    %1900 = vmatpush.msra.mxu0 0.0
    %1901 = vmatpush.msra.mxu0 0.0
    %1902 = vmatpush.msra.mxu0 0.0
    %1903 = vmatpush.msra.mxu0 0.0
    %1904 = vmatpush.msra.mxu0 0.0
    %1905 = vmatpush.msra.mxu0 0.0
    %1906 = vmatpush.msra.mxu0 0.0
    %1907 = vmatpush.msra.mxu0 %v1887
    %1908 = vmatmul.f32.gmra.mxu0 %v1890
    %v1909 = vpop.f32.mrf.mxu0
    %v1910 = vadd.f32 0.0, %v1909
    %1911 = vdwg.mxu0
    %1912 = vrot.lane.b32.xlu0 %v1449, 64
    %v1913 = vpop.permute.xlu0 %1912
    %v1916 = vsel %vm449, %v1784, 0
    %1918 = vmatpush.msra.mxu0 0.0
    %1919 = vmatpush.msra.mxu0 0.0
    %1920 = vmatpush.msra.mxu0 0.0
    %1921 = vmatpush.msra.mxu0 0.0
    %1922 = vmatpush.msra.mxu0 0.0
    %1923 = vmatpush.msra.mxu0 0.0
    %1924 = vmatpush.msra.mxu0 0.0
    %1925 = vmatpush.msra.mxu0 0.0
    %1926 = vmatpush.msra.mxu0 0.0
    %1927 = vmatpush.msra.mxu0 0.0
    %1928 = vmatpush.msra.mxu0 0.0
    %1929 = vmatpush.msra.mxu0 0.0
    %1930 = vmatpush.msra.mxu0 0.0
    %1931 = vmatpush.msra.mxu0 0.0
    %1932 = vmatpush.msra.mxu0 0.0
    %1933 = vmatpush.msra.mxu0 %v1913
    %1934 = vmatmul.f32.gmra.mxu0 %v1916
    %v1935 = vpop.f32.mrf.mxu0
    %v1936 = vadd.f32 0.0, %v1935
    %1937 = vdwg.mxu0
    %1938 = vrot.lane.b32.xlu0 %v1451, 64
    %v1939 = vpop.permute.xlu0 %1938
    %v1942 = vsel %vm449, %v1799, 0
    %1944 = vmatpush.msra.mxu0 0.0
    %1945 = vmatpush.msra.mxu0 0.0
    %1946 = vmatpush.msra.mxu0 0.0
    %1947 = vmatpush.msra.mxu0 0.0
    %1948 = vmatpush.msra.mxu0 0.0
    %1949 = vmatpush.msra.mxu0 0.0
    %1950 = vmatpush.msra.mxu0 0.0
    %1951 = vmatpush.msra.mxu0 0.0
    %1952 = vmatpush.msra.mxu0 0.0
    %1953 = vmatpush.msra.mxu0 0.0
    %1954 = vmatpush.msra.mxu0 0.0
    %1955 = vmatpush.msra.mxu0 0.0
    %1956 = vmatpush.msra.mxu0 0.0
    %1957 = vmatpush.msra.mxu0 0.0
    %1958 = vmatpush.msra.mxu0 0.0
    %1959 = vmatpush.msra.mxu0 %v1939
    %1960 = vmatmul.f32.gmra.mxu0 %v1942
    %v1961 = vpop.f32.mrf.mxu0
    %v1962 = vadd.f32 0.0, %v1961
    %1963 = vdwg.mxu0
    %1964 = vrot.lane.b32.xlu0 %v1453, 64
    %v1965 = vpop.permute.xlu0 %1964
    %v1968 = vsel %vm449, %v1814, 0
    %1970 = vmatpush.msra.mxu0 0.0
    %1971 = vmatpush.msra.mxu0 0.0
    %1972 = vmatpush.msra.mxu0 0.0
    %1973 = vmatpush.msra.mxu0 0.0
    %1974 = vmatpush.msra.mxu0 0.0
    %1975 = vmatpush.msra.mxu0 0.0
    %1976 = vmatpush.msra.mxu0 0.0
    %1977 = vmatpush.msra.mxu0 0.0
    %1978 = vmatpush.msra.mxu0 0.0
    %1979 = vmatpush.msra.mxu0 0.0
    %1980 = vmatpush.msra.mxu0 0.0
    %1981 = vmatpush.msra.mxu0 0.0
    %1982 = vmatpush.msra.mxu0 0.0
    %1983 = vmatpush.msra.mxu0 0.0
    %1984 = vmatpush.msra.mxu0 0.0
    %1985 = vmatpush.msra.mxu0 %v1965
    %1986 = vmatmul.f32.gmra.mxu0 %v1968
    %v1987 = vpop.f32.mrf.mxu0
    %v1988 = vadd.f32 0.0, %v1987
    %1989 = vdwg.mxu0
    %1990 = vrot.lane.b32.xlu0 %v1455, 64
    %v1991 = vpop.permute.xlu0 %1990
    %v1994 = vsel %vm449, %v1829, 0
    %1996 = vmatpush.msra.mxu0 0.0
    %1997 = vmatpush.msra.mxu0 0.0
    %1998 = vmatpush.msra.mxu0 0.0
    %1999 = vmatpush.msra.mxu0 0.0
    %2000 = vmatpush.msra.mxu0 0.0
    %2001 = vmatpush.msra.mxu0 0.0
    %2002 = vmatpush.msra.mxu0 0.0
    %2003 = vmatpush.msra.mxu0 0.0
    %2004 = vmatpush.msra.mxu0 0.0
    %2005 = vmatpush.msra.mxu0 0.0
    %2006 = vmatpush.msra.mxu0 0.0
    %2007 = vmatpush.msra.mxu0 0.0
    %2008 = vmatpush.msra.mxu0 0.0
    %2009 = vmatpush.msra.mxu0 0.0
    %2010 = vmatpush.msra.mxu0 0.0
    %2011 = vmatpush.msra.mxu0 %v1991
    %2012 = vmatmul.f32.gmra.mxu0 %v1994
    %v2013 = vpop.f32.mrf.mxu0
    %v2014 = vadd.f32 0.0, %v2013
    %2015 = vdwg.mxu0
    %2016 = vrot.lane.b32.xlu0 %v1457, 64
    %v2017 = vpop.permute.xlu0 %2016
    %v2020 = vsel %vm449, %v1844, 0
    %2022 = vmatpush.msra.mxu0 0.0
    %2023 = vmatpush.msra.mxu0 0.0
    %2024 = vmatpush.msra.mxu0 0.0
    %2025 = vmatpush.msra.mxu0 0.0
    %2026 = vmatpush.msra.mxu0 0.0
    %2027 = vmatpush.msra.mxu0 0.0
    %2028 = vmatpush.msra.mxu0 0.0
    %2029 = vmatpush.msra.mxu0 0.0
    %2030 = vmatpush.msra.mxu0 0.0
    %2031 = vmatpush.msra.mxu0 0.0
    %2032 = vmatpush.msra.mxu0 0.0
    %2033 = vmatpush.msra.mxu0 0.0
    %2034 = vmatpush.msra.mxu0 0.0
    %2035 = vmatpush.msra.mxu0 0.0
    %2036 = vmatpush.msra.mxu0 0.0
    %2037 = vmatpush.msra.mxu0 %v2017
    %2038 = vmatmul.f32.gmra.mxu0 %v2020
    %v2039 = vpop.f32.mrf.mxu0
    %v2040 = vadd.f32 0.0, %v2039
    %2041 = vdwg.mxu0
    %2042 = vrot.lane.b32.xlu0 %v1459, 64
    %v2043 = vpop.permute.xlu0 %2042
    %v2046 = vsel %vm449, %v1859, 0
    %2048 = vmatpush.msra.mxu0 0.0
    %2049 = vmatpush.msra.mxu0 0.0
    %2050 = vmatpush.msra.mxu0 0.0
    %2051 = vmatpush.msra.mxu0 0.0
    %2052 = vmatpush.msra.mxu0 0.0
    %2053 = vmatpush.msra.mxu0 0.0
    %2054 = vmatpush.msra.mxu0 0.0
    %2055 = vmatpush.msra.mxu0 0.0
    %2056 = vmatpush.msra.mxu0 0.0
    %2057 = vmatpush.msra.mxu0 0.0
    %2058 = vmatpush.msra.mxu0 0.0
    %2059 = vmatpush.msra.mxu0 0.0
    %2060 = vmatpush.msra.mxu0 0.0
    %2061 = vmatpush.msra.mxu0 0.0
    %2062 = vmatpush.msra.mxu0 0.0
    %2063 = vmatpush.msra.mxu0 %v2043
    %2064 = vmatmul.f32.gmra.mxu0 %v2046
    %v2065 = vpop.f32.mrf.mxu0
    %v2066 = vadd.f32 0.0, %v2065
    %2067 = vdwg.mxu0
    %2070 = vrot.lane.b32.xlu0 %v1936, 8
    %v2071 = vpop.permute.xlu0 %2070
    %2072 = vrot.lane.b32.xlu0 %v1962, 8
    %v2073 = vpop.permute.xlu0 %2072
    %2078 = vrot.lane.b32.xlu0 %v1988, 16
    %v2079 = vpop.permute.xlu0 %2078
    %2080 = vrot.lane.b32.xlu0 %v2014, 16
    %v2081 = vpop.permute.xlu0 %2080
    %2086 = vrot.lane.b32.xlu0 %v2040, 24
    %v2087 = vpop.permute.xlu0 %2086
    %2088 = vrot.lane.b32.xlu0 %v2066, 24
    %v2089 = vpop.permute.xlu0 %2088
    %v2092 = vsel %vm449, %v1884, %v2071
    %v2093 = vsel %vm449, %v1910, %v2073
    %v2094 = vsel %vm1082, %v2092, %v2079
    %v2095 = vsel %vm1082, %v2093, %v2081
    %v2096 = vsel %vm1085, %v2094, %v2087
    %v2097 = vsel %vm1085, %v2095, %v2089
    %s2098 = scalar_lea.vmem %s5, 32
    %v2099 = vld [vmem:[%s2098] sm:$0xff]
    %v2100 = vld [vmem:[%s2098 + $0x8] sm:$0xff]
    %v2101 = vld [vmem:[%s2098 + $0x10] sm:$0xff]
    %v2102 = vld [vmem:[%s2098 + $0x18] sm:$0xff]
    %s2103 = scalar_lea.vmem [#allocation8], 1
    %v2104 = vld [vmem:[%s2103] sm:$0x1]
    %v2106 = vperm.slane %v2104, 0
    %v2109 = vsel %vm387, %v2096, 0
    %v2112 = vsel %vm387, %v2097, 0
    %2114 = vmatpush.msra.mxu0 0.0
    %2115 = vmatpush.msra.mxu0 0.0
    %2116 = vmatpush.msra.mxu0 0.0
    %2117 = vmatpush.msra.mxu0 0.0
    %2118 = vmatpush.msra.mxu0 0.0
    %2119 = vmatpush.msra.mxu0 0.0
    %2120 = vmatpush.msra.mxu0 0.0
    %2121 = vmatpush.msra.mxu0 0.0
    %2122 = vmatpush.msra.mxu0 0.0
    %2123 = vmatpush.msra.mxu0 0.0
    %2124 = vmatpush.msra.mxu0 0.0
    %2125 = vmatpush.msra.mxu0 0.0
    %2126 = vmatpush.msra.mxu0 %v2102
    %2127 = vmatpush.msra.mxu0 %v2101
    %2128 = vmatpush.msra.mxu0 %v2100
    %2129 = vmatpush.msra.mxu0 %v2099
    %2130 = vmatmul.f32.gmra.mxu0 %v2109
    %v2131 = vpop.f32.mrf.mxu0
    %v2132 = vadd.f32 %v2106, %v2131
    %2133 = vmatmul.f32.gmra.mxu0 %v2112
    %v2134 = vpop.f32.mrf.mxu0
    %v2135 = vadd.f32 %v2106, %v2134
    %2136 = vdwg.mxu0
    %v2137 = vadd.f32 %v1389, %v2132
    %v2138 = vadd.f32 %v1390, %v2135
    %s2139 = scalar_lea.vmem [#allocation11], 1
    %v2140 = vld [vmem:[%s2139] sm:$0x1]
    %s2141 = scalar_lea.vmem [#allocation13], 1
    %v2142 = vld [vmem:[%s2141] sm:$0x1]
    %v2143 = vsel %vm387, %v2137, 0.0
    %2144 = vadd.xlane.f32.xlu0 %v2143
    %v2145 = vpop.xlane.xlu0 %2144
    %v2146 = vsel %vm387, %v2138, 0.0
    %2147 = vadd.xlane.f32.xlu0 %v2146
    %v2148 = vpop.xlane.xlu0 %2147
    %v2149 = vmul.f32 %v2145, %v1141
    %v2150 = vmul.f32 %v2148, %v1141
    %v2151 = vsub.f32 %v2137, %v2149
    %v2152 = vsub.f32 %v2138, %v2150
    %v2153 = vmul.f32 %v2151, %v2151
    %v2154 = vmul.f32 %v2152, %v2152
    %v2155 = vsel %vm387, %v2153, 0.0
    %2156 = vadd.xlane.f32.xlu0 %v2155
    %v2157 = vpop.xlane.xlu0 %2156
    %v2158 = vsel %vm387, %v2154, 0.0
    %2159 = vadd.xlane.f32.xlu0 %v2158
    %v2160 = vpop.xlane.xlu0 %2159
    %v2161 = vmul.f32 %v2157, %v1141
    %v2162 = vmul.f32 %v2160, %v1141
    %v2163 = vadd.f32 %v2161, 1e-05
    %v2164 = vadd.f32 %v2162, 1e-05
    %v2165 = vrsqrt.pop %v2163
    %v2166 = vmul.f32 %v2165, %v2163
    %v2167 = vmul.f32 %v2166, %v2165
    %v2168 = vmul.f32 0.5, %v2167
    %v2169 = vsub.f32 1.5, %v2168
    %v2170 = vmul.f32 %v2165, %v2169
    %vm2171 = vweird.f32 %v2163
    %vm2172 = vweird.f32 %v2165
    %vm2173 = vmor %vm2171, %vm2172
    %v2174 = vsel %vm2173, %v2165, %v2170
    %v2175 = vrsqrt.pop %v2164
    %v2176 = vmul.f32 %v2175, %v2164
    %v2177 = vmul.f32 %v2176, %v2175
    %v2178 = vmul.f32 0.5, %v2177
    %v2179 = vsub.f32 1.5, %v2178
    %v2180 = vmul.f32 %v2175, %v2179
    %vm2181 = vweird.f32 %v2164
    %vm2182 = vweird.f32 %v2175
    %vm2183 = vmor %vm2181, %vm2182
    %v2184 = vsel %vm2183, %v2175, %v2180
    %v2185 = vmul.f32 %v2151, %v2174
    %v2186 = vmul.f32 %v2152, %v2184
    %v2188 = vperm.slane %v2140, 0
    %v2190 = vmul.f32 %v2185, %v2188
    %v2191 = vmul.f32 %v2186, %v2188
    %v2193 = vperm.slane %v2142, 0
    %v2195 = vadd.f32 %v2190, %v2193
    %v2196 = vadd.f32 %v2191, %v2193
    %s2197 = scalar_lea.vmem [#allocation10], 1
    %v2198 = vld [vmem:[%s2197] sm:$0x1]
    %v2200 = vperm.slane %v2198, 0
    %v2202 = vadd.f32 %v2195, %v2200
    %v2203 = vadd.f32 %v2196, %v2200
    %s2204 = scalar_lea.vmem [#allocation14], 1
    %v2205 = vld [vmem:[%s2204] sm:$0x1]
    %s2206 = scalar_lea.vmem [#allocation16], 1
    %v2207 = vld [vmem:[%s2206] sm:$0x1]
    %v2208 = vsel %vm387, %v2202, 0.0
    %2209 = vadd.xlane.f32.xlu0 %v2208
    %v2210 = vpop.xlane.xlu0 %2209
    %v2211 = vsel %vm387, %v2203, 0.0
    %2212 = vadd.xlane.f32.xlu0 %v2211
    %v2213 = vpop.xlane.xlu0 %2212
    %v2214 = vmul.f32 %v2210, %v1141
    %v2215 = vmul.f32 %v2213, %v1141
    %v2216 = vsub.f32 %v2202, %v2214
    %v2217 = vsub.f32 %v2203, %v2215
    %v2218 = vmul.f32 %v2216, %v2216
    %v2219 = vmul.f32 %v2217, %v2217
    %v2220 = vsel %vm387, %v2218, 0.0
    %2221 = vadd.xlane.f32.xlu0 %v2220
    %v2222 = vpop.xlane.xlu0 %2221
    %v2223 = vsel %vm387, %v2219, 0.0
    %2224 = vadd.xlane.f32.xlu0 %v2223
    %v2225 = vpop.xlane.xlu0 %2224
    %v2226 = vmul.f32 %v2222, %v1141
    %v2227 = vmul.f32 %v2225, %v1141
    %v2228 = vadd.f32 %v2226, 1e-05
    %v2229 = vadd.f32 %v2227, 1e-05
    %v2230 = vrsqrt.pop %v2228
    %v2231 = vmul.f32 %v2230, %v2228
    %v2232 = vmul.f32 %v2231, %v2230
    %v2233 = vmul.f32 0.5, %v2232
    %v2234 = vsub.f32 1.5, %v2233
    %v2235 = vmul.f32 %v2230, %v2234
    %vm2236 = vweird.f32 %v2228
    %vm2237 = vweird.f32 %v2230
    %vm2238 = vmor %vm2236, %vm2237
    %v2239 = vsel %vm2238, %v2230, %v2235
    %v2240 = vrsqrt.pop %v2229
    %v2241 = vmul.f32 %v2240, %v2229
    %v2242 = vmul.f32 %v2241, %v2240
    %v2243 = vmul.f32 0.5, %v2242
    %v2244 = vsub.f32 1.5, %v2243
    %v2245 = vmul.f32 %v2240, %v2244
    %vm2246 = vweird.f32 %v2229
    %vm2247 = vweird.f32 %v2240
    %vm2248 = vmor %vm2246, %vm2247
    %v2249 = vsel %vm2248, %v2240, %v2245
    %v2250 = vmul.f32 %v2216, %v2239
    %v2251 = vmul.f32 %v2217, %v2249
    %v2253 = vperm.slane %v2205, 0
    %v2255 = vmul.f32 %v2250, %v2253
    %v2256 = vmul.f32 %v2251, %v2253
    %v2258 = vperm.slane %v2207, 0
    %v2260 = vadd.f32 %v2255, %v2258
    %v2261 = vadd.f32 %v2256, %v2258
    %s2262 = scalar_lea.vmem %s12, 32
    %v2263 = vld [vmem:[%s2262] sm:$0xff]
    %v2264 = vld [vmem:[%s2262 + $0x8] sm:$0xff]
    %v2265 = vld [vmem:[%s2262 + $0x10] sm:$0xff]
    %v2266 = vld [vmem:[%s2262 + $0x18] sm:$0xff]
    %s2267 = scalar_lea.vmem [#allocation17], 1
    %v2268 = vld [vmem:[%s2267] sm:$0x1]
    %v2270 = vperm.slane %v2268, 0
    %v2273 = vsel %vm387, %v2260, 0
    %v2276 = vsel %vm387, %v2261, 0
    %2278 = vmatpush.msra.mxu0 0.0
    %2279 = vmatpush.msra.mxu0 0.0
    %2280 = vmatpush.msra.mxu0 0.0
    %2281 = vmatpush.msra.mxu0 0.0
    %2282 = vmatpush.msra.mxu0 0.0
    %2283 = vmatpush.msra.mxu0 0.0
    %2284 = vmatpush.msra.mxu0 0.0
    %2285 = vmatpush.msra.mxu0 0.0
    %2286 = vmatpush.msra.mxu0 0.0
    %2287 = vmatpush.msra.mxu0 0.0
    %2288 = vmatpush.msra.mxu0 0.0
    %2289 = vmatpush.msra.mxu0 0.0
    %2290 = vmatpush.msra.mxu0 %v2266
    %2291 = vmatpush.msra.mxu0 %v2265
    %2292 = vmatpush.msra.mxu0 %v2264
    %2293 = vmatpush.msra.mxu0 %v2263
    %2294 = vmatmul.f32.gmra.mxu0 %v2273
    %v2295 = vpop.f32.mrf.mxu0
    %v2296 = vadd.f32 %v2270, %v2295
    %2297 = vmatmul.f32.gmra.mxu0 %v2276
    %v2298 = vpop.f32.mrf.mxu0
    %v2299 = vadd.f32 %v2270, %v2298
    %2300 = vdwg.mxu0
    %v2301 = vmax.f32 %v2296, 0.0
    %v2302 = vmax.f32 %v2299, 0.0
    %s2303 = scalar_lea.vmem %s14, 64
    %v2304 = vld [vmem:[%s2303] sm:$0xff]
    %v2305 = vld [vmem:[%s2303 + $0x8] sm:$0xff]
    %v2306 = vld [vmem:[%s2303 + $0x10] sm:$0xff]
    %v2307 = vld [vmem:[%s2303 + $0x18] sm:$0xff]
    %v2308 = vld [vmem:[%s2303 + $0x20] sm:$0xff]
    %v2309 = vld [vmem:[%s2303 + $0x28] sm:$0xff]
    %v2310 = vld [vmem:[%s2303 + $0x30] sm:$0xff]
    %v2311 = vld [vmem:[%s2303 + $0x38] sm:$0xff]
    %s2312 = scalar_lea.vmem [#allocation19], 1
    %v2313 = vld [vmem:[%s2312] sm:$0x1]
    %v2315 = vperm.slane %v2313, 0
    %v2318 = vsel %vm1303, %v2301, 0
    %v2321 = vsel %vm1303, %v2302, 0
    %2323 = vmatpush.msra.mxu0 0.0
    %2324 = vmatpush.msra.mxu0 0.0
    %2325 = vmatpush.msra.mxu0 0.0
    %2326 = vmatpush.msra.mxu0 0.0
    %2327 = vmatpush.msra.mxu0 0.0
    %2328 = vmatpush.msra.mxu0 0.0
    %2329 = vmatpush.msra.mxu0 0.0
    %2330 = vmatpush.msra.mxu0 0.0
    %2331 = vmatpush.msra.mxu0 %v2311
    %2332 = vmatpush.msra.mxu0 %v2310
    %2333 = vmatpush.msra.mxu0 %v2309
    %2334 = vmatpush.msra.mxu0 %v2308
    %2335 = vmatpush.msra.mxu0 %v2307
    %2336 = vmatpush.msra.mxu0 %v2306
    %2337 = vmatpush.msra.mxu0 %v2305
    %2338 = vmatpush.msra.mxu0 %v2304
    %2339 = vmatmul.f32.gmra.mxu0 %v2318
    %v2340 = vpop.f32.mrf.mxu0
    %v2341 = vadd.f32 %v2315, %v2340
    %2342 = vmatmul.f32.gmra.mxu0 %v2321
    %v2343 = vpop.f32.mrf.mxu0
    %v2344 = vadd.f32 %v2315, %v2343
    %2345 = vdwg.mxu0
    %v2346 = vadd.f32 %v2260, %v2341
    %v2347 = vadd.f32 %v2261, %v2344
    %s2348 = scalar_lea.vmem [#allocation20], 1
    %v2349 = vld [vmem:[%s2348] sm:$0x1]
    %s2350 = scalar_lea.vmem [#allocation22], 1
    %v2351 = vld [vmem:[%s2350] sm:$0x1]
    %v2352 = vsel %vm387, %v2346, 0.0
    %2353 = vadd.xlane.f32.xlu0 %v2352
    %v2354 = vpop.xlane.xlu0 %2353
    %v2355 = vsel %vm387, %v2347, 0.0
    %2356 = vadd.xlane.f32.xlu0 %v2355
    %v2357 = vpop.xlane.xlu0 %2356
    %v2358 = vmul.f32 %v2354, %v1141
    %v2359 = vmul.f32 %v2357, %v1141
    %v2360 = vsub.f32 %v2346, %v2358
    %v2361 = vsub.f32 %v2347, %v2359
    %v2362 = vmul.f32 %v2360, %v2360
    %v2363 = vmul.f32 %v2361, %v2361
    %v2364 = vsel %vm387, %v2362, 0.0
    %2365 = vadd.xlane.f32.xlu0 %v2364
    %v2366 = vpop.xlane.xlu0 %2365
    %v2367 = vsel %vm387, %v2363, 0.0
    %2368 = vadd.xlane.f32.xlu0 %v2367
    %v2369 = vpop.xlane.xlu0 %2368
    %v2370 = vmul.f32 %v2366, %v1141
    %v2371 = vmul.f32 %v2369, %v1141
    %v2372 = vadd.f32 %v2370, 1e-05
    %v2373 = vadd.f32 %v2371, 1e-05
    %v2374 = vrsqrt.pop %v2372
    %v2375 = vmul.f32 %v2374, %v2372
    %v2376 = vmul.f32 %v2375, %v2374
    %v2377 = vmul.f32 0.5, %v2376
    %v2378 = vsub.f32 1.5, %v2377
    %v2379 = vmul.f32 %v2374, %v2378
    %vm2380 = vweird.f32 %v2372
    %vm2381 = vweird.f32 %v2374
    %vm2382 = vmor %vm2380, %vm2381
    %v2383 = vsel %vm2382, %v2374, %v2379
    %v2384 = vrsqrt.pop %v2373
    %v2385 = vmul.f32 %v2384, %v2373
    %v2386 = vmul.f32 %v2385, %v2384
    %v2387 = vmul.f32 0.5, %v2386
    %v2388 = vsub.f32 1.5, %v2387
    %v2389 = vmul.f32 %v2384, %v2388
    %vm2390 = vweird.f32 %v2373
    %vm2391 = vweird.f32 %v2384
    %vm2392 = vmor %vm2390, %vm2391
    %v2393 = vsel %vm2392, %v2384, %v2389
    %v2394 = vmul.f32 %v2360, %v2383
    %v2395 = vmul.f32 %v2361, %v2393
    %v2397 = vperm.slane %v2349, 0
    %v2399 = vmul.f32 %v2394, %v2397
    %v2400 = vmul.f32 %v2395, %v2397
    %v2402 = vperm.slane %v2351, 0
    %v2404 = vadd.f32 %v2399, %v2402
    %v2405 = vadd.f32 %v2400, %v2402
    %v2406 = vld [vmem:[#allocation23] sm:$0x1]
    %v2407 = vld [vmem:[#allocation25] sm:$0x1]
    %v2408 = vsel %vm387, %v2404, 0.0
    %2409 = vadd.xlane.f32.xlu0 %v2408
    %v2410 = vpop.xlane.xlu0 %2409
    %v2411 = vsel %vm387, %v2405, 0.0
    %2412 = vadd.xlane.f32.xlu0 %v2411
    %v2413 = vpop.xlane.xlu0 %2412
    %v2414 = vmul.f32 %v2410, %v1141
    %v2415 = vmul.f32 %v2413, %v1141
    %v2416 = vsub.f32 %v2404, %v2414
    %v2417 = vsub.f32 %v2405, %v2415
    %v2418 = vmul.f32 %v2416, %v2416
    %v2419 = vmul.f32 %v2417, %v2417
    %v2420 = vsel %vm387, %v2418, 0.0
    %2421 = vadd.xlane.f32.xlu0 %v2420
    %v2422 = vpop.xlane.xlu0 %2421
    %v2423 = vsel %vm387, %v2419, 0.0
    %2424 = vadd.xlane.f32.xlu0 %v2423
    %v2425 = vpop.xlane.xlu0 %2424
    %v2426 = vmul.f32 %v2422, %v1141
    %v2427 = vmul.f32 %v2425, %v1141
    %v2428 = vadd.f32 %v2426, 1e-05
    %v2429 = vadd.f32 %v2427, 1e-05
    %v2430 = vrsqrt.pop %v2428
    %v2431 = vmul.f32 %v2430, %v2428
    %v2432 = vmul.f32 %v2431, %v2430
    %v2433 = vmul.f32 0.5, %v2432
    %v2434 = vsub.f32 1.5, %v2433
    %v2435 = vmul.f32 %v2430, %v2434
    %vm2436 = vweird.f32 %v2428
    %vm2437 = vweird.f32 %v2430
    %vm2438 = vmor %vm2436, %vm2437
    %v2439 = vsel %vm2438, %v2430, %v2435
    %v2440 = vrsqrt.pop %v2429
    %v2441 = vmul.f32 %v2440, %v2429
    %v2442 = vmul.f32 %v2441, %v2440
    %v2443 = vmul.f32 0.5, %v2442
    %v2444 = vsub.f32 1.5, %v2443
    %v2445 = vmul.f32 %v2440, %v2444
    %vm2446 = vweird.f32 %v2429
    %vm2447 = vweird.f32 %v2440
    %vm2448 = vmor %vm2446, %vm2447
    %v2449 = vsel %vm2448, %v2440, %v2445
    %v2450 = vmul.f32 %v2416, %v2439
    %v2451 = vmul.f32 %v2417, %v2449
    %v2453 = vperm.slane %v2406, 0
    %v2455 = vmul.f32 %v2450, %v2453
    %v2456 = vmul.f32 %v2451, %v2453
    %v2458 = vperm.slane %v2407, 0
    %v2460 = vadd.f32 %v2455, %v2458
    %v2461 = vadd.f32 %v2456, %v2458
    %v2462 = vld [vmem:[%s20] sm:$0xff]
    %v2463 = vld [vmem:[%s20 + $0x8] sm:$0xff]
    %v2464 = vld [vmem:[%s20 + $0x10] sm:$0xff]
    %v2465 = vld [vmem:[%s20 + $0x18] sm:$0xff]
    %v2466 = vld [vmem:[#allocation26] sm:$0x1]
    %v2468 = vperm.slane %v2466, 0
    %v2471 = vsel %vm387, %v2460, 0
    %v2474 = vsel %vm387, %v2461, 0
    %2476 = vmatpush.msra.mxu0 0.0
    %2477 = vmatpush.msra.mxu0 0.0
    %2478 = vmatpush.msra.mxu0 0.0
    %2479 = vmatpush.msra.mxu0 0.0
    %2480 = vmatpush.msra.mxu0 0.0
    %2481 = vmatpush.msra.mxu0 0.0
    %2482 = vmatpush.msra.mxu0 0.0
    %2483 = vmatpush.msra.mxu0 0.0
    %2484 = vmatpush.msra.mxu0 0.0
    %2485 = vmatpush.msra.mxu0 0.0
    %2486 = vmatpush.msra.mxu0 0.0
    %2487 = vmatpush.msra.mxu0 0.0
    %2488 = vmatpush.msra.mxu0 %v2465
    %2489 = vmatpush.msra.mxu0 %v2464
    %2490 = vmatpush.msra.mxu0 %v2463
    %2491 = vmatpush.msra.mxu0 %v2462
    %2492 = vmatmul.f32.gmra.mxu0 %v2471
    %v2493 = vpop.f32.mrf.mxu0
    %v2494 = vadd.f32 %v2468, %v2493
    %2495 = vmatmul.f32.gmra.mxu0 %v2474
    %v2496 = vpop.f32.mrf.mxu0
    %v2497 = vadd.f32 %v2468, %v2496
    %2498 = vdwg.mxu0
    %2499 = vst [vmem:[#allocation28] sm:$0xff] %v2494
    %2500 = vst [vmem:[#allocation28 + $0x8] sm:$0xff] %v2497
    // Predicated region
    $region150: #{tpu_custom_call.1} parent=1 // pred_check
      _
    $region151: #{tpu_custom_call.1} parent=1 // pred_check_branch
      %2502 = sbr.rel (0) target = $region153
    $region152: #{tpu_custom_call.1} parent=1 // pred_region
      %2504 = vsyncadd [#allocation5], 0
      %s2505 = sshll.u32 [#allocation28], 4
      %s2506 = int_to_ptr.vmem [resolvable:$true] %s2505
      %s2507 = sshll.u32 %s22, 4
      %s2508 = int_to_ptr.hbm [resolvable:$true] %s2507
      %2513 = dma.vmem_to_hbm [thread:$0]  %s2506, 256, %s2508, [#allocation5], 128, 128, 8
    $region153: #{tpu_custom_call.1} parent=1 // pred_fallthru
      _
    // Predicated region
    $region154: #{tpu_custom_call.1} parent=1 // pred_check
      _
    $region155: #{tpu_custom_call.1} parent=1 // pred_check_branch
      %2515 = sbr.rel (0) target = $region157
    $region156: #{tpu_custom_call.1} parent=1 // pred_region
      %2517 = dma.done [#allocation5], 256
    $region157: #{tpu_custom_call.1} parent=1 // pred_fallthru
      _
    %2518 = vsyncpa [#allocation4], 1
    %2519 = vsyncpa [#allocation9], 1
    %2520 = vsyncpa [#allocation12], 1
    %2521 = vsyncpa [#allocation15], 1
    %2522 = vsyncpa [#allocation18], 1
    %2523 = vsyncpa [#allocation21], 1
    %2524 = vsyncpa [#allocation24], 1
    %2525 = vsyncpa [#allocation27], 1
    %2526 = vsyncpa [#allocation5], 1
    %2527 = vsyncpa [#allocation6], 1

</llo_original>
